<compile_context>
chip_gen: v7x
topology: tpu7x:2x2x1
jax: 0.10.0
libtpu: 0.0.40
codegen_flags: <defaults>
</compile_context>

<pallas_src>
import functools

import jax
import jax.numpy as jnp
import numpy as np
from jax import lax
from jax.experimental import pallas as pl
from jax.experimental.pallas import tpu as pltpu


# ----------------------------------------------------------------------------
# Fused kernel: NB (x, y) image pairs per grid step, lanes concatenated.
# ----------------------------------------------------------------------------
def _fused_densecat_kernel(H, W, NB, xy_ref, m_ref,
                           w1_ref, b1_ref, w2_ref, b2_ref, w3_ref, b3_ref,
                           wo_ref, bo_ref, o_ref, stack_ref):
    # xy_ref   : (1, CP, L)   L = 2*NB*HW, lanes = [x_0..x_{NB-1} | y_0..y_{NB-1}]
    # m_ref    : (8, L)       {0,1} per-tap boundary masks (corners precombined)
    # w{1,2,3} : (CP, 9*CP)   bf16 tap-major packed 3x3 conv weights
    # b{1,2,3} : (CP, 1)      f32 conv biases (zero in padded rows)
    # wo_ref   : (Cout, CP)   bf16 1x1 conv weight with BN scale folded in
    # bo_ref   : (Cout, 1)    f32 1x1 bias with BN shift folded in
    # o_ref    : (1, Cout, NB*HW)
    # stack_ref: (9*CP, L)    f32 VMEM scratch for the im2col stack (reused 3x)
    HW = H * W
    L = 2 * NB * HW
    CP = b1_ref.shape[0]

    def conv3x3_relu(x, w_ref, b_ref):
        # Build the masked-rolled im2col stack of the input; a single MXU
        # matmul with K = 9*CP then performs the full tap+channel sum.
        mi = 0
        for k in range(9):                       # static, fully unrolled
            dy, dx = k // 3 - 1, k % 3 - 1
            if dy == 0 and dx == 0:
                tap = x
            else:
                shift = (-(dy * W + dx)) % L
                tap = pltpu.roll(x, shift=shift, axis=1) * m_ref[mi:mi + 1, :]
                mi += 1
            stack_ref[k * CP:(k + 1) * CP, :] = tap
        out = jnp.dot(w_ref[...], stack_ref[...].astype(jnp.bfloat16),
                      preferred_element_type=jnp.float32)
        return jnp.maximum(out + b_ref[...], 0.0)

    xy = xy_ref[0]                               # (CP, L) f32
    a1 = conv3x3_relu(xy, w1_ref, b1_ref)        # [x1 | y1]
    a2 = conv3x3_relu(a1, w2_ref, b2_ref)        # [x2 | y2]
    s12 = a1 + a2                                # running branch sum
    a3 = conv3x3_relu(s12, w3_ref, b3_ref)       # [x3 | y3] (residual add fused)
    s = s12 + a3                                 # [x1+x2+x3 | y1+y2+y3]

    half = NB * HW
    tot = s[:, :half] + s[:, half:]              # per-image x-branch + y-branch

    out = jnp.dot(wo_ref[...], tot.astype(jnp.bfloat16),
                  preferred_element_type=jnp.float32)
    out = jnp.maximum(out + bo_ref[...], 0.0)    # BN already folded into wo/bo
    o_ref[...] = out[None].astype(o_ref.dtype)   # lane-dense (1, Cout, NB*HW) store


# ----------------------------------------------------------------------------
# One-time parameter / constant packing (outside the kernel).
# ----------------------------------------------------------------------------
def _pack_conv3x3(w_oihw, b, cp):
    """OIHW (Cc, Cin, 3, 3) -> (cp, 9*cp) bf16 (tap-major cols) + (cp, 1) f32 bias."""
    cc, cin = w_oihw.shape[0], w_oihw.shape[1]
    wt = jnp.transpose(w_oihw, (2, 3, 1, 0)).reshape(9, cin, cc)   # [k, ci, co]
    wt = jnp.pad(wt, ((0, 0), (0, cp - cin), (0, cp - cc)))
    wk = jnp.transpose(wt, (2, 0, 1)).reshape(cp, 9 * cp)          # [co, k*cp + ci]
    bb = jnp.pad(b, (0, cp - cc)).reshape(cp, 1)
    return wk.astype(jnp.bfloat16), bb


def _tap_masks(H, W, segments):
    """{0,1} masks per non-center tap, tiled over the concatenated HW segments."""
    HW = H * W
    col = np.arange(HW, dtype=np.int64) % W
    row = np.arange(HW, dtype=np.int64) // W
    masks = []
    for k in range(9):
        dy, dx = k // 3 - 1, k % 3 - 1
        if dy == 0 and dx == 0:
            continue
        m = np.ones(HW, np.float32)
        if dy == -1:
            m = m * (row >= 1)
        if dy == 1:
            m = m * (row <= H - 2)
        if dx == -1:
            m = m * (col >= 1)
        if dx == 1:
            m = m * (col <= W - 2)
        masks.append(m)
    base = np.stack(masks).astype(np.float32)            # (8, HW)
    return jnp.asarray(np.tile(base, (1, segments)))     # (8, segments*HW)


# ----------------------------------------------------------------------------
# Forward wrapper: single fused pallas_call.
# ----------------------------------------------------------------------------
def densecat_cat_add_forward(x, y, params, imgs_per_step=None):
    """x, y: (N, Cin, H, W) float32 (PyTorch NCHW layout)."""
    N, Cin, H, W = x.shape
    HW = H * W
    CP = ((max(Cin, 8) + 7) // 8) * 8            # channel padding (aligned sublanes)

    if imgs_per_step is None:
        # Batch image pairs per step to amortize per-step overhead, but keep
        # >= 2 grid steps (v7x megacore) and a comfortable VMEM footprint.
        bytes_per_pair = 2 * HW * 4 * (19 * CP)   # scratch + live activations (f32)
        nb_vmem = max(1, (8 << 20) // max(bytes_per_pair, 1))
        imgs_per_step = max(1, min((N + 1) // 2, nb_vmem))
    NB = imgs_per_step
    G = (N + NB - 1) // NB                       # grid steps
    Npad = G * NB
    L = 2 * NB * HW                              # lane width per step

    w1, b1 = params["conv1"]
    w2, b2 = params["conv2"]
    w3, b3 = params["conv3"]
    wo, bo, bn_scale, bn_shift = params["conv_out"]
    Cout = wo.shape[0]

    w1k, b1k = _pack_conv3x3(w1, b1, CP)
    w2k, b2k = _pack_conv3x3(w2, b2, CP)
    w3k, b3k = _pack_conv3x3(w3, b3, CP)

    # Fold eval-mode BatchNorm into the 1x1 conv:  wo' = s*wo, bo' = s*bo + t.
    wo_f = bn_scale[:, None] * wo.reshape(Cout, Cin)
    bo_f = bn_scale * bo + bn_shift
    wok = jnp.pad(wo_f, ((0, 0), (0, CP - Cin))).astype(jnp.bfloat16)
    bok = bo_f.reshape(Cout, 1)

    masks = _tap_masks(H, W, 2 * NB)             # (8, L)

    # Wrapper-side layout plumbing (cheap): pad channels to CP, pad the batch
    # to a multiple of NB and concatenate the x / y paths along the lane axis.
    def prep(a):
        a = a.reshape(N, Cin, HW)
        a = jnp.pad(a, ((0, Npad - N), (0, CP - Cin), (0, 0)))
        a = a.reshape(G, NB, CP, HW).transpose(0, 2, 1, 3).reshape(G, CP, NB * HW)
        return a
    xy = jnp.concatenate([prep(x), prep(y)], axis=2)    # (G, CP, L)

    kernel = functools.partial(_fused_densecat_kernel, H, W, NB)
    const2d = lambda shape: pl.BlockSpec(shape, lambda g: (0, 0))

    out = pl.pallas_call(
        kernel,
        out_shape=jax.ShapeDtypeStruct((G, Cout, NB * HW), x.dtype),
        grid_spec=pltpu.PrefetchScalarGridSpec(
            num_scalar_prefetch=0,
            grid=(G,),
            in_specs=[
                pl.BlockSpec((1, CP, L), lambda g: (g, 0, 0)),     # xy activations
                const2d((8, L)),                                   # per-tap masks
                const2d((CP, 9 * CP)), const2d((CP, 1)),           # conv1
                const2d((CP, 9 * CP)), const2d((CP, 1)),           # conv2
                const2d((CP, 9 * CP)), const2d((CP, 1)),           # conv3
                const2d((Cout, CP)), const2d((Cout, 1)),           # conv_out (BN folded)
            ],
            out_specs=pl.BlockSpec((1, Cout, NB * HW), lambda g: (g, 0, 0)),
            scratch_shapes=[pltpu.VMEM((9 * CP, L), jnp.float32)],  # im2col stack
        ),
        compiler_params=pltpu.CompilerParams(
            dimension_semantics=("parallel",)),   # shard steps over v7x's 2 TCs
    )(xy, masks, w1k, b1k, w2k, b2k, w3k, b3k, wok, bok)

    out = out.reshape(G, Cout, NB, HW).transpose(0, 2, 1, 3)
    return out.reshape(Npad, Cout, H, W)[:N]


# ----------------------------------------------------------------------------
# Pure-JAX f32 reference (NCHW) to validate kernel semantics.
# ----------------------------------------------------------------------------
def _conv3x3_relu_ref(x, w_oihw, b):
    out = lax.conv_general_dilated(
        x, w_oihw, (1, 1), "SAME",
        dimension_numbers=("NCHW", "OIHW", "NCHW"))
    return jax.nn.relu(out + b[None, :, None, None])


def densecat_cat_add_ref(x, y, params):
    w1, b1 = params["conv1"]
    w2, b2 = params["conv2"]
    w3, b3 = params["conv3"]
    wo, bo, bn_scale, bn_shift = params["conv_out"]

    x1 = _conv3x3_relu_ref(x, w1, b1)
    x2 = _conv3x3_relu_ref(x1, w2, b2)
    x3 = _conv3x3_relu_ref(x2 + x1, w3, b3)
    y1 = _conv3x3_relu_ref(y, w1, b1)
    y2 = _conv3x3_relu_ref(y1, w2, b2)
    y3 = _conv3x3_relu_ref(y2 + y1, w3, b3)

    s = x1 + x2 + x3 + y1 + y2 + y3
    out = jnp.einsum("oc,nchw->nohw", wo, s) + bo[None, :, None, None]
    out = out * bn_scale[None, :, None, None] + bn_shift[None, :, None, None]
    return jax.nn.relu(out)


# ----------------------------------------------------------------------------
# Deterministic synthetic parameters (PyTorch layouts; no checkpoint load).
# ----------------------------------------------------------------------------
def make_params(key, in_chn, out_chn):
    keys = jax.random.split(key, 8)

    def conv3x3_params(kw, kb):
        w = 0.1 * jax.random.normal(kw, (in_chn, in_chn, 3, 3), jnp.float32)
        b = 0.1 * jax.random.normal(kb, (in_chn,), jnp.float32)
        return w, b

    conv1 = conv3x3_params(keys[0], keys[1])
    conv2 = conv3x3_params(keys[2], keys[3])
    conv3 = conv3x3_params(keys[4], keys[5])

    wo = 0.1 * jax.random.normal(keys[6], (out_chn, in_chn), jnp.float32)
    bo = 0.1 * jax.random.normal(keys[7], (out_chn,), jnp.float32)

    # BatchNorm2d at init, eval semantics: gamma=1, beta=0, mean=0, var=1.
    eps = 1e-5
    gamma = jnp.ones((out_chn,), jnp.float32)
    beta = jnp.zeros((out_chn,), jnp.float32)
    running_mean = jnp.zeros((out_chn,), jnp.float32)
    running_var = jnp.ones((out_chn,), jnp.float32)
    bn_scale = gamma / jnp.sqrt(running_var + eps)
    bn_shift = beta - running_mean * bn_scale

    return {"conv1": conv1, "conv2": conv2, "conv3": conv3,
            "conv_out": (wo, bo, bn_scale, bn_shift)}


if __name__ == "__main__":
    key = jax.random.PRNGKey(0)
    kx, ky, kp = jax.random.split(key, 3)

    # N=4 exercises both the x/y pairing and the multi-image-per-step batching
    # (NB=2 image pairs per step, grid of 2 steps).
    N, C_in, C_out, H, W = 4, 4, 8, 16, 16
    x = jax.random.normal(kx, (N, C_in, H, W), jnp.float32)   # NCHW (PyTorch layout)
    y = jax.random.normal(ky, (N, C_in, H, W), jnp.float32)
    params = make_params(kp, C_in, C_out)

    fwd = jax.jit(densecat_cat_add_forward)
    out = jax.block_until_ready(fwd(x, y, params))

    ref = jax.block_until_ready(densecat_cat_add_ref(x, y, params))
    # Tolerance relaxed vs. the f32 reference because the kernel feeds the MXU
    # with bf16 operands (f32 accumulation), per the perf review.
    np.testing.assert_allclose(np.asarray(out), np.asarray(ref),
                               rtol=5e-2, atol=5e-2)
    assert out.shape == (N, C_out, H, W)

    print("KERNEL_OK")
</pallas_src>

<mosaic_0001>
module attributes {stable_mosaic.version = 11 : i64} {
  func.func @_fused_densecat_kernel(%arg0: i32, %arg1: memref<1x8x1024xf32, #tpu.memory_space<vmem>>, %arg2: memref<8x1024xf32, #tpu.memory_space<vmem>>, %arg3: memref<8x72xbf16, #tpu.memory_space<vmem>>, %arg4: memref<8x1xf32, #tpu.memory_space<vmem>>, %arg5: memref<8x72xbf16, #tpu.memory_space<vmem>>, %arg6: memref<8x1xf32, #tpu.memory_space<vmem>>, %arg7: memref<8x72xbf16, #tpu.memory_space<vmem>>, %arg8: memref<8x1xf32, #tpu.memory_space<vmem>>, %arg9: memref<8x8xbf16, #tpu.memory_space<vmem>>, %arg10: memref<8x1xf32, #tpu.memory_space<vmem>>, %arg11: memref<1x8x512xf32, #tpu.memory_space<vmem>>, %arg12: memref<72x1024xf32, #tpu.memory_space<vmem>>) attributes {dimension_semantics = [#tpu.dimension_semantics<parallel>], iteration_bounds = array<i64: 2>, scalar_prefetch = 0 : i64, scratch_operands = 1 : i64, tpu.core_type = #tpu.core_type<tc>, window_params = [{transform_indices = @transform_0, window_bounds = array<i64: 1, 8, 1024>}, {pipeline_mode = #tpu.pipeline_mode<synchronous>, transform_indices = @transform_1, window_bounds = array<i64: 8, 1024>}, {pipeline_mode = #tpu.pipeline_mode<synchronous>, transform_indices = @transform_2, window_bounds = array<i64: 8, 72>}, {pipeline_mode = #tpu.pipeline_mode<synchronous>, transform_indices = @transform_3, window_bounds = array<i64: 8, 1>}, {pipeline_mode = #tpu.pipeline_mode<synchronous>, transform_indices = @transform_4, window_bounds = array<i64: 8, 72>}, {pipeline_mode = #tpu.pipeline_mode<synchronous>, transform_indices = @transform_5, window_bounds = array<i64: 8, 1>}, {pipeline_mode = #tpu.pipeline_mode<synchronous>, transform_indices = @transform_6, window_bounds = array<i64: 8, 72>}, {pipeline_mode = #tpu.pipeline_mode<synchronous>, transform_indices = @transform_7, window_bounds = array<i64: 8, 1>}, {pipeline_mode = #tpu.pipeline_mode<synchronous>, transform_indices = @transform_8, window_bounds = array<i64: 8, 8>}, {pipeline_mode = #tpu.pipeline_mode<synchronous>, transform_indices = @transform_9, window_bounds = array<i64: 8, 1>}, {transform_indices = @transform_10, window_bounds = array<i64: 1, 8, 512>}]} {
    %c0 = arith.constant 0 : index
    %c0_0 = arith.constant 0 : index
    %c0_1 = arith.constant 0 : index
    %0 = vector.load %arg1[%c0, %c0_0, %c0_1] : memref<1x8x1024xf32, #tpu.memory_space<vmem>>, vector<1x8x1024xf32>
    %1 = vector.shape_cast %0 : vector<1x8x1024xf32> to vector<8x1024xf32>
    %c17_i32 = arith.constant 17 : i32
    %2 = tpu.dynamic_rotate %1 by %c17_i32 dim 1 : vector<8x1024xf32>, i32 -> vector<8x1024xf32>
    %c0_2 = arith.constant 0 : index
    %c0_3 = arith.constant 0 : index
    %3 = vector.load %arg2[%c0_2, %c0_3] : memref<8x1024xf32, #tpu.memory_space<vmem>>, vector<1x1024xf32>
    %4 = vector.broadcast %3 : vector<1x1024xf32> to vector<8x1024xf32>
    %5 = arith.mulf %2, %4 : vector<8x1024xf32>
    %c0_4 = arith.constant 0 : index
    %c0_5 = arith.constant 0 : index
    %6 = vector.load %arg12[%c0_4, %c0_5] : memref<72x1024xf32, #tpu.memory_space<vmem>>, vector<8x1024xf32>
    tpu.vector_store %arg12[%c0_4, %c0_5], %5 {strides = array<i32>} : memref<72x1024xf32, #tpu.memory_space<vmem>>, vector<8x1024xf32>,
    %c16_i32 = arith.constant 16 : i32
    %7 = tpu.dynamic_rotate %1 by %c16_i32 dim 1 : vector<8x1024xf32>, i32 -> vector<8x1024xf32>
    %c1 = arith.constant 1 : index
    %c0_6 = arith.constant 0 : index
    %8 = vector.load %arg2[%c1, %c0_6] : memref<8x1024xf32, #tpu.memory_space<vmem>>, vector<1x1024xf32>
    %9 = vector.broadcast %8 : vector<1x1024xf32> to vector<8x1024xf32>
    %10 = arith.mulf %7, %9 : vector<8x1024xf32>
    %c8 = arith.constant 8 : index
    %c0_7 = arith.constant 0 : index
    %11 = vector.load %arg12[%c8, %c0_7] : memref<72x1024xf32, #tpu.memory_space<vmem>>, vector<8x1024xf32>
    tpu.vector_store %arg12[%c8, %c0_7], %10 {strides = array<i32>} : memref<72x1024xf32, #tpu.memory_space<vmem>>, vector<8x1024xf32>,
    %c15_i32 = arith.constant 15 : i32
    %12 = tpu.dynamic_rotate %1 by %c15_i32 dim 1 : vector<8x1024xf32>, i32 -> vector<8x1024xf32>
    %c2 = arith.constant 2 : index
    %c0_8 = arith.constant 0 : index
    %13 = vector.load %arg2[%c2, %c0_8] : memref<8x1024xf32, #tpu.memory_space<vmem>>, vector<1x1024xf32>
    %14 = vector.broadcast %13 : vector<1x1024xf32> to vector<8x1024xf32>
    %15 = arith.mulf %12, %14 : vector<8x1024xf32>
    %c16 = arith.constant 16 : index
    %c0_9 = arith.constant 0 : index
    %16 = vector.load %arg12[%c16, %c0_9] : memref<72x1024xf32, #tpu.memory_space<vmem>>, vector<8x1024xf32>
    tpu.vector_store %arg12[%c16, %c0_9], %15 {strides = array<i32>} : memref<72x1024xf32, #tpu.memory_space<vmem>>, vector<8x1024xf32>,
    %c1_i32 = arith.constant 1 : i32
    %17 = tpu.dynamic_rotate %1 by %c1_i32 dim 1 : vector<8x1024xf32>, i32 -> vector<8x1024xf32>
    %c3 = arith.constant 3 : index
    %c0_10 = arith.constant 0 : index
    %18 = vector.load %arg2[%c3, %c0_10] : memref<8x1024xf32, #tpu.memory_space<vmem>>, vector<1x1024xf32>
    %19 = vector.broadcast %18 : vector<1x1024xf32> to vector<8x1024xf32>
    %20 = arith.mulf %17, %19 : vector<8x1024xf32>
    %c24 = arith.constant 24 : index
    %c0_11 = arith.constant 0 : index
    %21 = vector.load %arg12[%c24, %c0_11] : memref<72x1024xf32, #tpu.memory_space<vmem>>, vector<8x1024xf32>
    tpu.vector_store %arg12[%c24, %c0_11], %20 {strides = array<i32>} : memref<72x1024xf32, #tpu.memory_space<vmem>>, vector<8x1024xf32>,
    %c32 = arith.constant 32 : index
    %c0_12 = arith.constant 0 : index
    %22 = vector.load %arg12[%c32, %c0_12] : memref<72x1024xf32, #tpu.memory_space<vmem>>, vector<8x1024xf32>
    tpu.vector_store %arg12[%c32, %c0_12], %1 {strides = array<i32>} : memref<72x1024xf32, #tpu.memory_space<vmem>>, vector<8x1024xf32>,
    %c1023_i32 = arith.constant 1023 : i32
    %23 = tpu.dynamic_rotate %1 by %c1023_i32 dim 1 : vector<8x1024xf32>, i32 -> vector<8x1024xf32>
    %c4 = arith.constant 4 : index
    %c0_13 = arith.constant 0 : index
    %24 = vector.load %arg2[%c4, %c0_13] : memref<8x1024xf32, #tpu.memory_space<vmem>>, vector<1x1024xf32>
    %25 = vector.broadcast %24 : vector<1x1024xf32> to vector<8x1024xf32>
    %26 = arith.mulf %23, %25 : vector<8x1024xf32>
    %c40 = arith.constant 40 : index
    %c0_14 = arith.constant 0 : index
    %27 = vector.load %arg12[%c40, %c0_14] : memref<72x1024xf32, #tpu.memory_space<vmem>>, vector<8x1024xf32>
    tpu.vector_store %arg12[%c40, %c0_14], %26 {strides = array<i32>} : memref<72x1024xf32, #tpu.memory_space<vmem>>, vector<8x1024xf32>,
    %c1009_i32 = arith.constant 1009 : i32
    %28 = tpu.dynamic_rotate %1 by %c1009_i32 dim 1 : vector<8x1024xf32>, i32 -> vector<8x1024xf32>
    %c5 = arith.constant 5 : index
    %c0_15 = arith.constant 0 : index
    %29 = vector.load %arg2[%c5, %c0_15] : memref<8x1024xf32, #tpu.memory_space<vmem>>, vector<1x1024xf32>
    %30 = vector.broadcast %29 : vector<1x1024xf32> to vector<8x1024xf32>
    %31 = arith.mulf %28, %30 : vector<8x1024xf32>
    %c48 = arith.constant 48 : index
    %c0_16 = arith.constant 0 : index
    %32 = vector.load %arg12[%c48, %c0_16] : memref<72x1024xf32, #tpu.memory_space<vmem>>, vector<8x1024xf32>
    tpu.vector_store %arg12[%c48, %c0_16], %31 {strides = array<i32>} : memref<72x1024xf32, #tpu.memory_space<vmem>>, vector<8x1024xf32>,
    %c1008_i32 = arith.constant 1008 : i32
    %33 = tpu.dynamic_rotate %1 by %c1008_i32 dim 1 : vector<8x1024xf32>, i32 -> vector<8x1024xf32>
    %c6 = arith.constant 6 : index
    %c0_17 = arith.constant 0 : index
    %34 = vector.load %arg2[%c6, %c0_17] : memref<8x1024xf32, #tpu.memory_space<vmem>>, vector<1x1024xf32>
    %35 = vector.broadcast %34 : vector<1x1024xf32> to vector<8x1024xf32>
    %36 = arith.mulf %33, %35 : vector<8x1024xf32>
    %c56 = arith.constant 56 : index
    %c0_18 = arith.constant 0 : index
    %37 = vector.load %arg12[%c56, %c0_18] : memref<72x1024xf32, #tpu.memory_space<vmem>>, vector<8x1024xf32>
    tpu.vector_store %arg12[%c56, %c0_18], %36 {strides = array<i32>} : memref<72x1024xf32, #tpu.memory_space<vmem>>, vector<8x1024xf32>,
    %c1007_i32 = arith.constant 1007 : i32
    %38 = tpu.dynamic_rotate %1 by %c1007_i32 dim 1 : vector<8x1024xf32>, i32 -> vector<8x1024xf32>
    %c7 = arith.constant 7 : index
    %c0_19 = arith.constant 0 : index
    %39 = vector.load %arg2[%c7, %c0_19] : memref<8x1024xf32, #tpu.memory_space<vmem>>, vector<1x1024xf32>
    %40 = vector.broadcast %39 : vector<1x1024xf32> to vector<8x1024xf32>
    %41 = arith.mulf %38, %40 : vector<8x1024xf32>
    %c64 = arith.constant 64 : index
    %c0_20 = arith.constant 0 : index
    %42 = vector.load %arg12[%c64, %c0_20] : memref<72x1024xf32, #tpu.memory_space<vmem>>, vector<8x1024xf32>
    tpu.vector_store %arg12[%c64, %c0_20], %41 {strides = array<i32>} : memref<72x1024xf32, #tpu.memory_space<vmem>>, vector<8x1024xf32>,
    %c0_21 = arith.constant 0 : index
    %c0_22 = arith.constant 0 : index
    %43 = vector.load %arg3[%c0_21, %c0_22] : memref<8x72xbf16, #tpu.memory_space<vmem>>, vector<8x72xbf16>
    %c0_23 = arith.constant 0 : index
    %c0_24 = arith.constant 0 : index
    %44 = vector.load %arg12[%c0_23, %c0_24] : memref<72x1024xf32, #tpu.memory_space<vmem>>, vector<72x1024xf32>
    %45 = arith.truncf %44 : vector<72x1024xf32> to vector<72x1024xbf16>
    %cst = arith.constant dense<0.000000e+00> : vector<8x1024xf32>
    %46 = tpu.matmul %43, %45, %cst {dimension_numbers = #tpu.dot_dimension_numbers<[1], [0], [0], [1], [0, 0, 1, 1], [], []>} : vector<8x72xbf16>, vector<72x1024xbf16>, vector<8x1024xf32> -> vector<8x1024xf32>
    %c0_25 = arith.constant 0 : index
    %c0_26 = arith.constant 0 : index
    %47 = vector.load %arg4[%c0_25, %c0_26] : memref<8x1xf32, #tpu.memory_space<vmem>>, vector<8x1xf32>
    %48 = vector.broadcast %47 : vector<8x1xf32> to vector<8x1024xf32>
    %49 = arith.addf %46, %48 : vector<8x1024xf32>
    %cst_27 = arith.constant 0.000000e+00 : f32
    %50 = vector.broadcast %cst_27 : f32 to vector<8x1024xf32>
    %51 = arith.maximumf %49, %50 : vector<8x1024xf32>
    %c17_i32_28 = arith.constant 17 : i32
    %52 = tpu.dynamic_rotate %51 by %c17_i32_28 dim 1 : vector<8x1024xf32>, i32 -> vector<8x1024xf32>
    %c0_29 = arith.constant 0 : index
    %c0_30 = arith.constant 0 : index
    %53 = vector.load %arg2[%c0_29, %c0_30] : memref<8x1024xf32, #tpu.memory_space<vmem>>, vector<1x1024xf32>
    %54 = vector.broadcast %53 : vector<1x1024xf32> to vector<8x1024xf32>
    %55 = arith.mulf %52, %54 : vector<8x1024xf32>
    %c0_31 = arith.constant 0 : index
    %c0_32 = arith.constant 0 : index
    %56 = vector.load %arg12[%c0_31, %c0_32] : memref<72x1024xf32, #tpu.memory_space<vmem>>, vector<8x1024xf32>
    tpu.vector_store %arg12[%c0_31, %c0_32], %55 {strides = array<i32>} : memref<72x1024xf32, #tpu.memory_space<vmem>>, vector<8x1024xf32>,
    %c16_i32_33 = arith.constant 16 : i32
    %57 = tpu.dynamic_rotate %51 by %c16_i32_33 dim 1 : vector<8x1024xf32>, i32 -> vector<8x1024xf32>
    %c1_34 = arith.constant 1 : index
    %c0_35 = arith.constant 0 : index
    %58 = vector.load %arg2[%c1_34, %c0_35] : memref<8x1024xf32, #tpu.memory_space<vmem>>, vector<1x1024xf32>
    %59 = vector.broadcast %58 : vector<1x1024xf32> to vector<8x1024xf32>
    %60 = arith.mulf %57, %59 : vector<8x1024xf32>
    %c8_36 = arith.constant 8 : index
    %c0_37 = arith.constant 0 : index
    %61 = vector.load %arg12[%c8_36, %c0_37] : memref<72x1024xf32, #tpu.memory_space<vmem>>, vector<8x1024xf32>
    tpu.vector_store %arg12[%c8_36, %c0_37], %60 {strides = array<i32>} : memref<72x1024xf32, #tpu.memory_space<vmem>>, vector<8x1024xf32>,
    %c15_i32_38 = arith.constant 15 : i32
    %62 = tpu.dynamic_rotate %51 by %c15_i32_38 dim 1 : vector<8x1024xf32>, i32 -> vector<8x1024xf32>
    %c2_39 = arith.constant 2 : index
    %c0_40 = arith.constant 0 : index
    %63 = vector.load %arg2[%c2_39, %c0_40] : memref<8x1024xf32, #tpu.memory_space<vmem>>, vector<1x1024xf32>
    %64 = vector.broadcast %63 : vector<1x1024xf32> to vector<8x1024xf32>
    %65 = arith.mulf %62, %64 : vector<8x1024xf32>
    %c16_41 = arith.constant 16 : index
    %c0_42 = arith.constant 0 : index
    %66 = vector.load %arg12[%c16_41, %c0_42] : memref<72x1024xf32, #tpu.memory_space<vmem>>, vector<8x1024xf32>
    tpu.vector_store %arg12[%c16_41, %c0_42], %65 {strides = array<i32>} : memref<72x1024xf32, #tpu.memory_space<vmem>>, vector<8x1024xf32>,
    %c1_i32_43 = arith.constant 1 : i32
    %67 = tpu.dynamic_rotate %51 by %c1_i32_43 dim 1 : vector<8x1024xf32>, i32 -> vector<8x1024xf32>
    %c3_44 = arith.constant 3 : index
    %c0_45 = arith.constant 0 : index
    %68 = vector.load %arg2[%c3_44, %c0_45] : memref<8x1024xf32, #tpu.memory_space<vmem>>, vector<1x1024xf32>
    %69 = vector.broadcast %68 : vector<1x1024xf32> to vector<8x1024xf32>
    %70 = arith.mulf %67, %69 : vector<8x1024xf32>
    %c24_46 = arith.constant 24 : index
    %c0_47 = arith.constant 0 : index
    %71 = vector.load %arg12[%c24_46, %c0_47] : memref<72x1024xf32, #tpu.memory_space<vmem>>, vector<8x1024xf32>
    tpu.vector_store %arg12[%c24_46, %c0_47], %70 {strides = array<i32>} : memref<72x1024xf32, #tpu.memory_space<vmem>>, vector<8x1024xf32>,
    %c32_48 = arith.constant 32 : index
    %c0_49 = arith.constant 0 : index
    %72 = vector.load %arg12[%c32_48, %c0_49] : memref<72x1024xf32, #tpu.memory_space<vmem>>, vector<8x1024xf32>
    tpu.vector_store %arg12[%c32_48, %c0_49], %51 {strides = array<i32>} : memref<72x1024xf32, #tpu.memory_space<vmem>>, vector<8x1024xf32>,
    %c1023_i32_50 = arith.constant 1023 : i32
    %73 = tpu.dynamic_rotate %51 by %c1023_i32_50 dim 1 : vector<8x1024xf32>, i32 -> vector<8x1024xf32>
    %c4_51 = arith.constant 4 : index
    %c0_52 = arith.constant 0 : index
    %74 = vector.load %arg2[%c4_51, %c0_52] : memref<8x1024xf32, #tpu.memory_space<vmem>>, vector<1x1024xf32>
    %75 = vector.broadcast %74 : vector<1x1024xf32> to vector<8x1024xf32>
    %76 = arith.mulf %73, %75 : vector<8x1024xf32>
    %c40_53 = arith.constant 40 : index
    %c0_54 = arith.constant 0 : index
    %77 = vector.load %arg12[%c40_53, %c0_54] : memref<72x1024xf32, #tpu.memory_space<vmem>>, vector<8x1024xf32>
    tpu.vector_store %arg12[%c40_53, %c0_54], %76 {strides = array<i32>} : memref<72x1024xf32, #tpu.memory_space<vmem>>, vector<8x1024xf32>,
    %c1009_i32_55 = arith.constant 1009 : i32
    %78 = tpu.dynamic_rotate %51 by %c1009_i32_55 dim 1 : vector<8x1024xf32>, i32 -> vector<8x1024xf32>
    %c5_56 = arith.constant 5 : index
    %c0_57 = arith.constant 0 : index
    %79 = vector.load %arg2[%c5_56, %c0_57] : memref<8x1024xf32, #tpu.memory_space<vmem>>, vector<1x1024xf32>
    %80 = vector.broadcast %79 : vector<1x1024xf32> to vector<8x1024xf32>
    %81 = arith.mulf %78, %80 : vector<8x1024xf32>
    %c48_58 = arith.constant 48 : index
    %c0_59 = arith.constant 0 : index
    %82 = vector.load %arg12[%c48_58, %c0_59] : memref<72x1024xf32, #tpu.memory_space<vmem>>, vector<8x1024xf32>
    tpu.vector_store %arg12[%c48_58, %c0_59], %81 {strides = array<i32>} : memref<72x1024xf32, #tpu.memory_space<vmem>>, vector<8x1024xf32>,
    %c1008_i32_60 = arith.constant 1008 : i32
    %83 = tpu.dynamic_rotate %51 by %c1008_i32_60 dim 1 : vector<8x1024xf32>, i32 -> vector<8x1024xf32>
    %c6_61 = arith.constant 6 : index
    %c0_62 = arith.constant 0 : index
    %84 = vector.load %arg2[%c6_61, %c0_62] : memref<8x1024xf32, #tpu.memory_space<vmem>>, vector<1x1024xf32>
    %85 = vector.broadcast %84 : vector<1x1024xf32> to vector<8x1024xf32>
    %86 = arith.mulf %83, %85 : vector<8x1024xf32>
    %c56_63 = arith.constant 56 : index
    %c0_64 = arith.constant 0 : index
    %87 = vector.load %arg12[%c56_63, %c0_64] : memref<72x1024xf32, #tpu.memory_space<vmem>>, vector<8x1024xf32>
    tpu.vector_store %arg12[%c56_63, %c0_64], %86 {strides = array<i32>} : memref<72x1024xf32, #tpu.memory_space<vmem>>, vector<8x1024xf32>,
    %c1007_i32_65 = arith.constant 1007 : i32
    %88 = tpu.dynamic_rotate %51 by %c1007_i32_65 dim 1 : vector<8x1024xf32>, i32 -> vector<8x1024xf32>
    %c7_66 = arith.constant 7 : index
    %c0_67 = arith.constant 0 : index
    %89 = vector.load %arg2[%c7_66, %c0_67] : memref<8x1024xf32, #tpu.memory_space<vmem>>, vector<1x1024xf32>
    %90 = vector.broadcast %89 : vector<1x1024xf32> to vector<8x1024xf32>
    %91 = arith.mulf %88, %90 : vector<8x1024xf32>
    %c64_68 = arith.constant 64 : index
    %c0_69 = arith.constant 0 : index
    %92 = vector.load %arg12[%c64_68, %c0_69] : memref<72x1024xf32, #tpu.memory_space<vmem>>, vector<8x1024xf32>
    tpu.vector_store %arg12[%c64_68, %c0_69], %91 {strides = array<i32>} : memref<72x1024xf32, #tpu.memory_space<vmem>>, vector<8x1024xf32>,
    %c0_70 = arith.constant 0 : index
    %c0_71 = arith.constant 0 : index
    %93 = vector.load %arg5[%c0_70, %c0_71] : memref<8x72xbf16, #tpu.memory_space<vmem>>, vector<8x72xbf16>
    %c0_72 = arith.constant 0 : index
    %c0_73 = arith.constant 0 : index
    %94 = vector.load %arg12[%c0_72, %c0_73] : memref<72x1024xf32, #tpu.memory_space<vmem>>, vector<72x1024xf32>
    %95 = arith.truncf %94 : vector<72x1024xf32> to vector<72x1024xbf16>
    %cst_74 = arith.constant dense<0.000000e+00> : vector<8x1024xf32>
    %96 = tpu.matmul %93, %95, %cst_74 {dimension_numbers = #tpu.dot_dimension_numbers<[1], [0], [0], [1], [0, 0, 1, 1], [], []>} : vector<8x72xbf16>, vector<72x1024xbf16>, vector<8x1024xf32> -> vector<8x1024xf32>
    %c0_75 = arith.constant 0 : index
    %c0_76 = arith.constant 0 : index
    %97 = vector.load %arg6[%c0_75, %c0_76] : memref<8x1xf32, #tpu.memory_space<vmem>>, vector<8x1xf32>
    %98 = vector.broadcast %97 : vector<8x1xf32> to vector<8x1024xf32>
    %99 = arith.addf %96, %98 : vector<8x1024xf32>
    %cst_77 = arith.constant 0.000000e+00 : f32
    %100 = vector.broadcast %cst_77 : f32 to vector<8x1024xf32>
    %101 = arith.maximumf %99, %100 : vector<8x1024xf32>
    %102 = arith.addf %51, %101 : vector<8x1024xf32>
    %c17_i32_78 = arith.constant 17 : i32
    %103 = tpu.dynamic_rotate %102 by %c17_i32_78 dim 1 : vector<8x1024xf32>, i32 -> vector<8x1024xf32>
    %c0_79 = arith.constant 0 : index
    %c0_80 = arith.constant 0 : index
    %104 = vector.load %arg2[%c0_79, %c0_80] : memref<8x1024xf32, #tpu.memory_space<vmem>>, vector<1x1024xf32>
    %105 = vector.broadcast %104 : vector<1x1024xf32> to vector<8x1024xf32>
    %106 = arith.mulf %103, %105 : vector<8x1024xf32>
    %c0_81 = arith.constant 0 : index
    %c0_82 = arith.constant 0 : index
    %107 = vector.load %arg12[%c0_81, %c0_82] : memref<72x1024xf32, #tpu.memory_space<vmem>>, vector<8x1024xf32>
    tpu.vector_store %arg12[%c0_81, %c0_82], %106 {strides = array<i32>} : memref<72x1024xf32, #tpu.memory_space<vmem>>, vector<8x1024xf32>,
    %c16_i32_83 = arith.constant 16 : i32
    %108 = tpu.dynamic_rotate %102 by %c16_i32_83 dim 1 : vector<8x1024xf32>, i32 -> vector<8x1024xf32>
    %c1_84 = arith.constant 1 : index
    %c0_85 = arith.constant 0 : index
    %109 = vector.load %arg2[%c1_84, %c0_85] : memref<8x1024xf32, #tpu.memory_space<vmem>>, vector<1x1024xf32>
    %110 = vector.broadcast %109 : vector<1x1024xf32> to vector<8x1024xf32>
    %111 = arith.mulf %108, %110 : vector<8x1024xf32>
    %c8_86 = arith.constant 8 : index
    %c0_87 = arith.constant 0 : index
    %112 = vector.load %arg12[%c8_86, %c0_87] : memref<72x1024xf32, #tpu.memory_space<vmem>>, vector<8x1024xf32>
    tpu.vector_store %arg12[%c8_86, %c0_87], %111 {strides = array<i32>} : memref<72x1024xf32, #tpu.memory_space<vmem>>, vector<8x1024xf32>,
    %c15_i32_88 = arith.constant 15 : i32
    %113 = tpu.dynamic_rotate %102 by %c15_i32_88 dim 1 : vector<8x1024xf32>, i32 -> vector<8x1024xf32>
    %c2_89 = arith.constant 2 : index
    %c0_90 = arith.constant 0 : index
    %114 = vector.load %arg2[%c2_89, %c0_90] : memref<8x1024xf32, #tpu.memory_space<vmem>>, vector<1x1024xf32>
    %115 = vector.broadcast %114 : vector<1x1024xf32> to vector<8x1024xf32>
    %116 = arith.mulf %113, %115 : vector<8x1024xf32>
    %c16_91 = arith.constant 16 : index
    %c0_92 = arith.constant 0 : index
    %117 = vector.load %arg12[%c16_91, %c0_92] : memref<72x1024xf32, #tpu.memory_space<vmem>>, vector<8x1024xf32>
    tpu.vector_store %arg12[%c16_91, %c0_92], %116 {strides = array<i32>} : memref<72x1024xf32, #tpu.memory_space<vmem>>, vector<8x1024xf32>,
    %c1_i32_93 = arith.constant 1 : i32
    %118 = tpu.dynamic_rotate %102 by %c1_i32_93 dim 1 : vector<8x1024xf32>, i32 -> vector<8x1024xf32>
    %c3_94 = arith.constant 3 : index
    %c0_95 = arith.constant 0 : index
    %119 = vector.load %arg2[%c3_94, %c0_95] : memref<8x1024xf32, #tpu.memory_space<vmem>>, vector<1x1024xf32>
    %120 = vector.broadcast %119 : vector<1x1024xf32> to vector<8x1024xf32>
    %121 = arith.mulf %118, %120 : vector<8x1024xf32>
    %c24_96 = arith.constant 24 : index
    %c0_97 = arith.constant 0 : index
    %122 = vector.load %arg12[%c24_96, %c0_97] : memref<72x1024xf32, #tpu.memory_space<vmem>>, vector<8x1024xf32>
    tpu.vector_store %arg12[%c24_96, %c0_97], %121 {strides = array<i32>} : memref<72x1024xf32, #tpu.memory_space<vmem>>, vector<8x1024xf32>,
    %c32_98 = arith.constant 32 : index
    %c0_99 = arith.constant 0 : index
    %123 = vector.load %arg12[%c32_98, %c0_99] : memref<72x1024xf32, #tpu.memory_space<vmem>>, vector<8x1024xf32>
    tpu.vector_store %arg12[%c32_98, %c0_99], %102 {strides = array<i32>} : memref<72x1024xf32, #tpu.memory_space<vmem>>, vector<8x1024xf32>,
    %c1023_i32_100 = arith.constant 1023 : i32
    %124 = tpu.dynamic_rotate %102 by %c1023_i32_100 dim 1 : vector<8x1024xf32>, i32 -> vector<8x1024xf32>
    %c4_101 = arith.constant 4 : index
    %c0_102 = arith.constant 0 : index
    %125 = vector.load %arg2[%c4_101, %c0_102] : memref<8x1024xf32, #tpu.memory_space<vmem>>, vector<1x1024xf32>
    %126 = vector.broadcast %125 : vector<1x1024xf32> to vector<8x1024xf32>
    %127 = arith.mulf %124, %126 : vector<8x1024xf32>
    %c40_103 = arith.constant 40 : index
    %c0_104 = arith.constant 0 : index
    %128 = vector.load %arg12[%c40_103, %c0_104] : memref<72x1024xf32, #tpu.memory_space<vmem>>, vector<8x1024xf32>
    tpu.vector_store %arg12[%c40_103, %c0_104], %127 {strides = array<i32>} : memref<72x1024xf32, #tpu.memory_space<vmem>>, vector<8x1024xf32>,
    %c1009_i32_105 = arith.constant 1009 : i32
    %129 = tpu.dynamic_rotate %102 by %c1009_i32_105 dim 1 : vector<8x1024xf32>, i32 -> vector<8x1024xf32>
    %c5_106 = arith.constant 5 : index
    %c0_107 = arith.constant 0 : index
    %130 = vector.load %arg2[%c5_106, %c0_107] : memref<8x1024xf32, #tpu.memory_space<vmem>>, vector<1x1024xf32>
    %131 = vector.broadcast %130 : vector<1x1024xf32> to vector<8x1024xf32>
    %132 = arith.mulf %129, %131 : vector<8x1024xf32>
    %c48_108 = arith.constant 48 : index
    %c0_109 = arith.constant 0 : index
    %133 = vector.load %arg12[%c48_108, %c0_109] : memref<72x1024xf32, #tpu.memory_space<vmem>>, vector<8x1024xf32>
    tpu.vector_store %arg12[%c48_108, %c0_109], %132 {strides = array<i32>} : memref<72x1024xf32, #tpu.memory_space<vmem>>, vector<8x1024xf32>,
    %c1008_i32_110 = arith.constant 1008 : i32
    %134 = tpu.dynamic_rotate %102 by %c1008_i32_110 dim 1 : vector<8x1024xf32>, i32 -> vector<8x1024xf32>
    %c6_111 = arith.constant 6 : index
    %c0_112 = arith.constant 0 : index
    %135 = vector.load %arg2[%c6_111, %c0_112] : memref<8x1024xf32, #tpu.memory_space<vmem>>, vector<1x1024xf32>
    %136 = vector.broadcast %135 : vector<1x1024xf32> to vector<8x1024xf32>
    %137 = arith.mulf %134, %136 : vector<8x1024xf32>
    %c56_113 = arith.constant 56 : index
    %c0_114 = arith.constant 0 : index
    %138 = vector.load %arg12[%c56_113, %c0_114] : memref<72x1024xf32, #tpu.memory_space<vmem>>, vector<8x1024xf32>
    tpu.vector_store %arg12[%c56_113, %c0_114], %137 {strides = array<i32>} : memref<72x1024xf32, #tpu.memory_space<vmem>>, vector<8x1024xf32>,
    %c1007_i32_115 = arith.constant 1007 : i32
    %139 = tpu.dynamic_rotate %102 by %c1007_i32_115 dim 1 : vector<8x1024xf32>, i32 -> vector<8x1024xf32>
    %c7_116 = arith.constant 7 : index
    %c0_117 = arith.constant 0 : index
    %140 = vector.load %arg2[%c7_116, %c0_117] : memref<8x1024xf32, #tpu.memory_space<vmem>>, vector<1x1024xf32>
    %141 = vector.broadcast %140 : vector<1x1024xf32> to vector<8x1024xf32>
    %142 = arith.mulf %139, %141 : vector<8x1024xf32>
    %c64_118 = arith.constant 64 : index
    %c0_119 = arith.constant 0 : index
    %143 = vector.load %arg12[%c64_118, %c0_119] : memref<72x1024xf32, #tpu.memory_space<vmem>>, vector<8x1024xf32>
    tpu.vector_store %arg12[%c64_118, %c0_119], %142 {strides = array<i32>} : memref<72x1024xf32, #tpu.memory_space<vmem>>, vector<8x1024xf32>,
    %c0_120 = arith.constant 0 : index
    %c0_121 = arith.constant 0 : index
    %144 = vector.load %arg7[%c0_120, %c0_121] : memref<8x72xbf16, #tpu.memory_space<vmem>>, vector<8x72xbf16>
    %c0_122 = arith.constant 0 : index
    %c0_123 = arith.constant 0 : index
    %145 = vector.load %arg12[%c0_122, %c0_123] : memref<72x1024xf32, #tpu.memory_space<vmem>>, vector<72x1024xf32>
    %146 = arith.truncf %145 : vector<72x1024xf32> to vector<72x1024xbf16>
    %cst_124 = arith.constant dense<0.000000e+00> : vector<8x1024xf32>
    %147 = tpu.matmul %144, %146, %cst_124 {dimension_numbers = #tpu.dot_dimension_numbers<[1], [0], [0], [1], [0, 0, 1, 1], [], []>} : vector<8x72xbf16>, vector<72x1024xbf16>, vector<8x1024xf32> -> vector<8x1024xf32>
    %c0_125 = arith.constant 0 : index
    %c0_126 = arith.constant 0 : index
    %148 = vector.load %arg8[%c0_125, %c0_126] : memref<8x1xf32, #tpu.memory_space<vmem>>, vector<8x1xf32>
    %149 = vector.broadcast %148 : vector<8x1xf32> to vector<8x1024xf32>
    %150 = arith.addf %147, %149 : vector<8x1024xf32>
    %cst_127 = arith.constant 0.000000e+00 : f32
    %151 = vector.broadcast %cst_127 : f32 to vector<8x1024xf32>
    %152 = arith.maximumf %150, %151 : vector<8x1024xf32>
    %153 = arith.addf %102, %152 : vector<8x1024xf32>
    %154 = vector.extract_strided_slice %153 {offsets = [0, 0], sizes = [8, 512], strides = [1, 1]} : vector<8x1024xf32> to vector<8x512xf32>
    %155 = vector.extract_strided_slice %153 {offsets = [0, 512], sizes = [8, 512], strides = [1, 1]} : vector<8x1024xf32> to vector<8x512xf32>
    %156 = arith.addf %154, %155 : vector<8x512xf32>
    %c0_128 = arith.constant 0 : index
    %c0_129 = arith.constant 0 : index
    %157 = vector.load %arg9[%c0_128, %c0_129] : memref<8x8xbf16, #tpu.memory_space<vmem>>, vector<8x8xbf16>
    %158 = arith.truncf %156 : vector<8x512xf32> to vector<8x512xbf16>
    %cst_130 = arith.constant dense<0.000000e+00> : vector<8x512xf32>
    %159 = tpu.matmul %157, %158, %cst_130 {dimension_numbers = #tpu.dot_dimension_numbers<[1], [0], [0], [1], [0, 0, 1, 1], [], []>} : vector<8x8xbf16>, vector<8x512xbf16>, vector<8x512xf32> -> vector<8x512xf32>
    %c0_131 = arith.constant 0 : index
    %c0_132 = arith.constant 0 : index
    %160 = vector.load %arg10[%c0_131, %c0_132] : memref<8x1xf32, #tpu.memory_space<vmem>>, vector<8x1xf32>
    %161 = vector.broadcast %160 : vector<8x1xf32> to vector<8x512xf32>
    %162 = arith.addf %159, %161 : vector<8x512xf32>
    %cst_133 = arith.constant 0.000000e+00 : f32
    %163 = vector.broadcast %cst_133 : f32 to vector<8x512xf32>
    %164 = arith.maximumf %162, %163 : vector<8x512xf32>
    %165 = vector.shape_cast %164 : vector<8x512xf32> to vector<1x8x512xf32>
    %c0_134 = arith.constant 0 : index
    %c0_135 = arith.constant 0 : index
    %c0_136 = arith.constant 0 : index
    %166 = vector.load %arg11[%c0_134, %c0_135, %c0_136] : memref<1x8x512xf32, #tpu.memory_space<vmem>>, vector<1x8x512xf32>
    tpu.vector_store %arg11[%c0_134, %c0_135, %c0_136], %165 {strides = array<i32>} : memref<1x8x512xf32, #tpu.memory_space<vmem>>, vector<1x8x512xf32>,
    return
  }
  func.func @transform_0(%arg0: i32) -> (i32, i32, i32) {
    %c0_i32 = arith.constant 0 : i32
    %c0_i32_0 = arith.constant 0 : i32
    %c0_i32_1 = arith.constant 0 : i32
    return %arg0, %c0_i32, %c0_i32_0 : i32, i32, i32
  }
  func.func @transform_1(%arg0: i32) -> (i32, i32) {
    %c0_i32 = arith.constant 0 : i32
    %c0_i32_0 = arith.constant 0 : i32
    %c0_i32_1 = arith.constant 0 : i32
    return %c0_i32, %c0_i32_0 : i32, i32
  }
  func.func @transform_2(%arg0: i32) -> (i32, i32) {
    %c0_i32 = arith.constant 0 : i32
    %c0_i32_0 = arith.constant 0 : i32
    %c0_i32_1 = arith.constant 0 : i32
    return %c0_i32, %c0_i32_0 : i32, i32
  }
  func.func @transform_3(%arg0: i32) -> (i32, i32) {
    %c0_i32 = arith.constant 0 : i32
    %c0_i32_0 = arith.constant 0 : i32
    %c0_i32_1 = arith.constant 0 : i32
    return %c0_i32, %c0_i32_0 : i32, i32
  }
  func.func @transform_4(%arg0: i32) -> (i32, i32) {
    %c0_i32 = arith.constant 0 : i32
    %c0_i32_0 = arith.constant 0 : i32
    %c0_i32_1 = arith.constant 0 : i32
    return %c0_i32, %c0_i32_0 : i32, i32
  }
  func.func @transform_5(%arg0: i32) -> (i32, i32) {
    %c0_i32 = arith.constant 0 : i32
    %c0_i32_0 = arith.constant 0 : i32
    %c0_i32_1 = arith.constant 0 : i32
    return %c0_i32, %c0_i32_0 : i32, i32
  }
  func.func @transform_6(%arg0: i32) -> (i32, i32) {
    %c0_i32 = arith.constant 0 : i32
    %c0_i32_0 = arith.constant 0 : i32
    %c0_i32_1 = arith.constant 0 : i32
    return %c0_i32, %c0_i32_0 : i32, i32
  }
  func.func @transform_7(%arg0: i32) -> (i32, i32) {
    %c0_i32 = arith.constant 0 : i32
    %c0_i32_0 = arith.constant 0 : i32
    %c0_i32_1 = arith.constant 0 : i32
    return %c0_i32, %c0_i32_0 : i32, i32
  }
  func.func @transform_8(%arg0: i32) -> (i32, i32) {
    %c0_i32 = arith.constant 0 : i32
    %c0_i32_0 = arith.constant 0 : i32
    %c0_i32_1 = arith.constant 0 : i32
    return %c0_i32, %c0_i32_0 : i32, i32
  }
  func.func @transform_9(%arg0: i32) -> (i32, i32) {
    %c0_i32 = arith.constant 0 : i32
    %c0_i32_0 = arith.constant 0 : i32
    %c0_i32_1 = arith.constant 0 : i32
    return %c0_i32, %c0_i32_0 : i32, i32
  }
  func.func @transform_10(%arg0: i32) -> (i32, i32, i32) {
    %c0_i32 = arith.constant 0 : i32
    %c0_i32_0 = arith.constant 0 : i32
    %c0_i32_1 = arith.constant 0 : i32
    return %arg0, %c0_i32, %c0_i32_0 : i32, i32, i32
  }
}

</mosaic_0001>

<llo_original>
// kernel: densecat_cat_add_forward.1
$region0: #{densecat_cat_add_forward.1}
  #allocation0 [shape = 'u32[]', space=smem, size = 0x4, offset = 0x4, fixed_abs, tag = 'smem constant byte address 0x4 - core index']
  #allocation1 [shape = 'u32[144,128]{1,0:T(1,128)}', space=vmem, size = 0x12000, scoped, tag = 'internal scratch']
  #allocation2 [shape = 'f32[72,1024]{1,0:T(8,128)}', space=vmem, size = 0x48000, scoped, tag = 'scratch operand']
  %s0 = inlined_call_operand.vmem [shape: f32[2,8,1024], index: 0, kind: input, shape index: {}]
  %s1 = inlined_call_operand.vmem [shape: f32[8,1024], index: 1, kind: input, shape index: {}]
  %s2 = inlined_call_operand.vmem [shape: bf16[8,72], index: 2, kind: input, shape index: {}]
  %s3 = inlined_call_operand.vmem [shape: f32[8,1], index: 3, kind: input, shape index: {}]
  %s4 = inlined_call_operand.vmem [shape: bf16[8,72], index: 4, kind: input, shape index: {}]
  %s5 = inlined_call_operand.vmem [shape: f32[8,1], index: 5, kind: input, shape index: {}]
  %s6 = inlined_call_operand.vmem [shape: bf16[8,72], index: 6, kind: input, shape index: {}]
  %s7 = inlined_call_operand.vmem [shape: f32[8,1], index: 7, kind: input, shape index: {}]
  %s8 = inlined_call_operand.vmem [shape: bf16[8,8], index: 8, kind: input, shape index: {}]
  %s9 = inlined_call_operand.vmem [shape: f32[8,1], index: 9, kind: input, shape index: {}]
  %s10 = inlined_call_operand.vmem [shape: f32[2,8,512], index: 10, kind: output, shape index: {}]
  %s11 = sld [smem:[#allocation0]]
  $region73: #{densecat_cat_add_forward.1} parent=0
    _
  %s13 = ssub.s32 1, %s11
  %s14 = scalar_select 0, %s13, %s11
  loop: start=0, step=1, limit=4
  $region2: #{densecat_cat_add_forward.1} parent=0 // loop_pre_header
    _
  $region3: #{densecat_cat_add_forward.1} parent=0 // loop_header
    %s16 = sphi 0, %s20
    %p17 = scmp.ge.s32.totalorder %s16, 4
    %s26 = sphi 0, %s28
    %s29 = sphi 0, %s26
    %s30 = sphi 0, %s29
    %s46 = sphi 0, %s30
    %s50 = sphi 0, %s50
    %s52 = sphi 0, %s50
    %s53 = sphi 0, %s52
    %s67 = sphi 0, %s53
    %s71 = sphi 0, %s71
    %s73 = sphi 0, %s71
    %s74 = sphi 0, %s73
    %s88 = sphi 0, %s74
    %s92 = sphi 0, %s92
    %s94 = sphi 0, %s92
    %s95 = sphi 0, %s94
    %s109 = sphi 0, %s95
    %s113 = sphi 0, %s113
    %s115 = sphi 0, %s113
    %s116 = sphi 0, %s115
    %s130 = sphi 0, %s116
    %s134 = sphi 0, %s134
    %s136 = sphi 0, %s134
    %s137 = sphi 0, %s136
    %s151 = sphi 0, %s137
    %s155 = sphi 0, %s155
    %s157 = sphi 0, %s155
    %s158 = sphi 0, %s157
    %s172 = sphi 0, %s158
    %s176 = sphi 0, %s176
    %s178 = sphi 0, %s176
    %s179 = sphi 0, %s178
    %s193 = sphi 0, %s179
    %s197 = sphi 0, %s197
    %s199 = sphi 0, %s197
    %s200 = sphi 0, %s199
    %s214 = sphi 0, %s200
    %s218 = sphi 0, %s218
    %s220 = sphi 0, %s218
    %s221 = sphi 0, %s220
    %s235 = sphi 0, %s221
    %s241 = sphi 0, %s243
    %s244 = sphi 0, %s241
    %s245 = sphi 0, %s244
    %s261 = sphi 0, %s245
  $region4: #{densecat_cat_add_forward.1} parent=0 // loop_header_branch
    %19 = sbr.rel (%p17) target = $region8
  $region5: #{densecat_cat_add_forward.1} parent=0 // loop_body
    %s21 = ssub.s32 %s16, 1
    %s22 = ssub.s32 %s16, 2
    %s23 = sadd.s32 %s16, 1
    %s24 = ssub.s32 %s16, %s23
    %p25 = scmp.eq.s32.totalorder %s24, 0
    %s27 = sadd.s32 %s26, 1
    %s28 = scalar_select %p25, %s26, %s27
    %p31 = pneg %p25
    %p32 = scmp.eq.s32.totalorder %s16, 1
    %p33 = por %p31, %p32
    %p34 = scmp.ne.s32.totalorder %s26, %s29
    %p35 = scmp.eq.s32.totalorder %s16, 0
    %p36 = por %p34, %p35
    %p37 = scmp.ne.s32.totalorder %s26, %s29
    %p38 = scmp.eq.s32.totalorder %s21, 1
    %p39 = por %p37, %p38
    %p40 = scmp.ne.s32.totalorder %s29, %s30
    %p41 = scmp.eq.s32.totalorder %s21, 0
    %p42 = por %p40, %p41
    %p43 = scmp.ne.s32.totalorder %s29, %s30
    %p44 = scmp.eq.s32.totalorder %s22, 1
    %p45 = por %p43, %p44
    %p47 = scmp.ne.s32.totalorder %s30, %s46
    %p48 = scmp.eq.s32.totalorder %s22, 0
    %p49 = por %p47, %p48
    %s51 = sadd.s32 %s50, 1
    %p54 = scmp.eq.s32.totalorder %s16, 1
    %p55 = scmp.ne.s32.totalorder %s50, %s52
    %p56 = scmp.eq.s32.totalorder %s16, 0
    %p57 = por %p55, %p56
    %p58 = scmp.ne.s32.totalorder %s50, %s52
    %p59 = scmp.eq.s32.totalorder %s21, 1
    %p60 = por %p58, %p59
    %p61 = scmp.ne.s32.totalorder %s52, %s53
    %p62 = scmp.eq.s32.totalorder %s21, 0
    %p63 = por %p61, %p62
    %p64 = scmp.ne.s32.totalorder %s52, %s53
    %p65 = scmp.eq.s32.totalorder %s22, 1
    %p66 = por %p64, %p65
    %p68 = scmp.ne.s32.totalorder %s53, %s67
    %p69 = scmp.eq.s32.totalorder %s22, 0
    %p70 = por %p68, %p69
    %s72 = sadd.s32 %s71, 1
    %p75 = scmp.eq.s32.totalorder %s16, 1
    %p76 = scmp.ne.s32.totalorder %s71, %s73
    %p77 = scmp.eq.s32.totalorder %s16, 0
    %p78 = por %p76, %p77
    %p79 = scmp.ne.s32.totalorder %s71, %s73
    %p80 = scmp.eq.s32.totalorder %s21, 1
    %p81 = por %p79, %p80
    %p82 = scmp.ne.s32.totalorder %s73, %s74
    %p83 = scmp.eq.s32.totalorder %s21, 0
    %p84 = por %p82, %p83
    %p85 = scmp.ne.s32.totalorder %s73, %s74
    %p86 = scmp.eq.s32.totalorder %s22, 1
    %p87 = por %p85, %p86
    %p89 = scmp.ne.s32.totalorder %s74, %s88
    %p90 = scmp.eq.s32.totalorder %s22, 0
    %p91 = por %p89, %p90
    %s93 = sadd.s32 %s92, 1
    %p96 = scmp.eq.s32.totalorder %s16, 1
    %p97 = scmp.ne.s32.totalorder %s92, %s94
    %p98 = scmp.eq.s32.totalorder %s16, 0
    %p99 = por %p97, %p98
    %p100 = scmp.ne.s32.totalorder %s92, %s94
    %p101 = scmp.eq.s32.totalorder %s21, 1
    %p102 = por %p100, %p101
    %p103 = scmp.ne.s32.totalorder %s94, %s95
    %p104 = scmp.eq.s32.totalorder %s21, 0
    %p105 = por %p103, %p104
    %p106 = scmp.ne.s32.totalorder %s94, %s95
    %p107 = scmp.eq.s32.totalorder %s22, 1
    %p108 = por %p106, %p107
    %p110 = scmp.ne.s32.totalorder %s95, %s109
    %p111 = scmp.eq.s32.totalorder %s22, 0
    %p112 = por %p110, %p111
    %s114 = sadd.s32 %s113, 1
    %p117 = scmp.eq.s32.totalorder %s16, 1
    %p118 = scmp.ne.s32.totalorder %s113, %s115
    %p119 = scmp.eq.s32.totalorder %s16, 0
    %p120 = por %p118, %p119
    %p121 = scmp.ne.s32.totalorder %s113, %s115
    %p122 = scmp.eq.s32.totalorder %s21, 1
    %p123 = por %p121, %p122
    %p124 = scmp.ne.s32.totalorder %s115, %s116
    %p125 = scmp.eq.s32.totalorder %s21, 0
    %p126 = por %p124, %p125
    %p127 = scmp.ne.s32.totalorder %s115, %s116
    %p128 = scmp.eq.s32.totalorder %s22, 1
    %p129 = por %p127, %p128
    %p131 = scmp.ne.s32.totalorder %s116, %s130
    %p132 = scmp.eq.s32.totalorder %s22, 0
    %p133 = por %p131, %p132
    %s135 = sadd.s32 %s134, 1
    %p138 = scmp.eq.s32.totalorder %s16, 1
    %p139 = scmp.ne.s32.totalorder %s134, %s136
    %p140 = scmp.eq.s32.totalorder %s16, 0
    %p141 = por %p139, %p140
    %p142 = scmp.ne.s32.totalorder %s134, %s136
    %p143 = scmp.eq.s32.totalorder %s21, 1
    %p144 = por %p142, %p143
    %p145 = scmp.ne.s32.totalorder %s136, %s137
    %p146 = scmp.eq.s32.totalorder %s21, 0
    %p147 = por %p145, %p146
    %p148 = scmp.ne.s32.totalorder %s136, %s137
    %p149 = scmp.eq.s32.totalorder %s22, 1
    %p150 = por %p148, %p149
    %p152 = scmp.ne.s32.totalorder %s137, %s151
    %p153 = scmp.eq.s32.totalorder %s22, 0
    %p154 = por %p152, %p153
    %s156 = sadd.s32 %s155, 1
    %p159 = scmp.eq.s32.totalorder %s16, 1
    %p160 = scmp.ne.s32.totalorder %s155, %s157
    %p161 = scmp.eq.s32.totalorder %s16, 0
    %p162 = por %p160, %p161
    %p163 = scmp.ne.s32.totalorder %s155, %s157
    %p164 = scmp.eq.s32.totalorder %s21, 1
    %p165 = por %p163, %p164
    %p166 = scmp.ne.s32.totalorder %s157, %s158
    %p167 = scmp.eq.s32.totalorder %s21, 0
    %p168 = por %p166, %p167
    %p169 = scmp.ne.s32.totalorder %s157, %s158
    %p170 = scmp.eq.s32.totalorder %s22, 1
    %p171 = por %p169, %p170
    %p173 = scmp.ne.s32.totalorder %s158, %s172
    %p174 = scmp.eq.s32.totalorder %s22, 0
    %p175 = por %p173, %p174
    %s177 = sadd.s32 %s176, 1
    %p180 = scmp.eq.s32.totalorder %s16, 1
    %p181 = scmp.ne.s32.totalorder %s176, %s178
    %p182 = scmp.eq.s32.totalorder %s16, 0
    %p183 = por %p181, %p182
    %p184 = scmp.ne.s32.totalorder %s176, %s178
    %p185 = scmp.eq.s32.totalorder %s21, 1
    %p186 = por %p184, %p185
    %p187 = scmp.ne.s32.totalorder %s178, %s179
    %p188 = scmp.eq.s32.totalorder %s21, 0
    %p189 = por %p187, %p188
    %p190 = scmp.ne.s32.totalorder %s178, %s179
    %p191 = scmp.eq.s32.totalorder %s22, 1
    %p192 = por %p190, %p191
    %p194 = scmp.ne.s32.totalorder %s179, %s193
    %p195 = scmp.eq.s32.totalorder %s22, 0
    %p196 = por %p194, %p195
    %s198 = sadd.s32 %s197, 1
    %p201 = scmp.eq.s32.totalorder %s16, 1
    %p202 = scmp.ne.s32.totalorder %s197, %s199
    %p203 = scmp.eq.s32.totalorder %s16, 0
    %p204 = por %p202, %p203
    %p205 = scmp.ne.s32.totalorder %s197, %s199
    %p206 = scmp.eq.s32.totalorder %s21, 1
    %p207 = por %p205, %p206
    %p208 = scmp.ne.s32.totalorder %s199, %s200
    %p209 = scmp.eq.s32.totalorder %s21, 0
    %p210 = por %p208, %p209
    %p211 = scmp.ne.s32.totalorder %s199, %s200
    %p212 = scmp.eq.s32.totalorder %s22, 1
    %p213 = por %p211, %p212
    %p215 = scmp.ne.s32.totalorder %s200, %s214
    %p216 = scmp.eq.s32.totalorder %s22, 0
    %p217 = por %p215, %p216
    %s219 = sadd.s32 %s218, 1
    %p222 = scmp.eq.s32.totalorder %s16, 1
    %p223 = scmp.ne.s32.totalorder %s218, %s220
    %p224 = scmp.eq.s32.totalorder %s16, 0
    %p225 = por %p223, %p224
    %p226 = scmp.ne.s32.totalorder %s218, %s220
    %p227 = scmp.eq.s32.totalorder %s21, 1
    %p228 = por %p226, %p227
    %p229 = scmp.ne.s32.totalorder %s220, %s221
    %p230 = scmp.eq.s32.totalorder %s21, 0
    %p231 = por %p229, %p230
    %p232 = scmp.ne.s32.totalorder %s220, %s221
    %p233 = scmp.eq.s32.totalorder %s22, 1
    %p234 = por %p232, %p233
    %p236 = scmp.ne.s32.totalorder %s221, %s235
    %p237 = scmp.eq.s32.totalorder %s22, 0
    %p238 = por %p236, %p237
    %s239 = ssub.s32 %s16, %s23
    %p240 = scmp.eq.s32.totalorder %s239, 0
    %s242 = sadd.s32 %s241, 1
    %s243 = scalar_select %p240, %s241, %s242
    %p246 = pneg %p240
    %p247 = scmp.eq.s32.totalorder %s16, 1
    %p248 = por %p246, %p247
    %p249 = scmp.ne.s32.totalorder %s241, %s244
    %p250 = scmp.eq.s32.totalorder %s16, 0
    %p251 = por %p249, %p250
    %p252 = scmp.ne.s32.totalorder %s241, %s244
    %p253 = scmp.eq.s32.totalorder %s21, 1
    %p254 = por %p252, %p253
    %p255 = scmp.ne.s32.totalorder %s244, %s245
    %p256 = scmp.eq.s32.totalorder %s21, 0
    %p257 = por %p255, %p256
    %p258 = scmp.ne.s32.totalorder %s244, %s245
    %p259 = scmp.eq.s32.totalorder %s22, 1
    %p260 = por %p258, %p259
    %p262 = scmp.ne.s32.totalorder %s245, %s261
    %p263 = scmp.eq.s32.totalorder %s22, 0
    %p264 = por %p262, %p263
    %p265 = scmp.le.s32.totalorder 1, %s16
    %p266 = scmp.lt.s32.totalorder %s16, 3
    %p267 = pnand %p265, %p266
    %p268 = pneg %p267
    // Predicated region
    $region9: #{densecat_cat_add_forward.1} parent=5 // pred_check
      _
    $region10: #{densecat_cat_add_forward.1} parent=5 // pred_check_branch
      %270 = sbr.rel (%p267) target = $region12
    $region11: #{densecat_cat_add_forward.1} parent=5 // pred_region
      %s271 = ssub.s32 %s16, 1
      // Predicated region
      $region13: #{densecat_cat_add_forward.1} parent=11 // pred_check
        %p272 = pneg %p63
      $region14: #{densecat_cat_add_forward.1} parent=11 // pred_check_branch
        %274 = sbr.rel (%p272) target = $region16
      $region15: #{densecat_cat_add_forward.1} parent=11 // pred_region
        _
      $region16: #{densecat_cat_add_forward.1} parent=11 // pred_fallthru
        _
      // Predicated region
      $region17: #{densecat_cat_add_forward.1} parent=11 // pred_check
        %p275 = pneg %p84
      $region18: #{densecat_cat_add_forward.1} parent=11 // pred_check_branch
        %277 = sbr.rel (%p275) target = $region20
      $region19: #{densecat_cat_add_forward.1} parent=11 // pred_region
        _
      $region20: #{densecat_cat_add_forward.1} parent=11 // pred_fallthru
        _
      // Predicated region
      $region21: #{densecat_cat_add_forward.1} parent=11 // pred_check
        %p278 = pneg %p105
      $region22: #{densecat_cat_add_forward.1} parent=11 // pred_check_branch
        %280 = sbr.rel (%p278) target = $region24
      $region23: #{densecat_cat_add_forward.1} parent=11 // pred_region
        _
      $region24: #{densecat_cat_add_forward.1} parent=11 // pred_fallthru
        _
      // Predicated region
      $region25: #{densecat_cat_add_forward.1} parent=11 // pred_check
        %p281 = pneg %p126
      $region26: #{densecat_cat_add_forward.1} parent=11 // pred_check_branch
        %283 = sbr.rel (%p281) target = $region28
      $region27: #{densecat_cat_add_forward.1} parent=11 // pred_region
        _
      $region28: #{densecat_cat_add_forward.1} parent=11 // pred_fallthru
        _
      // Predicated region
      $region29: #{densecat_cat_add_forward.1} parent=11 // pred_check
        %p284 = pneg %p147
      $region30: #{densecat_cat_add_forward.1} parent=11 // pred_check_branch
        %286 = sbr.rel (%p284) target = $region32
      $region31: #{densecat_cat_add_forward.1} parent=11 // pred_region
        _
      $region32: #{densecat_cat_add_forward.1} parent=11 // pred_fallthru
        _
      // Predicated region
      $region33: #{densecat_cat_add_forward.1} parent=11 // pred_check
        %p287 = pneg %p168
      $region34: #{densecat_cat_add_forward.1} parent=11 // pred_check_branch
        %289 = sbr.rel (%p287) target = $region36
      $region35: #{densecat_cat_add_forward.1} parent=11 // pred_region
        _
      $region36: #{densecat_cat_add_forward.1} parent=11 // pred_fallthru
        _
      // Predicated region
      $region37: #{densecat_cat_add_forward.1} parent=11 // pred_check
        %p290 = pneg %p189
      $region38: #{densecat_cat_add_forward.1} parent=11 // pred_check_branch
        %292 = sbr.rel (%p290) target = $region40
      $region39: #{densecat_cat_add_forward.1} parent=11 // pred_region
        _
      $region40: #{densecat_cat_add_forward.1} parent=11 // pred_fallthru
        _
      // Predicated region
      $region41: #{densecat_cat_add_forward.1} parent=11 // pred_check
        %p293 = pneg %p210
      $region42: #{densecat_cat_add_forward.1} parent=11 // pred_check_branch
        %295 = sbr.rel (%p293) target = $region44
      $region43: #{densecat_cat_add_forward.1} parent=11 // pred_region
        _
      $region44: #{densecat_cat_add_forward.1} parent=11 // pred_fallthru
        _
      // Predicated region
      $region45: #{densecat_cat_add_forward.1} parent=11 // pred_check
        %p296 = pneg %p231
      $region46: #{densecat_cat_add_forward.1} parent=11 // pred_check_branch
        %298 = sbr.rel (%p296) target = $region48
      $region47: #{densecat_cat_add_forward.1} parent=11 // pred_region
        _
      $region48: #{densecat_cat_add_forward.1} parent=11 // pred_fallthru
        _
    $region12: #{densecat_cat_add_forward.1} parent=5 // pred_fallthru
      _
    %p299 = scmp.lt.s32.totalorder %s16, 2
    // Predicated region
    $region49: #{densecat_cat_add_forward.1} parent=5 // pred_check
      %p300 = pneg %p299
    $region50: #{densecat_cat_add_forward.1} parent=5 // pred_check_branch
      %302 = sbr.rel (%p300) target = $region52
    $region51: #{densecat_cat_add_forward.1} parent=5 // pred_region
      // Predicated region
      $region53: #{densecat_cat_add_forward.1} parent=51 // pred_check
        %p303 = pneg %p36
      $region54: #{densecat_cat_add_forward.1} parent=51 // pred_check_branch
        %305 = sbr.rel (%p303) target = $region56
      $region55: #{densecat_cat_add_forward.1} parent=51 // pred_region
        %p306 = scmp.lt.s32.totalorder %s16, 1
        %s307 = scalar_select %p306, %s16, 1
        %s308 = smul.addr %s307, 8
        %s309 = smul.addr %s308, 8
        %s310 = scalar_lea.vmem %s0, %s309
      $region56: #{densecat_cat_add_forward.1} parent=51 // pred_fallthru
        _
    $region52: #{densecat_cat_add_forward.1} parent=5 // pred_fallthru
      _
    %p311 = scmp.le.s32.totalorder 1, %s16
    %p312 = scmp.lt.s32.totalorder %s16, 3
    %p313 = pnand %p311, %p312
    %p314 = pneg %p313
    // Predicated region
    $region57: #{densecat_cat_add_forward.1} parent=5 // pred_check
      _
    $region58: #{densecat_cat_add_forward.1} parent=5 // pred_check_branch
      %316 = sbr.rel (%p313) target = $region60
    $region59: #{densecat_cat_add_forward.1} parent=5 // pred_region
      %s317 = ssub.s32 %s16, 1
      %p318 = scmp.lt.s32.totalorder %s21, 1
      %s319 = scalar_select %p318, %s21, 1
      %s320 = smul.addr %s319, 8
      %s321 = smul.addr %s320, 8
      %s322 = scalar_lea.vmem %s0, %s321
      %p323 = pneg %p42
      %p324 = pneg %p39
      %p325 = pneg %p63
      %p326 = pneg %p60
      %p327 = pneg %p84
      %p328 = pneg %p81
      %p329 = pneg %p105
      %p330 = pneg %p102
      %p331 = pneg %p126
      %p332 = pneg %p123
      %p333 = pneg %p147
      %p334 = pneg %p144
      %p335 = pneg %p168
      %p336 = pneg %p165
      %p337 = pneg %p189
      %p338 = pneg %p186
      %p339 = pneg %p210
      %p340 = pneg %p207
      %p341 = pneg %p231
      %p342 = pneg %p228
      %p343 = pneg %p257
      %p344 = pneg %p254
      %p345 = scmp.lt.s32.totalorder %s21, 1
      %s346 = scalar_select %p345, %s21, 1
      %s347 = smul.addr %s346, 4
      %s348 = smul.addr %s347, 8
      %s349 = scalar_lea.vmem %s10, %s348
      %p350 = scmp.lt.s32.totalorder %s21, 1
      %s351 = scalar_select %p350, %s21, 1
      %s352 = smul.addr %s351, 8
      %s353 = smul.addr %s352, 8
      %s354 = scalar_lea.vmem %s0, %s353
      %p355 = scmp.lt.s32.totalorder %s21, 1
      %s356 = scalar_select %p355, %s21, 1
      %s357 = smul.addr %s356, 4
      %s358 = smul.addr %s357, 8
      %s359 = scalar_lea.vmem %s10, %s358
      %v361 = vld [vmem:[%s354] sm:$0xff]
      %v362 = vld [vmem:[%s354 + $0x8] sm:$0xff]
      %v363 = vld [vmem:[%s354 + $0x10] sm:$0xff]
      %v364 = vld [vmem:[%s354 + $0x18] sm:$0xff]
      %v365 = vld [vmem:[%s354 + $0x20] sm:$0xff]
      %v366 = vld [vmem:[%s354 + $0x28] sm:$0xff]
      %v367 = vld [vmem:[%s354 + $0x30] sm:$0xff]
      %v368 = vld [vmem:[%s354 + $0x38] sm:$0xff]
      %369 = vrot.lane.b32.xlu0 %v361, 17
      %v370 = vpop.permute.xlu0 %369
      %371 = vrot.lane.b32.xlu0 %v362, 17
      %v372 = vpop.permute.xlu0 %371
      %373 = vrot.lane.b32.xlu0 %v363, 17
      %v374 = vpop.permute.xlu0 %373
      %375 = vrot.lane.b32.xlu0 %v364, 17
      %v376 = vpop.permute.xlu0 %375
      %377 = vrot.lane.b32.xlu0 %v365, 17
      %v378 = vpop.permute.xlu0 %377
      %379 = vrot.lane.b32.xlu0 %v366, 17
      %v380 = vpop.permute.xlu0 %379
      %381 = vrot.lane.b32.xlu0 %v367, 17
      %v382 = vpop.permute.xlu0 %381
      %383 = vrot.lane.b32.xlu0 %v368, 17
      %v384 = vpop.permute.xlu0 %383
      %v385 = vlaneseq
      %v386 = vand.u32 %v385, 127
      %vm387 = vcmp.lt.s32.totalorder %v386, 17
      %v388 = vsel %vm387, %v382, %v384
      %v389 = vsel %vm387, %v380, %v382
      %v390 = vsel %vm387, %v378, %v380
      %v391 = vsel %vm387, %v376, %v378
      %v392 = vsel %vm387, %v374, %v376
      %v393 = vsel %vm387, %v372, %v374
      %v394 = vsel %vm387, %v370, %v372
      %v395 = vsel %vm387, %v384, %v370
      %v396 = vld [vmem:[%s1] ss:$8 sm:$0xf]
      %v397 = vld [vmem:[%s1] ss:$8 sm:$0xf0]
      %v398 = vor.u32 %v396, %v397
      %v400 = vlaneseq
      %v401 = vshrl.u32 %v400, 7
      %v402 = vsub.s32 0, %v401
      %v403 = vrot.slane %v398, %v402
      %v404 = vlaneseq
      %v405 = vshrl.u32 %v404, 7
      %v406 = vsub.s32 1, %v405
      %v407 = vrot.slane %v398, %v406
      %v408 = vlaneseq
      %v409 = vshrl.u32 %v408, 7
      %v410 = vsub.s32 2, %v409
      %v411 = vrot.slane %v398, %v410
      %v412 = vlaneseq
      %v413 = vshrl.u32 %v412, 7
      %v414 = vsub.s32 3, %v413
      %v415 = vrot.slane %v398, %v414
      %v416 = vlaneseq
      %v417 = vshrl.u32 %v416, 7
      %v418 = vsub.s32 4, %v417
      %v419 = vrot.slane %v398, %v418
      %v420 = vlaneseq
      %v421 = vshrl.u32 %v420, 7
      %v422 = vsub.s32 5, %v421
      %v423 = vrot.slane %v398, %v422
      %v424 = vlaneseq
      %v425 = vshrl.u32 %v424, 7
      %v426 = vsub.s32 6, %v425
      %v427 = vrot.slane %v398, %v426
      %v428 = vlaneseq
      %v429 = vshrl.u32 %v428, 7
      %v430 = vsub.s32 7, %v429
      %v431 = vrot.slane %v398, %v430
      %v440 = vmul.f32 %v395, %v403
      %v441 = vmul.f32 %v394, %v407
      %v442 = vmul.f32 %v393, %v411
      %v443 = vmul.f32 %v392, %v415
      %v444 = vmul.f32 %v391, %v419
      %v445 = vmul.f32 %v390, %v423
      %v446 = vmul.f32 %v389, %v427
      %v447 = vmul.f32 %v388, %v431
      %448 = vst [vmem:[#allocation2] sm:$0xff] %v440
      %449 = vst [vmem:[#allocation2 + $0x8] sm:$0xff] %v441
      %450 = vst [vmem:[#allocation2 + $0x10] sm:$0xff] %v442
      %451 = vst [vmem:[#allocation2 + $0x18] sm:$0xff] %v443
      %452 = vst [vmem:[#allocation2 + $0x20] sm:$0xff] %v444
      %453 = vst [vmem:[#allocation2 + $0x28] sm:$0xff] %v445
      %454 = vst [vmem:[#allocation2 + $0x30] sm:$0xff] %v446
      %455 = vst [vmem:[#allocation2 + $0x38] sm:$0xff] %v447
      %456 = vrot.lane.b32.xlu0 %v361, 16
      %v457 = vpop.permute.xlu0 %456
      %458 = vrot.lane.b32.xlu0 %v362, 16
      %v459 = vpop.permute.xlu0 %458
      %460 = vrot.lane.b32.xlu0 %v363, 16
      %v461 = vpop.permute.xlu0 %460
      %462 = vrot.lane.b32.xlu0 %v364, 16
      %v463 = vpop.permute.xlu0 %462
      %464 = vrot.lane.b32.xlu0 %v365, 16
      %v465 = vpop.permute.xlu0 %464
      %466 = vrot.lane.b32.xlu0 %v366, 16
      %v467 = vpop.permute.xlu0 %466
      %468 = vrot.lane.b32.xlu0 %v367, 16
      %v469 = vpop.permute.xlu0 %468
      %470 = vrot.lane.b32.xlu0 %v368, 16
      %v471 = vpop.permute.xlu0 %470
      %vm472 = vcmp.lt.s32.totalorder %v386, 16
      %v473 = vsel %vm472, %v469, %v471
      %v474 = vsel %vm472, %v467, %v469
      %v475 = vsel %vm472, %v465, %v467
      %v476 = vsel %vm472, %v463, %v465
      %v477 = vsel %vm472, %v461, %v463
      %v478 = vsel %vm472, %v459, %v461
      %v479 = vsel %vm472, %v457, %v459
      %v480 = vsel %vm472, %v471, %v457
      %s481 = scalar_lea.vmem %s1, 1
      %v482 = vld [vmem:[%s481] ss:$8 sm:$0xf]
      %v483 = vld [vmem:[%s481] ss:$8 sm:$0xf0]
      %v484 = vor.u32 %v482, %v483
      %v486 = vlaneseq
      %v487 = vshrl.u32 %v486, 7
      %v488 = vsub.s32 0, %v487
      %v489 = vrot.slane %v484, %v488
      %v490 = vlaneseq
      %v491 = vshrl.u32 %v490, 7
      %v492 = vsub.s32 1, %v491
      %v493 = vrot.slane %v484, %v492
      %v494 = vlaneseq
      %v495 = vshrl.u32 %v494, 7
      %v496 = vsub.s32 2, %v495
      %v497 = vrot.slane %v484, %v496
      %v498 = vlaneseq
      %v499 = vshrl.u32 %v498, 7
      %v500 = vsub.s32 3, %v499
      %v501 = vrot.slane %v484, %v500
      %v502 = vlaneseq
      %v503 = vshrl.u32 %v502, 7
      %v504 = vsub.s32 4, %v503
      %v505 = vrot.slane %v484, %v504
      %v506 = vlaneseq
      %v507 = vshrl.u32 %v506, 7
      %v508 = vsub.s32 5, %v507
      %v509 = vrot.slane %v484, %v508
      %v510 = vlaneseq
      %v511 = vshrl.u32 %v510, 7
      %v512 = vsub.s32 6, %v511
      %v513 = vrot.slane %v484, %v512
      %v514 = vlaneseq
      %v515 = vshrl.u32 %v514, 7
      %v516 = vsub.s32 7, %v515
      %v517 = vrot.slane %v484, %v516
      %v526 = vmul.f32 %v480, %v489
      %v527 = vmul.f32 %v479, %v493
      %v528 = vmul.f32 %v478, %v497
      %v529 = vmul.f32 %v477, %v501
      %v530 = vmul.f32 %v476, %v505
      %v531 = vmul.f32 %v475, %v509
      %v532 = vmul.f32 %v474, %v513
      %v533 = vmul.f32 %v473, %v517
      %534 = vst [vmem:[#allocation2 + $0x40] sm:$0xff] %v526
      %535 = vst [vmem:[#allocation2 + $0x48] sm:$0xff] %v527
      %536 = vst [vmem:[#allocation2 + $0x50] sm:$0xff] %v528
      %537 = vst [vmem:[#allocation2 + $0x58] sm:$0xff] %v529
      %538 = vst [vmem:[#allocation2 + $0x60] sm:$0xff] %v530
      %539 = vst [vmem:[#allocation2 + $0x68] sm:$0xff] %v531
      %540 = vst [vmem:[#allocation2 + $0x70] sm:$0xff] %v532
      %541 = vst [vmem:[#allocation2 + $0x78] sm:$0xff] %v533
      %542 = vrot.lane.b32.xlu0 %v361, 15
      %v543 = vpop.permute.xlu0 %542
      %544 = vrot.lane.b32.xlu0 %v362, 15
      %v545 = vpop.permute.xlu0 %544
      %546 = vrot.lane.b32.xlu0 %v363, 15
      %v547 = vpop.permute.xlu0 %546
      %548 = vrot.lane.b32.xlu0 %v364, 15
      %v549 = vpop.permute.xlu0 %548
      %550 = vrot.lane.b32.xlu0 %v365, 15
      %v551 = vpop.permute.xlu0 %550
      %552 = vrot.lane.b32.xlu0 %v366, 15
      %v553 = vpop.permute.xlu0 %552
      %554 = vrot.lane.b32.xlu0 %v367, 15
      %v555 = vpop.permute.xlu0 %554
      %556 = vrot.lane.b32.xlu0 %v368, 15
      %v557 = vpop.permute.xlu0 %556
      %vm558 = vcmp.lt.s32.totalorder %v386, 15
      %v559 = vsel %vm558, %v555, %v557
      %v560 = vsel %vm558, %v553, %v555
      %v561 = vsel %vm558, %v551, %v553
      %v562 = vsel %vm558, %v549, %v551
      %v563 = vsel %vm558, %v547, %v549
      %v564 = vsel %vm558, %v545, %v547
      %v565 = vsel %vm558, %v543, %v545
      %v566 = vsel %vm558, %v557, %v543
      %s567 = scalar_lea.vmem %s1, 2
      %v568 = vld [vmem:[%s567] ss:$8 sm:$0xf]
      %v569 = vld [vmem:[%s567] ss:$8 sm:$0xf0]
      %v570 = vor.u32 %v568, %v569
      %v572 = vlaneseq
      %v573 = vshrl.u32 %v572, 7
      %v574 = vsub.s32 0, %v573
      %v575 = vrot.slane %v570, %v574
      %v576 = vlaneseq
      %v577 = vshrl.u32 %v576, 7
      %v578 = vsub.s32 1, %v577
      %v579 = vrot.slane %v570, %v578
      %v580 = vlaneseq
      %v581 = vshrl.u32 %v580, 7
      %v582 = vsub.s32 2, %v581
      %v583 = vrot.slane %v570, %v582
      %v584 = vlaneseq
      %v585 = vshrl.u32 %v584, 7
      %v586 = vsub.s32 3, %v585
      %v587 = vrot.slane %v570, %v586
      %v588 = vlaneseq
      %v589 = vshrl.u32 %v588, 7
      %v590 = vsub.s32 4, %v589
      %v591 = vrot.slane %v570, %v590
      %v592 = vlaneseq
      %v593 = vshrl.u32 %v592, 7
      %v594 = vsub.s32 5, %v593
      %v595 = vrot.slane %v570, %v594
      %v596 = vlaneseq
      %v597 = vshrl.u32 %v596, 7
      %v598 = vsub.s32 6, %v597
      %v599 = vrot.slane %v570, %v598
      %v600 = vlaneseq
      %v601 = vshrl.u32 %v600, 7
      %v602 = vsub.s32 7, %v601
      %v603 = vrot.slane %v570, %v602
      %v612 = vmul.f32 %v566, %v575
      %v613 = vmul.f32 %v565, %v579
      %v614 = vmul.f32 %v564, %v583
      %v615 = vmul.f32 %v563, %v587
      %v616 = vmul.f32 %v562, %v591
      %v617 = vmul.f32 %v561, %v595
      %v618 = vmul.f32 %v560, %v599
      %v619 = vmul.f32 %v559, %v603
      %620 = vst [vmem:[#allocation2 + $0x80] sm:$0xff] %v612
      %621 = vst [vmem:[#allocation2 + $0x88] sm:$0xff] %v613
      %622 = vst [vmem:[#allocation2 + $0x90] sm:$0xff] %v614
      %623 = vst [vmem:[#allocation2 + $0x98] sm:$0xff] %v615
      %624 = vst [vmem:[#allocation2 + $0xa0] sm:$0xff] %v616
      %625 = vst [vmem:[#allocation2 + $0xa8] sm:$0xff] %v617
      %626 = vst [vmem:[#allocation2 + $0xb0] sm:$0xff] %v618
      %627 = vst [vmem:[#allocation2 + $0xb8] sm:$0xff] %v619
      %628 = vrot.lane.b32.xlu0 %v361, 1
      %v629 = vpop.permute.xlu0 %628
      %630 = vrot.lane.b32.xlu0 %v362, 1
      %v631 = vpop.permute.xlu0 %630
      %632 = vrot.lane.b32.xlu0 %v363, 1
      %v633 = vpop.permute.xlu0 %632
      %634 = vrot.lane.b32.xlu0 %v364, 1
      %v635 = vpop.permute.xlu0 %634
      %636 = vrot.lane.b32.xlu0 %v365, 1
      %v637 = vpop.permute.xlu0 %636
      %638 = vrot.lane.b32.xlu0 %v366, 1
      %v639 = vpop.permute.xlu0 %638
      %640 = vrot.lane.b32.xlu0 %v367, 1
      %v641 = vpop.permute.xlu0 %640
      %642 = vrot.lane.b32.xlu0 %v368, 1
      %v643 = vpop.permute.xlu0 %642
      %vm644 = vcmp.lt.s32.totalorder %v386, 1
      %v645 = vsel %vm644, %v641, %v643
      %v646 = vsel %vm644, %v639, %v641
      %v647 = vsel %vm644, %v637, %v639
      %v648 = vsel %vm644, %v635, %v637
      %v649 = vsel %vm644, %v633, %v635
      %v650 = vsel %vm644, %v631, %v633
      %v651 = vsel %vm644, %v629, %v631
      %v652 = vsel %vm644, %v643, %v629
      %s653 = scalar_lea.vmem %s1, 3
      %v654 = vld [vmem:[%s653] ss:$8 sm:$0xf]
      %v655 = vld [vmem:[%s653] ss:$8 sm:$0xf0]
      %v656 = vor.u32 %v654, %v655
      %v658 = vlaneseq
      %v659 = vshrl.u32 %v658, 7
      %v660 = vsub.s32 0, %v659
      %v661 = vrot.slane %v656, %v660
      %v662 = vlaneseq
      %v663 = vshrl.u32 %v662, 7
      %v664 = vsub.s32 1, %v663
      %v665 = vrot.slane %v656, %v664
      %v666 = vlaneseq
      %v667 = vshrl.u32 %v666, 7
      %v668 = vsub.s32 2, %v667
      %v669 = vrot.slane %v656, %v668
      %v670 = vlaneseq
      %v671 = vshrl.u32 %v670, 7
      %v672 = vsub.s32 3, %v671
      %v673 = vrot.slane %v656, %v672
      %v674 = vlaneseq
      %v675 = vshrl.u32 %v674, 7
      %v676 = vsub.s32 4, %v675
      %v677 = vrot.slane %v656, %v676
      %v678 = vlaneseq
      %v679 = vshrl.u32 %v678, 7
      %v680 = vsub.s32 5, %v679
      %v681 = vrot.slane %v656, %v680
      %v682 = vlaneseq
      %v683 = vshrl.u32 %v682, 7
      %v684 = vsub.s32 6, %v683
      %v685 = vrot.slane %v656, %v684
      %v686 = vlaneseq
      %v687 = vshrl.u32 %v686, 7
      %v688 = vsub.s32 7, %v687
      %v689 = vrot.slane %v656, %v688
      %v698 = vmul.f32 %v652, %v661
      %v699 = vmul.f32 %v651, %v665
      %v700 = vmul.f32 %v650, %v669
      %v701 = vmul.f32 %v649, %v673
      %v702 = vmul.f32 %v648, %v677
      %v703 = vmul.f32 %v647, %v681
      %v704 = vmul.f32 %v646, %v685
      %v705 = vmul.f32 %v645, %v689
      %706 = vst [vmem:[#allocation2 + $0xc0] sm:$0xff] %v698
      %707 = vst [vmem:[#allocation2 + $0xc8] sm:$0xff] %v699
      %708 = vst [vmem:[#allocation2 + $0xd0] sm:$0xff] %v700
      %709 = vst [vmem:[#allocation2 + $0xd8] sm:$0xff] %v701
      %710 = vst [vmem:[#allocation2 + $0xe0] sm:$0xff] %v702
      %711 = vst [vmem:[#allocation2 + $0xe8] sm:$0xff] %v703
      %712 = vst [vmem:[#allocation2 + $0xf0] sm:$0xff] %v704
      %713 = vst [vmem:[#allocation2 + $0xf8] sm:$0xff] %v705
      %714 = vst [vmem:[#allocation2 + $0x100] sm:$0xff] %v361
      %715 = vst [vmem:[#allocation2 + $0x108] sm:$0xff] %v362
      %716 = vst [vmem:[#allocation2 + $0x110] sm:$0xff] %v363
      %717 = vst [vmem:[#allocation2 + $0x118] sm:$0xff] %v364
      %718 = vst [vmem:[#allocation2 + $0x120] sm:$0xff] %v365
      %719 = vst [vmem:[#allocation2 + $0x128] sm:$0xff] %v366
      %720 = vst [vmem:[#allocation2 + $0x130] sm:$0xff] %v367
      %721 = vst [vmem:[#allocation2 + $0x138] sm:$0xff] %v368
      %722 = vrot.lane.b32.xlu0 %v361, 127
      %v723 = vpop.permute.xlu0 %722
      %724 = vrot.lane.b32.xlu0 %v362, 127
      %v725 = vpop.permute.xlu0 %724
      %726 = vrot.lane.b32.xlu0 %v363, 127
      %v727 = vpop.permute.xlu0 %726
      %728 = vrot.lane.b32.xlu0 %v364, 127
      %v729 = vpop.permute.xlu0 %728
      %730 = vrot.lane.b32.xlu0 %v365, 127
      %v731 = vpop.permute.xlu0 %730
      %732 = vrot.lane.b32.xlu0 %v366, 127
      %v733 = vpop.permute.xlu0 %732
      %734 = vrot.lane.b32.xlu0 %v367, 127
      %v735 = vpop.permute.xlu0 %734
      %736 = vrot.lane.b32.xlu0 %v368, 127
      %v737 = vpop.permute.xlu0 %736
      %vm738 = vcmp.lt.s32.totalorder %v386, 127
      %v739 = vsel %vm738, %v735, %v737
      %v740 = vsel %vm738, %v733, %v735
      %v741 = vsel %vm738, %v731, %v733
      %v742 = vsel %vm738, %v729, %v731
      %v743 = vsel %vm738, %v727, %v729
      %v744 = vsel %vm738, %v725, %v727
      %v745 = vsel %vm738, %v723, %v725
      %v746 = vsel %vm738, %v737, %v723
      %s747 = scalar_lea.vmem %s1, 4
      %v748 = vld [vmem:[%s747] ss:$8 sm:$0xf]
      %v749 = vld [vmem:[%s747] ss:$8 sm:$0xf0]
      %v750 = vor.u32 %v748, %v749
      %v752 = vlaneseq
      %v753 = vshrl.u32 %v752, 7
      %v754 = vsub.s32 0, %v753
      %v755 = vrot.slane %v750, %v754
      %v756 = vlaneseq
      %v757 = vshrl.u32 %v756, 7
      %v758 = vsub.s32 1, %v757
      %v759 = vrot.slane %v750, %v758
      %v760 = vlaneseq
      %v761 = vshrl.u32 %v760, 7
      %v762 = vsub.s32 2, %v761
      %v763 = vrot.slane %v750, %v762
      %v764 = vlaneseq
      %v765 = vshrl.u32 %v764, 7
      %v766 = vsub.s32 3, %v765
      %v767 = vrot.slane %v750, %v766
      %v768 = vlaneseq
      %v769 = vshrl.u32 %v768, 7
      %v770 = vsub.s32 4, %v769
      %v771 = vrot.slane %v750, %v770
      %v772 = vlaneseq
      %v773 = vshrl.u32 %v772, 7
      %v774 = vsub.s32 5, %v773
      %v775 = vrot.slane %v750, %v774
      %v776 = vlaneseq
      %v777 = vshrl.u32 %v776, 7
      %v778 = vsub.s32 6, %v777
      %v779 = vrot.slane %v750, %v778
      %v780 = vlaneseq
      %v781 = vshrl.u32 %v780, 7
      %v782 = vsub.s32 7, %v781
      %v783 = vrot.slane %v750, %v782
      %v792 = vmul.f32 %v745, %v755
      %v793 = vmul.f32 %v744, %v759
      %v794 = vmul.f32 %v743, %v763
      %v795 = vmul.f32 %v742, %v767
      %v796 = vmul.f32 %v741, %v771
      %v797 = vmul.f32 %v740, %v775
      %v798 = vmul.f32 %v739, %v779
      %v799 = vmul.f32 %v746, %v783
      %800 = vst [vmem:[#allocation2 + $0x140] sm:$0xff] %v792
      %801 = vst [vmem:[#allocation2 + $0x148] sm:$0xff] %v793
      %802 = vst [vmem:[#allocation2 + $0x150] sm:$0xff] %v794
      %803 = vst [vmem:[#allocation2 + $0x158] sm:$0xff] %v795
      %804 = vst [vmem:[#allocation2 + $0x160] sm:$0xff] %v796
      %805 = vst [vmem:[#allocation2 + $0x168] sm:$0xff] %v797
      %806 = vst [vmem:[#allocation2 + $0x170] sm:$0xff] %v798
      %807 = vst [vmem:[#allocation2 + $0x178] sm:$0xff] %v799
      %808 = vrot.lane.b32.xlu0 %v361, 113
      %v809 = vpop.permute.xlu0 %808
      %810 = vrot.lane.b32.xlu0 %v362, 113
      %v811 = vpop.permute.xlu0 %810
      %812 = vrot.lane.b32.xlu0 %v363, 113
      %v813 = vpop.permute.xlu0 %812
      %814 = vrot.lane.b32.xlu0 %v364, 113
      %v815 = vpop.permute.xlu0 %814
      %816 = vrot.lane.b32.xlu0 %v365, 113
      %v817 = vpop.permute.xlu0 %816
      %818 = vrot.lane.b32.xlu0 %v366, 113
      %v819 = vpop.permute.xlu0 %818
      %820 = vrot.lane.b32.xlu0 %v367, 113
      %v821 = vpop.permute.xlu0 %820
      %822 = vrot.lane.b32.xlu0 %v368, 113
      %v823 = vpop.permute.xlu0 %822
      %vm824 = vcmp.lt.s32.totalorder %v386, 113
      %v825 = vsel %vm824, %v821, %v823
      %v826 = vsel %vm824, %v819, %v821
      %v827 = vsel %vm824, %v817, %v819
      %v828 = vsel %vm824, %v815, %v817
      %v829 = vsel %vm824, %v813, %v815
      %v830 = vsel %vm824, %v811, %v813
      %v831 = vsel %vm824, %v809, %v811
      %v832 = vsel %vm824, %v823, %v809
      %s833 = scalar_lea.vmem %s1, 5
      %v834 = vld [vmem:[%s833] ss:$8 sm:$0xf]
      %v835 = vld [vmem:[%s833] ss:$8 sm:$0xf0]
      %v836 = vor.u32 %v834, %v835
      %v838 = vlaneseq
      %v839 = vshrl.u32 %v838, 7
      %v840 = vsub.s32 0, %v839
      %v841 = vrot.slane %v836, %v840
      %v842 = vlaneseq
      %v843 = vshrl.u32 %v842, 7
      %v844 = vsub.s32 1, %v843
      %v845 = vrot.slane %v836, %v844
      %v846 = vlaneseq
      %v847 = vshrl.u32 %v846, 7
      %v848 = vsub.s32 2, %v847
      %v849 = vrot.slane %v836, %v848
      %v850 = vlaneseq
      %v851 = vshrl.u32 %v850, 7
      %v852 = vsub.s32 3, %v851
      %v853 = vrot.slane %v836, %v852
      %v854 = vlaneseq
      %v855 = vshrl.u32 %v854, 7
      %v856 = vsub.s32 4, %v855
      %v857 = vrot.slane %v836, %v856
      %v858 = vlaneseq
      %v859 = vshrl.u32 %v858, 7
      %v860 = vsub.s32 5, %v859
      %v861 = vrot.slane %v836, %v860
      %v862 = vlaneseq
      %v863 = vshrl.u32 %v862, 7
      %v864 = vsub.s32 6, %v863
      %v865 = vrot.slane %v836, %v864
      %v866 = vlaneseq
      %v867 = vshrl.u32 %v866, 7
      %v868 = vsub.s32 7, %v867
      %v869 = vrot.slane %v836, %v868
      %v878 = vmul.f32 %v831, %v841
      %v879 = vmul.f32 %v830, %v845
      %v880 = vmul.f32 %v829, %v849
      %v881 = vmul.f32 %v828, %v853
      %v882 = vmul.f32 %v827, %v857
      %v883 = vmul.f32 %v826, %v861
      %v884 = vmul.f32 %v825, %v865
      %v885 = vmul.f32 %v832, %v869
      %886 = vst [vmem:[#allocation2 + $0x180] sm:$0xff] %v878
      %887 = vst [vmem:[#allocation2 + $0x188] sm:$0xff] %v879
      %888 = vst [vmem:[#allocation2 + $0x190] sm:$0xff] %v880
      %889 = vst [vmem:[#allocation2 + $0x198] sm:$0xff] %v881
      %890 = vst [vmem:[#allocation2 + $0x1a0] sm:$0xff] %v882
      %891 = vst [vmem:[#allocation2 + $0x1a8] sm:$0xff] %v883
      %892 = vst [vmem:[#allocation2 + $0x1b0] sm:$0xff] %v884
      %893 = vst [vmem:[#allocation2 + $0x1b8] sm:$0xff] %v885
      %894 = vrot.lane.b32.xlu0 %v361, 112
      %v895 = vpop.permute.xlu0 %894
      %896 = vrot.lane.b32.xlu0 %v362, 112
      %v897 = vpop.permute.xlu0 %896
      %898 = vrot.lane.b32.xlu0 %v363, 112
      %v899 = vpop.permute.xlu0 %898
      %900 = vrot.lane.b32.xlu0 %v364, 112
      %v901 = vpop.permute.xlu0 %900
      %902 = vrot.lane.b32.xlu0 %v365, 112
      %v903 = vpop.permute.xlu0 %902
      %904 = vrot.lane.b32.xlu0 %v366, 112
      %v905 = vpop.permute.xlu0 %904
      %906 = vrot.lane.b32.xlu0 %v367, 112
      %v907 = vpop.permute.xlu0 %906
      %908 = vrot.lane.b32.xlu0 %v368, 112
      %v909 = vpop.permute.xlu0 %908
      %vm910 = vcmp.lt.s32.totalorder %v386, 112
      %v911 = vsel %vm910, %v907, %v909
      %v912 = vsel %vm910, %v905, %v907
      %v913 = vsel %vm910, %v903, %v905
      %v914 = vsel %vm910, %v901, %v903
      %v915 = vsel %vm910, %v899, %v901
      %v916 = vsel %vm910, %v897, %v899
      %v917 = vsel %vm910, %v895, %v897
      %v918 = vsel %vm910, %v909, %v895
      %s919 = scalar_lea.vmem %s1, 6
      %v920 = vld [vmem:[%s919] ss:$8 sm:$0xf]
      %v921 = vld [vmem:[%s919] ss:$8 sm:$0xf0]
      %v922 = vor.u32 %v920, %v921
      %v924 = vlaneseq
      %v925 = vshrl.u32 %v924, 7
      %v926 = vsub.s32 0, %v925
      %v927 = vrot.slane %v922, %v926
      %v928 = vlaneseq
      %v929 = vshrl.u32 %v928, 7
      %v930 = vsub.s32 1, %v929
      %v931 = vrot.slane %v922, %v930
      %v932 = vlaneseq
      %v933 = vshrl.u32 %v932, 7
      %v934 = vsub.s32 2, %v933
      %v935 = vrot.slane %v922, %v934
      %v936 = vlaneseq
      %v937 = vshrl.u32 %v936, 7
      %v938 = vsub.s32 3, %v937
      %v939 = vrot.slane %v922, %v938
      %v940 = vlaneseq
      %v941 = vshrl.u32 %v940, 7
      %v942 = vsub.s32 4, %v941
      %v943 = vrot.slane %v922, %v942
      %v944 = vlaneseq
      %v945 = vshrl.u32 %v944, 7
      %v946 = vsub.s32 5, %v945
      %v947 = vrot.slane %v922, %v946
      %v948 = vlaneseq
      %v949 = vshrl.u32 %v948, 7
      %v950 = vsub.s32 6, %v949
      %v951 = vrot.slane %v922, %v950
      %v952 = vlaneseq
      %v953 = vshrl.u32 %v952, 7
      %v954 = vsub.s32 7, %v953
      %v955 = vrot.slane %v922, %v954
      %v964 = vmul.f32 %v917, %v927
      %v965 = vmul.f32 %v916, %v931
      %v966 = vmul.f32 %v915, %v935
      %v967 = vmul.f32 %v914, %v939
      %v968 = vmul.f32 %v913, %v943
      %v969 = vmul.f32 %v912, %v947
      %v970 = vmul.f32 %v911, %v951
      %v971 = vmul.f32 %v918, %v955
      %972 = vst [vmem:[#allocation2 + $0x1c0] sm:$0xff] %v964
      %973 = vst [vmem:[#allocation2 + $0x1c8] sm:$0xff] %v965
      %974 = vst [vmem:[#allocation2 + $0x1d0] sm:$0xff] %v966
      %975 = vst [vmem:[#allocation2 + $0x1d8] sm:$0xff] %v967
      %976 = vst [vmem:[#allocation2 + $0x1e0] sm:$0xff] %v968
      %977 = vst [vmem:[#allocation2 + $0x1e8] sm:$0xff] %v969
      %978 = vst [vmem:[#allocation2 + $0x1f0] sm:$0xff] %v970
      %979 = vst [vmem:[#allocation2 + $0x1f8] sm:$0xff] %v971
      %980 = vrot.lane.b32.xlu0 %v361, 111
      %v981 = vpop.permute.xlu0 %980
      %982 = vrot.lane.b32.xlu0 %v362, 111
      %v983 = vpop.permute.xlu0 %982
      %984 = vrot.lane.b32.xlu0 %v363, 111
      %v985 = vpop.permute.xlu0 %984
      %986 = vrot.lane.b32.xlu0 %v364, 111
      %v987 = vpop.permute.xlu0 %986
      %988 = vrot.lane.b32.xlu0 %v365, 111
      %v989 = vpop.permute.xlu0 %988
      %990 = vrot.lane.b32.xlu0 %v366, 111
      %v991 = vpop.permute.xlu0 %990
      %992 = vrot.lane.b32.xlu0 %v367, 111
      %v993 = vpop.permute.xlu0 %992
      %994 = vrot.lane.b32.xlu0 %v368, 111
      %v995 = vpop.permute.xlu0 %994
      %vm996 = vcmp.lt.s32.totalorder %v386, 111
      %v997 = vsel %vm996, %v993, %v995
      %v998 = vsel %vm996, %v991, %v993
      %v999 = vsel %vm996, %v989, %v991
      %v1000 = vsel %vm996, %v987, %v989
      %v1001 = vsel %vm996, %v985, %v987
      %v1002 = vsel %vm996, %v983, %v985
      %v1003 = vsel %vm996, %v981, %v983
      %v1004 = vsel %vm996, %v995, %v981
      %s1005 = scalar_lea.vmem %s1, 7
      %v1006 = vld [vmem:[%s1005] ss:$8 sm:$0xf]
      %v1007 = vld [vmem:[%s1005] ss:$8 sm:$0xf0]
      %v1008 = vor.u32 %v1006, %v1007
      %v1010 = vlaneseq
      %v1011 = vshrl.u32 %v1010, 7
      %v1012 = vsub.s32 0, %v1011
      %v1013 = vrot.slane %v1008, %v1012
      %v1014 = vlaneseq
      %v1015 = vshrl.u32 %v1014, 7
      %v1016 = vsub.s32 1, %v1015
      %v1017 = vrot.slane %v1008, %v1016
      %v1018 = vlaneseq
      %v1019 = vshrl.u32 %v1018, 7
      %v1020 = vsub.s32 2, %v1019
      %v1021 = vrot.slane %v1008, %v1020
      %v1022 = vlaneseq
      %v1023 = vshrl.u32 %v1022, 7
      %v1024 = vsub.s32 3, %v1023
      %v1025 = vrot.slane %v1008, %v1024
      %v1026 = vlaneseq
      %v1027 = vshrl.u32 %v1026, 7
      %v1028 = vsub.s32 4, %v1027
      %v1029 = vrot.slane %v1008, %v1028
      %v1030 = vlaneseq
      %v1031 = vshrl.u32 %v1030, 7
      %v1032 = vsub.s32 5, %v1031
      %v1033 = vrot.slane %v1008, %v1032
      %v1034 = vlaneseq
      %v1035 = vshrl.u32 %v1034, 7
      %v1036 = vsub.s32 6, %v1035
      %v1037 = vrot.slane %v1008, %v1036
      %v1038 = vlaneseq
      %v1039 = vshrl.u32 %v1038, 7
      %v1040 = vsub.s32 7, %v1039
      %v1041 = vrot.slane %v1008, %v1040
      %v1050 = vmul.f32 %v1003, %v1013
      %v1051 = vmul.f32 %v1002, %v1017
      %v1052 = vmul.f32 %v1001, %v1021
      %v1053 = vmul.f32 %v1000, %v1025
      %v1054 = vmul.f32 %v999, %v1029
      %v1055 = vmul.f32 %v998, %v1033
      %v1056 = vmul.f32 %v997, %v1037
      %v1057 = vmul.f32 %v1004, %v1041
      %1058 = vst [vmem:[#allocation2 + $0x200] sm:$0xff] %v1050
      %1059 = vst [vmem:[#allocation2 + $0x208] sm:$0xff] %v1051
      %1060 = vst [vmem:[#allocation2 + $0x210] sm:$0xff] %v1052
      %1061 = vst [vmem:[#allocation2 + $0x218] sm:$0xff] %v1053
      %1062 = vst [vmem:[#allocation2 + $0x220] sm:$0xff] %v1054
      %1063 = vst [vmem:[#allocation2 + $0x228] sm:$0xff] %v1055
      %1064 = vst [vmem:[#allocation2 + $0x230] sm:$0xff] %v1056
      %1065 = vst [vmem:[#allocation2 + $0x238] sm:$0xff] %v1057
      %v1066 = vld [vmem:[%s2] sm:$0xf]
      %v1067 = vld [vmem:[#allocation2] sm:$0xff]
      %v1068 = vld [vmem:[#allocation2 + $0x8] sm:$0xff]
      %v1069 = vld [vmem:[#allocation2 + $0x10] sm:$0xff]
      %v1070 = vld [vmem:[#allocation2 + $0x18] sm:$0xff]
      %v1071 = vld [vmem:[#allocation2 + $0x20] sm:$0xff]
      %v1072 = vld [vmem:[#allocation2 + $0x28] sm:$0xff]
      %v1073 = vld [vmem:[#allocation2 + $0x30] sm:$0xff]
      %v1074 = vld [vmem:[#allocation2 + $0x38] sm:$0xff]
      %v1075 = vld [vmem:[#allocation2 + $0x40] sm:$0xff]
      %v1076 = vld [vmem:[#allocation2 + $0x48] sm:$0xff]
      %v1077 = vld [vmem:[#allocation2 + $0x50] sm:$0xff]
      %v1078 = vld [vmem:[#allocation2 + $0x58] sm:$0xff]
      %v1079 = vld [vmem:[#allocation2 + $0x60] sm:$0xff]
      %v1080 = vld [vmem:[#allocation2 + $0x68] sm:$0xff]
      %v1081 = vld [vmem:[#allocation2 + $0x70] sm:$0xff]
      %v1082 = vld [vmem:[#allocation2 + $0x78] sm:$0xff]
      %v1083 = vld [vmem:[#allocation2 + $0x80] sm:$0xff]
      %v1084 = vld [vmem:[#allocation2 + $0x88] sm:$0xff]
      %v1085 = vld [vmem:[#allocation2 + $0x90] sm:$0xff]
      %v1086 = vld [vmem:[#allocation2 + $0x98] sm:$0xff]
      %v1087 = vld [vmem:[#allocation2 + $0xa0] sm:$0xff]
      %v1088 = vld [vmem:[#allocation2 + $0xa8] sm:$0xff]
      %v1089 = vld [vmem:[#allocation2 + $0xb0] sm:$0xff]
      %v1090 = vld [vmem:[#allocation2 + $0xb8] sm:$0xff]
      %v1091 = vld [vmem:[#allocation2 + $0xc0] sm:$0xff]
      %v1092 = vld [vmem:[#allocation2 + $0xc8] sm:$0xff]
      %v1093 = vld [vmem:[#allocation2 + $0xd0] sm:$0xff]
      %v1094 = vld [vmem:[#allocation2 + $0xd8] sm:$0xff]
      %v1095 = vld [vmem:[#allocation2 + $0xe0] sm:$0xff]
      %v1096 = vld [vmem:[#allocation2 + $0xe8] sm:$0xff]
      %v1097 = vld [vmem:[#allocation2 + $0xf0] sm:$0xff]
      %v1098 = vld [vmem:[#allocation2 + $0xf8] sm:$0xff]
      %v1099 = vld [vmem:[#allocation2 + $0x100] sm:$0xff]
      %v1100 = vld [vmem:[#allocation2 + $0x108] sm:$0xff]
      %v1101 = vld [vmem:[#allocation2 + $0x110] sm:$0xff]
      %v1102 = vld [vmem:[#allocation2 + $0x118] sm:$0xff]
      %v1103 = vld [vmem:[#allocation2 + $0x120] sm:$0xff]
      %v1104 = vld [vmem:[#allocation2 + $0x128] sm:$0xff]
      %v1105 = vld [vmem:[#allocation2 + $0x130] sm:$0xff]
      %v1106 = vld [vmem:[#allocation2 + $0x138] sm:$0xff]
      %v1107 = vld [vmem:[#allocation2 + $0x140] sm:$0xff]
      %v1108 = vld [vmem:[#allocation2 + $0x148] sm:$0xff]
      %v1109 = vld [vmem:[#allocation2 + $0x150] sm:$0xff]
      %v1110 = vld [vmem:[#allocation2 + $0x158] sm:$0xff]
      %v1111 = vld [vmem:[#allocation2 + $0x160] sm:$0xff]
      %v1112 = vld [vmem:[#allocation2 + $0x168] sm:$0xff]
      %v1113 = vld [vmem:[#allocation2 + $0x170] sm:$0xff]
      %v1114 = vld [vmem:[#allocation2 + $0x178] sm:$0xff]
      %v1115 = vld [vmem:[#allocation2 + $0x180] sm:$0xff]
      %v1116 = vld [vmem:[#allocation2 + $0x188] sm:$0xff]
      %v1117 = vld [vmem:[#allocation2 + $0x190] sm:$0xff]
      %v1118 = vld [vmem:[#allocation2 + $0x198] sm:$0xff]
      %v1119 = vld [vmem:[#allocation2 + $0x1a0] sm:$0xff]
      %v1120 = vld [vmem:[#allocation2 + $0x1a8] sm:$0xff]
      %v1121 = vld [vmem:[#allocation2 + $0x1b0] sm:$0xff]
      %v1122 = vld [vmem:[#allocation2 + $0x1b8] sm:$0xff]
      %v1123 = vld [vmem:[#allocation2 + $0x1c0] sm:$0xff]
      %v1124 = vld [vmem:[#allocation2 + $0x1c8] sm:$0xff]
      %v1125 = vld [vmem:[#allocation2 + $0x1d0] sm:$0xff]
      %v1126 = vld [vmem:[#allocation2 + $0x1d8] sm:$0xff]
      %v1127 = vld [vmem:[#allocation2 + $0x1e0] sm:$0xff]
      %v1128 = vld [vmem:[#allocation2 + $0x1e8] sm:$0xff]
      %v1129 = vld [vmem:[#allocation2 + $0x1f0] sm:$0xff]
      %v1130 = vld [vmem:[#allocation2 + $0x1f8] sm:$0xff]
      %v1131 = vld [vmem:[#allocation2 + $0x200] sm:$0xff]
      %v1132 = vld [vmem:[#allocation2 + $0x208] sm:$0xff]
      %v1133 = vld [vmem:[#allocation2 + $0x210] sm:$0xff]
      %v1134 = vld [vmem:[#allocation2 + $0x218] sm:$0xff]
      %v1135 = vld [vmem:[#allocation2 + $0x220] sm:$0xff]
      %v1136 = vld [vmem:[#allocation2 + $0x228] sm:$0xff]
      %v1137 = vld [vmem:[#allocation2 + $0x230] sm:$0xff]
      %v1138 = vld [vmem:[#allocation2 + $0x238] sm:$0xff]
      %v1139 = vpack.c.bf16 %v1075, %v1067
      %v1140 = vpack.c.bf16 %v1076, %v1068
      %v1141 = vpack.c.bf16 %v1077, %v1069
      %v1142 = vpack.c.bf16 %v1078, %v1070
      %v1143 = vpack.c.bf16 %v1079, %v1071
      %v1144 = vpack.c.bf16 %v1080, %v1072
      %v1145 = vpack.c.bf16 %v1081, %v1073
      %v1146 = vpack.c.bf16 %v1082, %v1074
      %v1147 = vpack.c.bf16 %v1091, %v1083
      %v1148 = vpack.c.bf16 %v1092, %v1084
      %v1149 = vpack.c.bf16 %v1093, %v1085
      %v1150 = vpack.c.bf16 %v1094, %v1086
      %v1151 = vpack.c.bf16 %v1095, %v1087
      %v1152 = vpack.c.bf16 %v1096, %v1088
      %v1153 = vpack.c.bf16 %v1097, %v1089
      %v1154 = vpack.c.bf16 %v1098, %v1090
      %v1155 = vpack.c.bf16 %v1107, %v1099
      %v1156 = vpack.c.bf16 %v1108, %v1100
      %v1157 = vpack.c.bf16 %v1109, %v1101
      %v1158 = vpack.c.bf16 %v1110, %v1102
      %v1159 = vpack.c.bf16 %v1111, %v1103
      %v1160 = vpack.c.bf16 %v1112, %v1104
      %v1161 = vpack.c.bf16 %v1113, %v1105
      %v1162 = vpack.c.bf16 %v1114, %v1106
      %v1163 = vpack.c.bf16 %v1123, %v1115
      %v1164 = vpack.c.bf16 %v1124, %v1116
      %v1165 = vpack.c.bf16 %v1125, %v1117
      %v1166 = vpack.c.bf16 %v1126, %v1118
      %v1167 = vpack.c.bf16 %v1127, %v1119
      %v1168 = vpack.c.bf16 %v1128, %v1120
      %v1169 = vpack.c.bf16 %v1129, %v1121
      %v1170 = vpack.c.bf16 %v1130, %v1122
      %v1171 = vpack.c.bf16 %v1131, %v1131
      %v1172 = vpack.c.bf16 %v1132, %v1132
      %v1173 = vpack.c.bf16 %v1133, %v1133
      %v1174 = vpack.c.bf16 %v1134, %v1134
      %v1175 = vpack.c.bf16 %v1135, %v1135
      %v1176 = vpack.c.bf16 %v1136, %v1136
      %v1177 = vpack.c.bf16 %v1137, %v1137
      %v1178 = vpack.c.bf16 %v1138, %v1138
      %v1179 = vld [vmem:[%s3] sm:$0xff]
      %1181 = vset.pattern.permute.xlu0 0
      %1182 = vperm.xlu0 %1181, %v1179
      %v1183 = vpop.permute.xlu0 %1182
      %vm1185 = vcmask 588800
      %v1187 = vsel %vm1185, %v1066, 0
      %vm1189 = vcmask 1043456
      %v1191 = vsel %vm1189, %v1171, 0
      %v1194 = vsel %vm1189, %v1172, 0
      %v1197 = vsel %vm1189, %v1173, 0
      %v1200 = vsel %vm1189, %v1174, 0
      %v1203 = vsel %vm1189, %v1175, 0
      %v1206 = vsel %vm1189, %v1176, 0
      %v1209 = vsel %vm1189, %v1177, 0
      %v1212 = vsel %vm1189, %v1178, 0
      %1214 = vmatprep.subr.bf16.mxu0 %v1140
      %1215 = vmatpush1.bf16.msra.mxu0 %v1139
      %1216 = vmatprep.subr.bf16.mxu0 %v1148
      %1217 = vmatpush1.bf16.msra.mxu0 %v1147
      %1218 = vmatprep.subr.bf16.mxu0 %v1156
      %1219 = vmatpush1.bf16.msra.mxu0 %v1155
      %1220 = vmatprep.subr.bf16.mxu0 %v1164
      %1221 = vmatpush1.bf16.msra.mxu0 %v1163
      %1222 = vmatprep.subr.bf16.mxu0 %v1194
      %1223 = vmatpush1.bf16.msra.mxu0 %v1191
      %1224 = vmatprep.subr.bf16.mxu0 0
      %1225 = vmatpush1.bf16.msra.mxu0 0
      %1226 = vmatprep.subr.bf16.mxu0 0
      %1227 = vmatpush1.bf16.msra.mxu0 0
      %1228 = vmatprep.subr.bf16.mxu0 0
      %1229 = vmatpush1.bf16.msra.mxu0 0
      %1230 = vmatprep.subr.bf16.mxu0 0
      %1231 = vmatpush1.bf16.msra.mxu0 0
      %1232 = vmatprep.subr.bf16.mxu0 0
      %1233 = vmatpush1.bf16.msra.mxu0 0
      %1234 = vmatprep.subr.bf16.mxu0 0
      %1235 = vmatpush1.bf16.msra.mxu0 0
      %1236 = vmatprep.subr.bf16.mxu0 0
      %1237 = vmatpush1.bf16.msra.mxu0 0
      %1238 = vmatprep.subr.bf16.mxu0 0
      %1239 = vmatpush1.bf16.msra.mxu0 0
      %1240 = vmatprep.subr.bf16.mxu0 0
      %1241 = vmatpush1.bf16.msra.mxu0 0
      %1242 = vmatprep.subr.bf16.mxu0 0
      %1243 = vmatpush1.bf16.msra.mxu0 0
      %1244 = vmatprep.subr.bf16.mxu0 0
      %1245 = vmatpush1.bf16.msra.mxu0 0
      %1246 = vmatprep.mubr.bf16.mxu0 0
      %1247 = vmatmul.mubr.bf16.gmra.mrb[0].mxu0 %v1187
      %v1248 = vpop.f32.mrb[0].mxu0
      %v1249 = vadd.f32 %v1183, %v1248
      %v1250 = vpop.f32.mrb[0].mxu0
      %v1251 = vadd.f32 %v1183, %v1250
      %v1252 = vpop.f32.mrb[0].mxu0
      %v1253 = vpop.f32.mrb[0].mxu0
      %1254 = vdwg.mxu0
      %1255 = vmatprep.subr.bf16.mxu0 %v1142
      %1256 = vmatpush1.bf16.msra.mxu0 %v1141
      %1257 = vmatprep.subr.bf16.mxu0 %v1150
      %1258 = vmatpush1.bf16.msra.mxu0 %v1149
      %1259 = vmatprep.subr.bf16.mxu0 %v1158
      %1260 = vmatpush1.bf16.msra.mxu0 %v1157
      %1261 = vmatprep.subr.bf16.mxu0 %v1166
      %1262 = vmatpush1.bf16.msra.mxu0 %v1165
      %1263 = vmatprep.subr.bf16.mxu0 %v1200
      %1264 = vmatpush1.bf16.msra.mxu0 %v1197
      %1265 = vmatprep.subr.bf16.mxu0 0
      %1266 = vmatpush1.bf16.msra.mxu0 0
      %1267 = vmatprep.subr.bf16.mxu0 0
      %1268 = vmatpush1.bf16.msra.mxu0 0
      %1269 = vmatprep.subr.bf16.mxu0 0
      %1270 = vmatpush1.bf16.msra.mxu0 0
      %1271 = vmatprep.subr.bf16.mxu0 0
      %1272 = vmatpush1.bf16.msra.mxu0 0
      %1273 = vmatprep.subr.bf16.mxu0 0
      %1274 = vmatpush1.bf16.msra.mxu0 0
      %1275 = vmatprep.subr.bf16.mxu0 0
      %1276 = vmatpush1.bf16.msra.mxu0 0
      %1277 = vmatprep.subr.bf16.mxu0 0
      %1278 = vmatpush1.bf16.msra.mxu0 0
      %1279 = vmatprep.subr.bf16.mxu0 0
      %1280 = vmatpush1.bf16.msra.mxu0 0
      %1281 = vmatprep.subr.bf16.mxu0 0
      %1282 = vmatpush1.bf16.msra.mxu0 0
      %1283 = vmatprep.subr.bf16.mxu0 0
      %1284 = vmatpush1.bf16.msra.mxu0 0
      %1285 = vmatprep.subr.bf16.mxu0 0
      %1286 = vmatpush1.bf16.msra.mxu0 0
      %1287 = vmatprep.mubr.bf16.mxu0 0
      %1288 = vmatmul.mubr.bf16.gmra.mrb[0].mxu0 %v1187
      %v1289 = vpop.f32.mrb[0].mxu0
      %v1290 = vadd.f32 %v1183, %v1289
      %v1291 = vpop.f32.mrb[0].mxu0
      %v1292 = vadd.f32 %v1183, %v1291
      %v1293 = vpop.f32.mrb[0].mxu0
      %v1294 = vpop.f32.mrb[0].mxu0
      %1295 = vdwg.mxu0
      %1296 = vmatprep.subr.bf16.mxu0 %v1144
      %1297 = vmatpush1.bf16.msra.mxu0 %v1143
      %1298 = vmatprep.subr.bf16.mxu0 %v1152
      %1299 = vmatpush1.bf16.msra.mxu0 %v1151
      %1300 = vmatprep.subr.bf16.mxu0 %v1160
      %1301 = vmatpush1.bf16.msra.mxu0 %v1159
      %1302 = vmatprep.subr.bf16.mxu0 %v1168
      %1303 = vmatpush1.bf16.msra.mxu0 %v1167
      %1304 = vmatprep.subr.bf16.mxu0 %v1206
      %1305 = vmatpush1.bf16.msra.mxu0 %v1203
      %1306 = vmatprep.subr.bf16.mxu0 0
      %1307 = vmatpush1.bf16.msra.mxu0 0
      %1308 = vmatprep.subr.bf16.mxu0 0
      %1309 = vmatpush1.bf16.msra.mxu0 0
      %1310 = vmatprep.subr.bf16.mxu0 0
      %1311 = vmatpush1.bf16.msra.mxu0 0
      %1312 = vmatprep.subr.bf16.mxu0 0
      %1313 = vmatpush1.bf16.msra.mxu0 0
      %1314 = vmatprep.subr.bf16.mxu0 0
      %1315 = vmatpush1.bf16.msra.mxu0 0
      %1316 = vmatprep.subr.bf16.mxu0 0
      %1317 = vmatpush1.bf16.msra.mxu0 0
      %1318 = vmatprep.subr.bf16.mxu0 0
      %1319 = vmatpush1.bf16.msra.mxu0 0
      %1320 = vmatprep.subr.bf16.mxu0 0
      %1321 = vmatpush1.bf16.msra.mxu0 0
      %1322 = vmatprep.subr.bf16.mxu0 0
      %1323 = vmatpush1.bf16.msra.mxu0 0
      %1324 = vmatprep.subr.bf16.mxu0 0
      %1325 = vmatpush1.bf16.msra.mxu0 0
      %1326 = vmatprep.subr.bf16.mxu0 0
      %1327 = vmatpush1.bf16.msra.mxu0 0
      %1328 = vmatprep.mubr.bf16.mxu0 0
      %1329 = vmatmul.mubr.bf16.gmra.mrb[0].mxu0 %v1187
      %v1330 = vpop.f32.mrb[0].mxu0
      %v1331 = vadd.f32 %v1183, %v1330
      %v1332 = vpop.f32.mrb[0].mxu0
      %v1333 = vadd.f32 %v1183, %v1332
      %v1334 = vpop.f32.mrb[0].mxu0
      %v1335 = vpop.f32.mrb[0].mxu0
      %1336 = vdwg.mxu0
      %1337 = vmatprep.subr.bf16.mxu0 %v1146
      %1338 = vmatpush1.bf16.msra.mxu0 %v1145
      %1339 = vmatprep.subr.bf16.mxu0 %v1154
      %1340 = vmatpush1.bf16.msra.mxu0 %v1153
      %1341 = vmatprep.subr.bf16.mxu0 %v1162
      %1342 = vmatpush1.bf16.msra.mxu0 %v1161
      %1343 = vmatprep.subr.bf16.mxu0 %v1170
      %1344 = vmatpush1.bf16.msra.mxu0 %v1169
      %1345 = vmatprep.subr.bf16.mxu0 %v1212
      %1346 = vmatpush1.bf16.msra.mxu0 %v1209
      %1347 = vmatprep.subr.bf16.mxu0 0
      %1348 = vmatpush1.bf16.msra.mxu0 0
      %1349 = vmatprep.subr.bf16.mxu0 0
      %1350 = vmatpush1.bf16.msra.mxu0 0
      %1351 = vmatprep.subr.bf16.mxu0 0
      %1352 = vmatpush1.bf16.msra.mxu0 0
      %1353 = vmatprep.subr.bf16.mxu0 0
      %1354 = vmatpush1.bf16.msra.mxu0 0
      %1355 = vmatprep.subr.bf16.mxu0 0
      %1356 = vmatpush1.bf16.msra.mxu0 0
      %1357 = vmatprep.subr.bf16.mxu0 0
      %1358 = vmatpush1.bf16.msra.mxu0 0
      %1359 = vmatprep.subr.bf16.mxu0 0
      %1360 = vmatpush1.bf16.msra.mxu0 0
      %1361 = vmatprep.subr.bf16.mxu0 0
      %1362 = vmatpush1.bf16.msra.mxu0 0
      %1363 = vmatprep.subr.bf16.mxu0 0
      %1364 = vmatpush1.bf16.msra.mxu0 0
      %1365 = vmatprep.subr.bf16.mxu0 0
      %1366 = vmatpush1.bf16.msra.mxu0 0
      %1367 = vmatprep.subr.bf16.mxu0 0
      %1368 = vmatpush1.bf16.msra.mxu0 0
      %1369 = vmatprep.mubr.bf16.mxu0 0
      %1370 = vmatmul.mubr.bf16.gmra.mrb[0].mxu0 %v1187
      %v1371 = vpop.f32.mrb[0].mxu0
      %v1372 = vadd.f32 %v1183, %v1371
      %v1373 = vpop.f32.mrb[0].mxu0
      %v1374 = vadd.f32 %v1183, %v1373
      %v1375 = vpop.f32.mrb[0].mxu0
      %v1376 = vpop.f32.mrb[0].mxu0
      %1377 = vdwg.mxu0
      %v1378 = vmax.f32 %v1249, 0.0
      %v1379 = vmax.f32 %v1251, 0.0
      %v1380 = vmax.f32 %v1290, 0.0
      %v1381 = vmax.f32 %v1292, 0.0
      %v1382 = vmax.f32 %v1331, 0.0
      %v1383 = vmax.f32 %v1333, 0.0
      %v1384 = vmax.f32 %v1372, 0.0
      %v1385 = vmax.f32 %v1374, 0.0
      %1386 = vrot.lane.b32.xlu0 %v1378, 17
      %v1387 = vpop.permute.xlu0 %1386
      %1388 = vrot.lane.b32.xlu0 %v1379, 17
      %v1389 = vpop.permute.xlu0 %1388
      %1390 = vrot.lane.b32.xlu0 %v1380, 17
      %v1391 = vpop.permute.xlu0 %1390
      %1392 = vrot.lane.b32.xlu0 %v1381, 17
      %v1393 = vpop.permute.xlu0 %1392
      %1394 = vrot.lane.b32.xlu0 %v1382, 17
      %v1395 = vpop.permute.xlu0 %1394
      %1396 = vrot.lane.b32.xlu0 %v1383, 17
      %v1397 = vpop.permute.xlu0 %1396
      %1398 = vrot.lane.b32.xlu0 %v1384, 17
      %v1399 = vpop.permute.xlu0 %1398
      %1400 = vrot.lane.b32.xlu0 %v1385, 17
      %v1401 = vpop.permute.xlu0 %1400
      %v1402 = vsel %vm387, %v1399, %v1401
      %v1403 = vsel %vm387, %v1397, %v1399
      %v1404 = vsel %vm387, %v1395, %v1397
      %v1405 = vsel %vm387, %v1393, %v1395
      %v1406 = vsel %vm387, %v1391, %v1393
      %v1407 = vsel %vm387, %v1389, %v1391
      %v1408 = vsel %vm387, %v1387, %v1389
      %v1409 = vsel %vm387, %v1401, %v1387
      %v1410 = vld [vmem:[%s1] ss:$8 sm:$0xf]
      %v1411 = vld [vmem:[%s1] ss:$8 sm:$0xf0]
      %v1412 = vor.u32 %v1410, %v1411
      %v1414 = vlaneseq
      %v1415 = vshrl.u32 %v1414, 7
      %v1416 = vsub.s32 0, %v1415
      %v1417 = vrot.slane %v1412, %v1416
      %v1418 = vlaneseq
      %v1419 = vshrl.u32 %v1418, 7
      %v1420 = vsub.s32 1, %v1419
      %v1421 = vrot.slane %v1412, %v1420
      %v1422 = vlaneseq
      %v1423 = vshrl.u32 %v1422, 7
      %v1424 = vsub.s32 2, %v1423
      %v1425 = vrot.slane %v1412, %v1424
      %v1426 = vlaneseq
      %v1427 = vshrl.u32 %v1426, 7
      %v1428 = vsub.s32 3, %v1427
      %v1429 = vrot.slane %v1412, %v1428
      %v1430 = vlaneseq
      %v1431 = vshrl.u32 %v1430, 7
      %v1432 = vsub.s32 4, %v1431
      %v1433 = vrot.slane %v1412, %v1432
      %v1434 = vlaneseq
      %v1435 = vshrl.u32 %v1434, 7
      %v1436 = vsub.s32 5, %v1435
      %v1437 = vrot.slane %v1412, %v1436
      %v1438 = vlaneseq
      %v1439 = vshrl.u32 %v1438, 7
      %v1440 = vsub.s32 6, %v1439
      %v1441 = vrot.slane %v1412, %v1440
      %v1442 = vlaneseq
      %v1443 = vshrl.u32 %v1442, 7
      %v1444 = vsub.s32 7, %v1443
      %v1445 = vrot.slane %v1412, %v1444
      %v1454 = vmul.f32 %v1409, %v1417
      %v1455 = vmul.f32 %v1408, %v1421
      %v1456 = vmul.f32 %v1407, %v1425
      %v1457 = vmul.f32 %v1406, %v1429
      %v1458 = vmul.f32 %v1405, %v1433
      %v1459 = vmul.f32 %v1404, %v1437
      %v1460 = vmul.f32 %v1403, %v1441
      %v1461 = vmul.f32 %v1402, %v1445
      %1462 = vst [vmem:[#allocation2] sm:$0xff] %v1454
      %1463 = vst [vmem:[#allocation2 + $0x8] sm:$0xff] %v1455
      %1464 = vst [vmem:[#allocation2 + $0x10] sm:$0xff] %v1456
      %1465 = vst [vmem:[#allocation2 + $0x18] sm:$0xff] %v1457
      %1466 = vst [vmem:[#allocation2 + $0x20] sm:$0xff] %v1458
      %1467 = vst [vmem:[#allocation2 + $0x28] sm:$0xff] %v1459
      %1468 = vst [vmem:[#allocation2 + $0x30] sm:$0xff] %v1460
      %1469 = vst [vmem:[#allocation2 + $0x38] sm:$0xff] %v1461
      %1470 = vrot.lane.b32.xlu0 %v1378, 16
      %v1471 = vpop.permute.xlu0 %1470
      %1472 = vrot.lane.b32.xlu0 %v1379, 16
      %v1473 = vpop.permute.xlu0 %1472
      %1474 = vrot.lane.b32.xlu0 %v1380, 16
      %v1475 = vpop.permute.xlu0 %1474
      %1476 = vrot.lane.b32.xlu0 %v1381, 16
      %v1477 = vpop.permute.xlu0 %1476
      %1478 = vrot.lane.b32.xlu0 %v1382, 16
      %v1479 = vpop.permute.xlu0 %1478
      %1480 = vrot.lane.b32.xlu0 %v1383, 16
      %v1481 = vpop.permute.xlu0 %1480
      %1482 = vrot.lane.b32.xlu0 %v1384, 16
      %v1483 = vpop.permute.xlu0 %1482
      %1484 = vrot.lane.b32.xlu0 %v1385, 16
      %v1485 = vpop.permute.xlu0 %1484
      %v1486 = vsel %vm472, %v1483, %v1485
      %v1487 = vsel %vm472, %v1481, %v1483
      %v1488 = vsel %vm472, %v1479, %v1481
      %v1489 = vsel %vm472, %v1477, %v1479
      %v1490 = vsel %vm472, %v1475, %v1477
      %v1491 = vsel %vm472, %v1473, %v1475
      %v1492 = vsel %vm472, %v1471, %v1473
      %v1493 = vsel %vm472, %v1485, %v1471
      %v1494 = vld [vmem:[%s481] ss:$8 sm:$0xf]
      %v1495 = vld [vmem:[%s481] ss:$8 sm:$0xf0]
      %v1496 = vor.u32 %v1494, %v1495
      %v1498 = vlaneseq
      %v1499 = vshrl.u32 %v1498, 7
      %v1500 = vsub.s32 0, %v1499
      %v1501 = vrot.slane %v1496, %v1500
      %v1502 = vlaneseq
      %v1503 = vshrl.u32 %v1502, 7
      %v1504 = vsub.s32 1, %v1503
      %v1505 = vrot.slane %v1496, %v1504
      %v1506 = vlaneseq
      %v1507 = vshrl.u32 %v1506, 7
      %v1508 = vsub.s32 2, %v1507
      %v1509 = vrot.slane %v1496, %v1508
      %v1510 = vlaneseq
      %v1511 = vshrl.u32 %v1510, 7
      %v1512 = vsub.s32 3, %v1511
      %v1513 = vrot.slane %v1496, %v1512
      %v1514 = vlaneseq
      %v1515 = vshrl.u32 %v1514, 7
      %v1516 = vsub.s32 4, %v1515
      %v1517 = vrot.slane %v1496, %v1516
      %v1518 = vlaneseq
      %v1519 = vshrl.u32 %v1518, 7
      %v1520 = vsub.s32 5, %v1519
      %v1521 = vrot.slane %v1496, %v1520
      %v1522 = vlaneseq
      %v1523 = vshrl.u32 %v1522, 7
      %v1524 = vsub.s32 6, %v1523
      %v1525 = vrot.slane %v1496, %v1524
      %v1526 = vlaneseq
      %v1527 = vshrl.u32 %v1526, 7
      %v1528 = vsub.s32 7, %v1527
      %v1529 = vrot.slane %v1496, %v1528
      %v1538 = vmul.f32 %v1493, %v1501
      %v1539 = vmul.f32 %v1492, %v1505
      %v1540 = vmul.f32 %v1491, %v1509
      %v1541 = vmul.f32 %v1490, %v1513
      %v1542 = vmul.f32 %v1489, %v1517
      %v1543 = vmul.f32 %v1488, %v1521
      %v1544 = vmul.f32 %v1487, %v1525
      %v1545 = vmul.f32 %v1486, %v1529
      %1546 = vst [vmem:[#allocation2 + $0x40] sm:$0xff] %v1538
      %1547 = vst [vmem:[#allocation2 + $0x48] sm:$0xff] %v1539
      %1548 = vst [vmem:[#allocation2 + $0x50] sm:$0xff] %v1540
      %1549 = vst [vmem:[#allocation2 + $0x58] sm:$0xff] %v1541
      %1550 = vst [vmem:[#allocation2 + $0x60] sm:$0xff] %v1542
      %1551 = vst [vmem:[#allocation2 + $0x68] sm:$0xff] %v1543
      %1552 = vst [vmem:[#allocation2 + $0x70] sm:$0xff] %v1544
      %1553 = vst [vmem:[#allocation2 + $0x78] sm:$0xff] %v1545
      %1554 = vrot.lane.b32.xlu0 %v1378, 15
      %v1555 = vpop.permute.xlu0 %1554
      %1556 = vrot.lane.b32.xlu0 %v1379, 15
      %v1557 = vpop.permute.xlu0 %1556
      %1558 = vrot.lane.b32.xlu0 %v1380, 15
      %v1559 = vpop.permute.xlu0 %1558
      %1560 = vrot.lane.b32.xlu0 %v1381, 15
      %v1561 = vpop.permute.xlu0 %1560
      %1562 = vrot.lane.b32.xlu0 %v1382, 15
      %v1563 = vpop.permute.xlu0 %1562
      %1564 = vrot.lane.b32.xlu0 %v1383, 15
      %v1565 = vpop.permute.xlu0 %1564
      %1566 = vrot.lane.b32.xlu0 %v1384, 15
      %v1567 = vpop.permute.xlu0 %1566
      %1568 = vrot.lane.b32.xlu0 %v1385, 15
      %v1569 = vpop.permute.xlu0 %1568
      %v1570 = vsel %vm558, %v1567, %v1569
      %v1571 = vsel %vm558, %v1565, %v1567
      %v1572 = vsel %vm558, %v1563, %v1565
      %v1573 = vsel %vm558, %v1561, %v1563
      %v1574 = vsel %vm558, %v1559, %v1561
      %v1575 = vsel %vm558, %v1557, %v1559
      %v1576 = vsel %vm558, %v1555, %v1557
      %v1577 = vsel %vm558, %v1569, %v1555
      %v1578 = vld [vmem:[%s567] ss:$8 sm:$0xf]
      %v1579 = vld [vmem:[%s567] ss:$8 sm:$0xf0]
      %v1580 = vor.u32 %v1578, %v1579
      %v1582 = vlaneseq
      %v1583 = vshrl.u32 %v1582, 7
      %v1584 = vsub.s32 0, %v1583
      %v1585 = vrot.slane %v1580, %v1584
      %v1586 = vlaneseq
      %v1587 = vshrl.u32 %v1586, 7
      %v1588 = vsub.s32 1, %v1587
      %v1589 = vrot.slane %v1580, %v1588
      %v1590 = vlaneseq
      %v1591 = vshrl.u32 %v1590, 7
      %v1592 = vsub.s32 2, %v1591
      %v1593 = vrot.slane %v1580, %v1592
      %v1594 = vlaneseq
      %v1595 = vshrl.u32 %v1594, 7
      %v1596 = vsub.s32 3, %v1595
      %v1597 = vrot.slane %v1580, %v1596
      %v1598 = vlaneseq
      %v1599 = vshrl.u32 %v1598, 7
      %v1600 = vsub.s32 4, %v1599
      %v1601 = vrot.slane %v1580, %v1600
      %v1602 = vlaneseq
      %v1603 = vshrl.u32 %v1602, 7
      %v1604 = vsub.s32 5, %v1603
      %v1605 = vrot.slane %v1580, %v1604
      %v1606 = vlaneseq
      %v1607 = vshrl.u32 %v1606, 7
      %v1608 = vsub.s32 6, %v1607
      %v1609 = vrot.slane %v1580, %v1608
      %v1610 = vlaneseq
      %v1611 = vshrl.u32 %v1610, 7
      %v1612 = vsub.s32 7, %v1611
      %v1613 = vrot.slane %v1580, %v1612
      %v1622 = vmul.f32 %v1577, %v1585
      %v1623 = vmul.f32 %v1576, %v1589
      %v1624 = vmul.f32 %v1575, %v1593
      %v1625 = vmul.f32 %v1574, %v1597
      %v1626 = vmul.f32 %v1573, %v1601
      %v1627 = vmul.f32 %v1572, %v1605
      %v1628 = vmul.f32 %v1571, %v1609
      %v1629 = vmul.f32 %v1570, %v1613
      %1630 = vst [vmem:[#allocation2 + $0x80] sm:$0xff] %v1622
      %1631 = vst [vmem:[#allocation2 + $0x88] sm:$0xff] %v1623
      %1632 = vst [vmem:[#allocation2 + $0x90] sm:$0xff] %v1624
      %1633 = vst [vmem:[#allocation2 + $0x98] sm:$0xff] %v1625
      %1634 = vst [vmem:[#allocation2 + $0xa0] sm:$0xff] %v1626
      %1635 = vst [vmem:[#allocation2 + $0xa8] sm:$0xff] %v1627
      %1636 = vst [vmem:[#allocation2 + $0xb0] sm:$0xff] %v1628
      %1637 = vst [vmem:[#allocation2 + $0xb8] sm:$0xff] %v1629
      %1638 = vrot.lane.b32.xlu0 %v1378, 1
      %v1639 = vpop.permute.xlu0 %1638
      %1640 = vrot.lane.b32.xlu0 %v1379, 1
      %v1641 = vpop.permute.xlu0 %1640
      %1642 = vrot.lane.b32.xlu0 %v1380, 1
      %v1643 = vpop.permute.xlu0 %1642
      %1644 = vrot.lane.b32.xlu0 %v1381, 1
      %v1645 = vpop.permute.xlu0 %1644
      %1646 = vrot.lane.b32.xlu0 %v1382, 1
      %v1647 = vpop.permute.xlu0 %1646
      %1648 = vrot.lane.b32.xlu0 %v1383, 1
      %v1649 = vpop.permute.xlu0 %1648
      %1650 = vrot.lane.b32.xlu0 %v1384, 1
      %v1651 = vpop.permute.xlu0 %1650
      %1652 = vrot.lane.b32.xlu0 %v1385, 1
      %v1653 = vpop.permute.xlu0 %1652
      %v1654 = vsel %vm644, %v1651, %v1653
      %v1655 = vsel %vm644, %v1649, %v1651
      %v1656 = vsel %vm644, %v1647, %v1649
      %v1657 = vsel %vm644, %v1645, %v1647
      %v1658 = vsel %vm644, %v1643, %v1645
      %v1659 = vsel %vm644, %v1641, %v1643
      %v1660 = vsel %vm644, %v1639, %v1641
      %v1661 = vsel %vm644, %v1653, %v1639
      %v1662 = vld [vmem:[%s653] ss:$8 sm:$0xf]
      %v1663 = vld [vmem:[%s653] ss:$8 sm:$0xf0]
      %v1664 = vor.u32 %v1662, %v1663
      %v1666 = vlaneseq
      %v1667 = vshrl.u32 %v1666, 7
      %v1668 = vsub.s32 0, %v1667
      %v1669 = vrot.slane %v1664, %v1668
      %v1670 = vlaneseq
      %v1671 = vshrl.u32 %v1670, 7
      %v1672 = vsub.s32 1, %v1671
      %v1673 = vrot.slane %v1664, %v1672
      %v1674 = vlaneseq
      %v1675 = vshrl.u32 %v1674, 7
      %v1676 = vsub.s32 2, %v1675
      %v1677 = vrot.slane %v1664, %v1676
      %v1678 = vlaneseq
      %v1679 = vshrl.u32 %v1678, 7
      %v1680 = vsub.s32 3, %v1679
      %v1681 = vrot.slane %v1664, %v1680
      %v1682 = vlaneseq
      %v1683 = vshrl.u32 %v1682, 7
      %v1684 = vsub.s32 4, %v1683
      %v1685 = vrot.slane %v1664, %v1684
      %v1686 = vlaneseq
      %v1687 = vshrl.u32 %v1686, 7
      %v1688 = vsub.s32 5, %v1687
      %v1689 = vrot.slane %v1664, %v1688
      %v1690 = vlaneseq
      %v1691 = vshrl.u32 %v1690, 7
      %v1692 = vsub.s32 6, %v1691
      %v1693 = vrot.slane %v1664, %v1692
      %v1694 = vlaneseq
      %v1695 = vshrl.u32 %v1694, 7
      %v1696 = vsub.s32 7, %v1695
      %v1697 = vrot.slane %v1664, %v1696
      %v1706 = vmul.f32 %v1661, %v1669
      %v1707 = vmul.f32 %v1660, %v1673
      %v1708 = vmul.f32 %v1659, %v1677
      %v1709 = vmul.f32 %v1658, %v1681
      %v1710 = vmul.f32 %v1657, %v1685
      %v1711 = vmul.f32 %v1656, %v1689
      %v1712 = vmul.f32 %v1655, %v1693
      %v1713 = vmul.f32 %v1654, %v1697
      %1714 = vst [vmem:[#allocation2 + $0xc0] sm:$0xff] %v1706
      %1715 = vst [vmem:[#allocation2 + $0xc8] sm:$0xff] %v1707
      %1716 = vst [vmem:[#allocation2 + $0xd0] sm:$0xff] %v1708
      %1717 = vst [vmem:[#allocation2 + $0xd8] sm:$0xff] %v1709
      %1718 = vst [vmem:[#allocation2 + $0xe0] sm:$0xff] %v1710
      %1719 = vst [vmem:[#allocation2 + $0xe8] sm:$0xff] %v1711
      %1720 = vst [vmem:[#allocation2 + $0xf0] sm:$0xff] %v1712
      %1721 = vst [vmem:[#allocation2 + $0xf8] sm:$0xff] %v1713
      %1722 = vst [vmem:[#allocation2 + $0x100] sm:$0xff] %v1378
      %1723 = vst [vmem:[#allocation2 + $0x108] sm:$0xff] %v1379
      %1724 = vst [vmem:[#allocation2 + $0x110] sm:$0xff] %v1380
      %1725 = vst [vmem:[#allocation2 + $0x118] sm:$0xff] %v1381
      %1726 = vst [vmem:[#allocation2 + $0x120] sm:$0xff] %v1382
      %1727 = vst [vmem:[#allocation2 + $0x128] sm:$0xff] %v1383
      %1728 = vst [vmem:[#allocation2 + $0x130] sm:$0xff] %v1384
      %1729 = vst [vmem:[#allocation2 + $0x138] sm:$0xff] %v1385
      %1730 = vrot.lane.b32.xlu0 %v1378, 127
      %v1731 = vpop.permute.xlu0 %1730
      %1732 = vrot.lane.b32.xlu0 %v1379, 127
      %v1733 = vpop.permute.xlu0 %1732
      %1734 = vrot.lane.b32.xlu0 %v1380, 127
      %v1735 = vpop.permute.xlu0 %1734
      %1736 = vrot.lane.b32.xlu0 %v1381, 127
      %v1737 = vpop.permute.xlu0 %1736
      %1738 = vrot.lane.b32.xlu0 %v1382, 127
      %v1739 = vpop.permute.xlu0 %1738
      %1740 = vrot.lane.b32.xlu0 %v1383, 127
      %v1741 = vpop.permute.xlu0 %1740
      %1742 = vrot.lane.b32.xlu0 %v1384, 127
      %v1743 = vpop.permute.xlu0 %1742
      %1744 = vrot.lane.b32.xlu0 %v1385, 127
      %v1745 = vpop.permute.xlu0 %1744
      %v1746 = vsel %vm738, %v1743, %v1745
      %v1747 = vsel %vm738, %v1741, %v1743
      %v1748 = vsel %vm738, %v1739, %v1741
      %v1749 = vsel %vm738, %v1737, %v1739
      %v1750 = vsel %vm738, %v1735, %v1737
      %v1751 = vsel %vm738, %v1733, %v1735
      %v1752 = vsel %vm738, %v1731, %v1733
      %v1753 = vsel %vm738, %v1745, %v1731
      %v1754 = vld [vmem:[%s747] ss:$8 sm:$0xf]
      %v1755 = vld [vmem:[%s747] ss:$8 sm:$0xf0]
      %v1756 = vor.u32 %v1754, %v1755
      %v1758 = vlaneseq
      %v1759 = vshrl.u32 %v1758, 7
      %v1760 = vsub.s32 0, %v1759
      %v1761 = vrot.slane %v1756, %v1760
      %v1762 = vlaneseq
      %v1763 = vshrl.u32 %v1762, 7
      %v1764 = vsub.s32 1, %v1763
      %v1765 = vrot.slane %v1756, %v1764
      %v1766 = vlaneseq
      %v1767 = vshrl.u32 %v1766, 7
      %v1768 = vsub.s32 2, %v1767
      %v1769 = vrot.slane %v1756, %v1768
      %v1770 = vlaneseq
      %v1771 = vshrl.u32 %v1770, 7
      %v1772 = vsub.s32 3, %v1771
      %v1773 = vrot.slane %v1756, %v1772
      %v1774 = vlaneseq
      %v1775 = vshrl.u32 %v1774, 7
      %v1776 = vsub.s32 4, %v1775
      %v1777 = vrot.slane %v1756, %v1776
      %v1778 = vlaneseq
      %v1779 = vshrl.u32 %v1778, 7
      %v1780 = vsub.s32 5, %v1779
      %v1781 = vrot.slane %v1756, %v1780
      %v1782 = vlaneseq
      %v1783 = vshrl.u32 %v1782, 7
      %v1784 = vsub.s32 6, %v1783
      %v1785 = vrot.slane %v1756, %v1784
      %v1786 = vlaneseq
      %v1787 = vshrl.u32 %v1786, 7
      %v1788 = vsub.s32 7, %v1787
      %v1789 = vrot.slane %v1756, %v1788
      %v1798 = vmul.f32 %v1752, %v1761
      %v1799 = vmul.f32 %v1751, %v1765
      %v1800 = vmul.f32 %v1750, %v1769
      %v1801 = vmul.f32 %v1749, %v1773
      %v1802 = vmul.f32 %v1748, %v1777
      %v1803 = vmul.f32 %v1747, %v1781
      %v1804 = vmul.f32 %v1746, %v1785
      %v1805 = vmul.f32 %v1753, %v1789
      %1806 = vst [vmem:[#allocation2 + $0x140] sm:$0xff] %v1798
      %1807 = vst [vmem:[#allocation2 + $0x148] sm:$0xff] %v1799
      %1808 = vst [vmem:[#allocation2 + $0x150] sm:$0xff] %v1800
      %1809 = vst [vmem:[#allocation2 + $0x158] sm:$0xff] %v1801
      %1810 = vst [vmem:[#allocation2 + $0x160] sm:$0xff] %v1802
      %1811 = vst [vmem:[#allocation2 + $0x168] sm:$0xff] %v1803
      %1812 = vst [vmem:[#allocation2 + $0x170] sm:$0xff] %v1804
      %1813 = vst [vmem:[#allocation2 + $0x178] sm:$0xff] %v1805
      %1814 = vrot.lane.b32.xlu0 %v1378, 113
      %v1815 = vpop.permute.xlu0 %1814
      %1816 = vrot.lane.b32.xlu0 %v1379, 113
      %v1817 = vpop.permute.xlu0 %1816
      %1818 = vrot.lane.b32.xlu0 %v1380, 113
      %v1819 = vpop.permute.xlu0 %1818
      %1820 = vrot.lane.b32.xlu0 %v1381, 113
      %v1821 = vpop.permute.xlu0 %1820
      %1822 = vrot.lane.b32.xlu0 %v1382, 113
      %v1823 = vpop.permute.xlu0 %1822
      %1824 = vrot.lane.b32.xlu0 %v1383, 113
      %v1825 = vpop.permute.xlu0 %1824
      %1826 = vrot.lane.b32.xlu0 %v1384, 113
      %v1827 = vpop.permute.xlu0 %1826
      %1828 = vrot.lane.b32.xlu0 %v1385, 113
      %v1829 = vpop.permute.xlu0 %1828
      %v1830 = vsel %vm824, %v1827, %v1829
      %v1831 = vsel %vm824, %v1825, %v1827
      %v1832 = vsel %vm824, %v1823, %v1825
      %v1833 = vsel %vm824, %v1821, %v1823
      %v1834 = vsel %vm824, %v1819, %v1821
      %v1835 = vsel %vm824, %v1817, %v1819
      %v1836 = vsel %vm824, %v1815, %v1817
      %v1837 = vsel %vm824, %v1829, %v1815
      %v1838 = vld [vmem:[%s833] ss:$8 sm:$0xf]
      %v1839 = vld [vmem:[%s833] ss:$8 sm:$0xf0]
      %v1840 = vor.u32 %v1838, %v1839
      %v1842 = vlaneseq
      %v1843 = vshrl.u32 %v1842, 7
      %v1844 = vsub.s32 0, %v1843
      %v1845 = vrot.slane %v1840, %v1844
      %v1846 = vlaneseq
      %v1847 = vshrl.u32 %v1846, 7
      %v1848 = vsub.s32 1, %v1847
      %v1849 = vrot.slane %v1840, %v1848
      %v1850 = vlaneseq
      %v1851 = vshrl.u32 %v1850, 7
      %v1852 = vsub.s32 2, %v1851
      %v1853 = vrot.slane %v1840, %v1852
      %v1854 = vlaneseq
      %v1855 = vshrl.u32 %v1854, 7
      %v1856 = vsub.s32 3, %v1855
      %v1857 = vrot.slane %v1840, %v1856
      %v1858 = vlaneseq
      %v1859 = vshrl.u32 %v1858, 7
      %v1860 = vsub.s32 4, %v1859
      %v1861 = vrot.slane %v1840, %v1860
      %v1862 = vlaneseq
      %v1863 = vshrl.u32 %v1862, 7
      %v1864 = vsub.s32 5, %v1863
      %v1865 = vrot.slane %v1840, %v1864
      %v1866 = vlaneseq
      %v1867 = vshrl.u32 %v1866, 7
      %v1868 = vsub.s32 6, %v1867
      %v1869 = vrot.slane %v1840, %v1868
      %v1870 = vlaneseq
      %v1871 = vshrl.u32 %v1870, 7
      %v1872 = vsub.s32 7, %v1871
      %v1873 = vrot.slane %v1840, %v1872
      %v1882 = vmul.f32 %v1836, %v1845
      %v1883 = vmul.f32 %v1835, %v1849
      %v1884 = vmul.f32 %v1834, %v1853
      %v1885 = vmul.f32 %v1833, %v1857
      %v1886 = vmul.f32 %v1832, %v1861
      %v1887 = vmul.f32 %v1831, %v1865
      %v1888 = vmul.f32 %v1830, %v1869
      %v1889 = vmul.f32 %v1837, %v1873
      %1890 = vst [vmem:[#allocation2 + $0x180] sm:$0xff] %v1882
      %1891 = vst [vmem:[#allocation2 + $0x188] sm:$0xff] %v1883
      %1892 = vst [vmem:[#allocation2 + $0x190] sm:$0xff] %v1884
      %1893 = vst [vmem:[#allocation2 + $0x198] sm:$0xff] %v1885
      %1894 = vst [vmem:[#allocation2 + $0x1a0] sm:$0xff] %v1886
      %1895 = vst [vmem:[#allocation2 + $0x1a8] sm:$0xff] %v1887
      %1896 = vst [vmem:[#allocation2 + $0x1b0] sm:$0xff] %v1888
      %1897 = vst [vmem:[#allocation2 + $0x1b8] sm:$0xff] %v1889
      %1898 = vrot.lane.b32.xlu0 %v1378, 112
      %v1899 = vpop.permute.xlu0 %1898
      %1900 = vrot.lane.b32.xlu0 %v1379, 112
      %v1901 = vpop.permute.xlu0 %1900
      %1902 = vrot.lane.b32.xlu0 %v1380, 112
      %v1903 = vpop.permute.xlu0 %1902
      %1904 = vrot.lane.b32.xlu0 %v1381, 112
      %v1905 = vpop.permute.xlu0 %1904
      %1906 = vrot.lane.b32.xlu0 %v1382, 112
      %v1907 = vpop.permute.xlu0 %1906
      %1908 = vrot.lane.b32.xlu0 %v1383, 112
      %v1909 = vpop.permute.xlu0 %1908
      %1910 = vrot.lane.b32.xlu0 %v1384, 112
      %v1911 = vpop.permute.xlu0 %1910
      %1912 = vrot.lane.b32.xlu0 %v1385, 112
      %v1913 = vpop.permute.xlu0 %1912
      %v1914 = vsel %vm910, %v1911, %v1913
      %v1915 = vsel %vm910, %v1909, %v1911
      %v1916 = vsel %vm910, %v1907, %v1909
      %v1917 = vsel %vm910, %v1905, %v1907
      %v1918 = vsel %vm910, %v1903, %v1905
      %v1919 = vsel %vm910, %v1901, %v1903
      %v1920 = vsel %vm910, %v1899, %v1901
      %v1921 = vsel %vm910, %v1913, %v1899
      %v1922 = vld [vmem:[%s919] ss:$8 sm:$0xf]
      %v1923 = vld [vmem:[%s919] ss:$8 sm:$0xf0]
      %v1924 = vor.u32 %v1922, %v1923
      %v1926 = vlaneseq
      %v1927 = vshrl.u32 %v1926, 7
      %v1928 = vsub.s32 0, %v1927
      %v1929 = vrot.slane %v1924, %v1928
      %v1930 = vlaneseq
      %v1931 = vshrl.u32 %v1930, 7
      %v1932 = vsub.s32 1, %v1931
      %v1933 = vrot.slane %v1924, %v1932
      %v1934 = vlaneseq
      %v1935 = vshrl.u32 %v1934, 7
      %v1936 = vsub.s32 2, %v1935
      %v1937 = vrot.slane %v1924, %v1936
      %v1938 = vlaneseq
      %v1939 = vshrl.u32 %v1938, 7
      %v1940 = vsub.s32 3, %v1939
      %v1941 = vrot.slane %v1924, %v1940
      %v1942 = vlaneseq
      %v1943 = vshrl.u32 %v1942, 7
      %v1944 = vsub.s32 4, %v1943
      %v1945 = vrot.slane %v1924, %v1944
      %v1946 = vlaneseq
      %v1947 = vshrl.u32 %v1946, 7
      %v1948 = vsub.s32 5, %v1947
      %v1949 = vrot.slane %v1924, %v1948
      %v1950 = vlaneseq
      %v1951 = vshrl.u32 %v1950, 7
      %v1952 = vsub.s32 6, %v1951
      %v1953 = vrot.slane %v1924, %v1952
      %v1954 = vlaneseq
      %v1955 = vshrl.u32 %v1954, 7
      %v1956 = vsub.s32 7, %v1955
      %v1957 = vrot.slane %v1924, %v1956
      %v1966 = vmul.f32 %v1920, %v1929
      %v1967 = vmul.f32 %v1919, %v1933
      %v1968 = vmul.f32 %v1918, %v1937
      %v1969 = vmul.f32 %v1917, %v1941
      %v1970 = vmul.f32 %v1916, %v1945
      %v1971 = vmul.f32 %v1915, %v1949
      %v1972 = vmul.f32 %v1914, %v1953
      %v1973 = vmul.f32 %v1921, %v1957
      %1974 = vst [vmem:[#allocation2 + $0x1c0] sm:$0xff] %v1966
      %1975 = vst [vmem:[#allocation2 + $0x1c8] sm:$0xff] %v1967
      %1976 = vst [vmem:[#allocation2 + $0x1d0] sm:$0xff] %v1968
      %1977 = vst [vmem:[#allocation2 + $0x1d8] sm:$0xff] %v1969
      %1978 = vst [vmem:[#allocation2 + $0x1e0] sm:$0xff] %v1970
      %1979 = vst [vmem:[#allocation2 + $0x1e8] sm:$0xff] %v1971
      %1980 = vst [vmem:[#allocation2 + $0x1f0] sm:$0xff] %v1972
      %1981 = vst [vmem:[#allocation2 + $0x1f8] sm:$0xff] %v1973
      %1982 = vrot.lane.b32.xlu0 %v1378, 111
      %v1983 = vpop.permute.xlu0 %1982
      %1984 = vrot.lane.b32.xlu0 %v1379, 111
      %v1985 = vpop.permute.xlu0 %1984
      %1986 = vrot.lane.b32.xlu0 %v1380, 111
      %v1987 = vpop.permute.xlu0 %1986
      %1988 = vrot.lane.b32.xlu0 %v1381, 111
      %v1989 = vpop.permute.xlu0 %1988
      %1990 = vrot.lane.b32.xlu0 %v1382, 111
      %v1991 = vpop.permute.xlu0 %1990
      %1992 = vrot.lane.b32.xlu0 %v1383, 111
      %v1993 = vpop.permute.xlu0 %1992
      %1994 = vrot.lane.b32.xlu0 %v1384, 111
      %v1995 = vpop.permute.xlu0 %1994
      %1996 = vrot.lane.b32.xlu0 %v1385, 111
      %v1997 = vpop.permute.xlu0 %1996
      %v1998 = vsel %vm996, %v1995, %v1997
      %v1999 = vsel %vm996, %v1993, %v1995
      %v2000 = vsel %vm996, %v1991, %v1993
      %v2001 = vsel %vm996, %v1989, %v1991
      %v2002 = vsel %vm996, %v1987, %v1989
      %v2003 = vsel %vm996, %v1985, %v1987
      %v2004 = vsel %vm996, %v1983, %v1985
      %v2005 = vsel %vm996, %v1997, %v1983
      %v2006 = vld [vmem:[%s1005] ss:$8 sm:$0xf]
      %v2007 = vld [vmem:[%s1005] ss:$8 sm:$0xf0]
      %v2008 = vor.u32 %v2006, %v2007
      %v2010 = vlaneseq
      %v2011 = vshrl.u32 %v2010, 7
      %v2012 = vsub.s32 0, %v2011
      %v2013 = vrot.slane %v2008, %v2012
      %v2014 = vlaneseq
      %v2015 = vshrl.u32 %v2014, 7
      %v2016 = vsub.s32 1, %v2015
      %v2017 = vrot.slane %v2008, %v2016
      %v2018 = vlaneseq
      %v2019 = vshrl.u32 %v2018, 7
      %v2020 = vsub.s32 2, %v2019
      %v2021 = vrot.slane %v2008, %v2020
      %v2022 = vlaneseq
      %v2023 = vshrl.u32 %v2022, 7
      %v2024 = vsub.s32 3, %v2023
      %v2025 = vrot.slane %v2008, %v2024
      %v2026 = vlaneseq
      %v2027 = vshrl.u32 %v2026, 7
      %v2028 = vsub.s32 4, %v2027
      %v2029 = vrot.slane %v2008, %v2028
      %v2030 = vlaneseq
      %v2031 = vshrl.u32 %v2030, 7
      %v2032 = vsub.s32 5, %v2031
      %v2033 = vrot.slane %v2008, %v2032
      %v2034 = vlaneseq
      %v2035 = vshrl.u32 %v2034, 7
      %v2036 = vsub.s32 6, %v2035
      %v2037 = vrot.slane %v2008, %v2036
      %v2038 = vlaneseq
      %v2039 = vshrl.u32 %v2038, 7
      %v2040 = vsub.s32 7, %v2039
      %v2041 = vrot.slane %v2008, %v2040
      %v2050 = vmul.f32 %v2004, %v2013
      %v2051 = vmul.f32 %v2003, %v2017
      %v2052 = vmul.f32 %v2002, %v2021
      %v2053 = vmul.f32 %v2001, %v2025
      %v2054 = vmul.f32 %v2000, %v2029
      %v2055 = vmul.f32 %v1999, %v2033
      %v2056 = vmul.f32 %v1998, %v2037
      %v2057 = vmul.f32 %v2005, %v2041
      %2058 = vst [vmem:[#allocation2 + $0x200] sm:$0xff] %v2050
      %2059 = vst [vmem:[#allocation2 + $0x208] sm:$0xff] %v2051
      %2060 = vst [vmem:[#allocation2 + $0x210] sm:$0xff] %v2052
      %2061 = vst [vmem:[#allocation2 + $0x218] sm:$0xff] %v2053
      %2062 = vst [vmem:[#allocation2 + $0x220] sm:$0xff] %v2054
      %2063 = vst [vmem:[#allocation2 + $0x228] sm:$0xff] %v2055
      %2064 = vst [vmem:[#allocation2 + $0x230] sm:$0xff] %v2056
      %2065 = vst [vmem:[#allocation2 + $0x238] sm:$0xff] %v2057
      %v2066 = vld [vmem:[%s4] sm:$0xf]
      %v2067 = vld [vmem:[#allocation2] sm:$0xff]
      %v2068 = vld [vmem:[#allocation2 + $0x8] sm:$0xff]
      %v2069 = vld [vmem:[#allocation2 + $0x10] sm:$0xff]
      %v2070 = vld [vmem:[#allocation2 + $0x18] sm:$0xff]
      %v2071 = vld [vmem:[#allocation2 + $0x20] sm:$0xff]
      %v2072 = vld [vmem:[#allocation2 + $0x28] sm:$0xff]
      %v2073 = vld [vmem:[#allocation2 + $0x30] sm:$0xff]
      %v2074 = vld [vmem:[#allocation2 + $0x38] sm:$0xff]
      %v2075 = vld [vmem:[#allocation2 + $0x40] sm:$0xff]
      %v2076 = vld [vmem:[#allocation2 + $0x48] sm:$0xff]
      %v2077 = vld [vmem:[#allocation2 + $0x50] sm:$0xff]
      %v2078 = vld [vmem:[#allocation2 + $0x58] sm:$0xff]
      %v2079 = vld [vmem:[#allocation2 + $0x60] sm:$0xff]
      %v2080 = vld [vmem:[#allocation2 + $0x68] sm:$0xff]
      %v2081 = vld [vmem:[#allocation2 + $0x70] sm:$0xff]
      %v2082 = vld [vmem:[#allocation2 + $0x78] sm:$0xff]
      %v2083 = vld [vmem:[#allocation2 + $0x80] sm:$0xff]
      %v2084 = vld [vmem:[#allocation2 + $0x88] sm:$0xff]
      %v2085 = vld [vmem:[#allocation2 + $0x90] sm:$0xff]
      %v2086 = vld [vmem:[#allocation2 + $0x98] sm:$0xff]
      %v2087 = vld [vmem:[#allocation2 + $0xa0] sm:$0xff]
      %v2088 = vld [vmem:[#allocation2 + $0xa8] sm:$0xff]
      %v2089 = vld [vmem:[#allocation2 + $0xb0] sm:$0xff]
      %v2090 = vld [vmem:[#allocation2 + $0xb8] sm:$0xff]
      %v2091 = vld [vmem:[#allocation2 + $0xc0] sm:$0xff]
      %v2092 = vld [vmem:[#allocation2 + $0xc8] sm:$0xff]
      %v2093 = vld [vmem:[#allocation2 + $0xd0] sm:$0xff]
      %v2094 = vld [vmem:[#allocation2 + $0xd8] sm:$0xff]
      %v2095 = vld [vmem:[#allocation2 + $0xe0] sm:$0xff]
      %v2096 = vld [vmem:[#allocation2 + $0xe8] sm:$0xff]
      %v2097 = vld [vmem:[#allocation2 + $0xf0] sm:$0xff]
      %v2098 = vld [vmem:[#allocation2 + $0xf8] sm:$0xff]
      %v2099 = vld [vmem:[#allocation2 + $0x100] sm:$0xff]
      %v2100 = vld [vmem:[#allocation2 + $0x108] sm:$0xff]
      %v2101 = vld [vmem:[#allocation2 + $0x110] sm:$0xff]
      %v2102 = vld [vmem:[#allocation2 + $0x118] sm:$0xff]
      %v2103 = vld [vmem:[#allocation2 + $0x120] sm:$0xff]
      %v2104 = vld [vmem:[#allocation2 + $0x128] sm:$0xff]
      %v2105 = vld [vmem:[#allocation2 + $0x130] sm:$0xff]
      %v2106 = vld [vmem:[#allocation2 + $0x138] sm:$0xff]
      %v2107 = vld [vmem:[#allocation2 + $0x140] sm:$0xff]
      %v2108 = vld [vmem:[#allocation2 + $0x148] sm:$0xff]
      %v2109 = vld [vmem:[#allocation2 + $0x150] sm:$0xff]
      %v2110 = vld [vmem:[#allocation2 + $0x158] sm:$0xff]
      %v2111 = vld [vmem:[#allocation2 + $0x160] sm:$0xff]
      %v2112 = vld [vmem:[#allocation2 + $0x168] sm:$0xff]
      %v2113 = vld [vmem:[#allocation2 + $0x170] sm:$0xff]
      %v2114 = vld [vmem:[#allocation2 + $0x178] sm:$0xff]
      %v2115 = vld [vmem:[#allocation2 + $0x180] sm:$0xff]
      %v2116 = vld [vmem:[#allocation2 + $0x188] sm:$0xff]
      %v2117 = vld [vmem:[#allocation2 + $0x190] sm:$0xff]
      %v2118 = vld [vmem:[#allocation2 + $0x198] sm:$0xff]
      %v2119 = vld [vmem:[#allocation2 + $0x1a0] sm:$0xff]
      %v2120 = vld [vmem:[#allocation2 + $0x1a8] sm:$0xff]
      %v2121 = vld [vmem:[#allocation2 + $0x1b0] sm:$0xff]
      %v2122 = vld [vmem:[#allocation2 + $0x1b8] sm:$0xff]
      %v2123 = vld [vmem:[#allocation2 + $0x1c0] sm:$0xff]
      %v2124 = vld [vmem:[#allocation2 + $0x1c8] sm:$0xff]
      %v2125 = vld [vmem:[#allocation2 + $0x1d0] sm:$0xff]
      %v2126 = vld [vmem:[#allocation2 + $0x1d8] sm:$0xff]
      %v2127 = vld [vmem:[#allocation2 + $0x1e0] sm:$0xff]
      %v2128 = vld [vmem:[#allocation2 + $0x1e8] sm:$0xff]
      %v2129 = vld [vmem:[#allocation2 + $0x1f0] sm:$0xff]
      %v2130 = vld [vmem:[#allocation2 + $0x1f8] sm:$0xff]
      %v2131 = vld [vmem:[#allocation2 + $0x200] sm:$0xff]
      %v2132 = vld [vmem:[#allocation2 + $0x208] sm:$0xff]
      %v2133 = vld [vmem:[#allocation2 + $0x210] sm:$0xff]
      %v2134 = vld [vmem:[#allocation2 + $0x218] sm:$0xff]
      %v2135 = vld [vmem:[#allocation2 + $0x220] sm:$0xff]
      %v2136 = vld [vmem:[#allocation2 + $0x228] sm:$0xff]
      %v2137 = vld [vmem:[#allocation2 + $0x230] sm:$0xff]
      %v2138 = vld [vmem:[#allocation2 + $0x238] sm:$0xff]
      %v2139 = vpack.c.bf16 %v2075, %v2067
      %v2140 = vpack.c.bf16 %v2076, %v2068
      %v2141 = vpack.c.bf16 %v2077, %v2069
      %v2142 = vpack.c.bf16 %v2078, %v2070
      %v2143 = vpack.c.bf16 %v2079, %v2071
      %v2144 = vpack.c.bf16 %v2080, %v2072
      %v2145 = vpack.c.bf16 %v2081, %v2073
      %v2146 = vpack.c.bf16 %v2082, %v2074
      %v2147 = vpack.c.bf16 %v2091, %v2083
      %v2148 = vpack.c.bf16 %v2092, %v2084
      %v2149 = vpack.c.bf16 %v2093, %v2085
      %v2150 = vpack.c.bf16 %v2094, %v2086
      %v2151 = vpack.c.bf16 %v2095, %v2087
      %v2152 = vpack.c.bf16 %v2096, %v2088
      %v2153 = vpack.c.bf16 %v2097, %v2089
      %v2154 = vpack.c.bf16 %v2098, %v2090
      %v2155 = vpack.c.bf16 %v2107, %v2099
      %v2156 = vpack.c.bf16 %v2108, %v2100
      %v2157 = vpack.c.bf16 %v2109, %v2101
      %v2158 = vpack.c.bf16 %v2110, %v2102
      %v2159 = vpack.c.bf16 %v2111, %v2103
      %v2160 = vpack.c.bf16 %v2112, %v2104
      %v2161 = vpack.c.bf16 %v2113, %v2105
      %v2162 = vpack.c.bf16 %v2114, %v2106
      %v2163 = vpack.c.bf16 %v2123, %v2115
      %v2164 = vpack.c.bf16 %v2124, %v2116
      %v2165 = vpack.c.bf16 %v2125, %v2117
      %v2166 = vpack.c.bf16 %v2126, %v2118
      %v2167 = vpack.c.bf16 %v2127, %v2119
      %v2168 = vpack.c.bf16 %v2128, %v2120
      %v2169 = vpack.c.bf16 %v2129, %v2121
      %v2170 = vpack.c.bf16 %v2130, %v2122
      %v2171 = vpack.c.bf16 %v2131, %v2131
      %v2172 = vpack.c.bf16 %v2132, %v2132
      %v2173 = vpack.c.bf16 %v2133, %v2133
      %v2174 = vpack.c.bf16 %v2134, %v2134
      %v2175 = vpack.c.bf16 %v2135, %v2135
      %v2176 = vpack.c.bf16 %v2136, %v2136
      %v2177 = vpack.c.bf16 %v2137, %v2137
      %v2178 = vpack.c.bf16 %v2138, %v2138
      %v2179 = vld [vmem:[%s5] sm:$0xff]
      %2181 = vset.pattern.permute.xlu0 0
      %2182 = vperm.xlu0 %2181, %v2179
      %v2183 = vpop.permute.xlu0 %2182
      %v2186 = vsel %vm1185, %v2066, 0
      %v2189 = vsel %vm1189, %v2171, 0
      %v2192 = vsel %vm1189, %v2172, 0
      %v2195 = vsel %vm1189, %v2173, 0
      %v2198 = vsel %vm1189, %v2174, 0
      %v2201 = vsel %vm1189, %v2175, 0
      %v2204 = vsel %vm1189, %v2176, 0
      %v2207 = vsel %vm1189, %v2177, 0
      %v2210 = vsel %vm1189, %v2178, 0
      %2212 = vmatprep.subr.bf16.mxu0 %v2140
      %2213 = vmatpush1.bf16.msra.mxu0 %v2139
      %2214 = vmatprep.subr.bf16.mxu0 %v2148
      %2215 = vmatpush1.bf16.msra.mxu0 %v2147
      %2216 = vmatprep.subr.bf16.mxu0 %v2156
      %2217 = vmatpush1.bf16.msra.mxu0 %v2155
      %2218 = vmatprep.subr.bf16.mxu0 %v2164
      %2219 = vmatpush1.bf16.msra.mxu0 %v2163
      %2220 = vmatprep.subr.bf16.mxu0 %v2192
      %2221 = vmatpush1.bf16.msra.mxu0 %v2189
      %2222 = vmatprep.subr.bf16.mxu0 0
      %2223 = vmatpush1.bf16.msra.mxu0 0
      %2224 = vmatprep.subr.bf16.mxu0 0
      %2225 = vmatpush1.bf16.msra.mxu0 0
      %2226 = vmatprep.subr.bf16.mxu0 0
      %2227 = vmatpush1.bf16.msra.mxu0 0
      %2228 = vmatprep.subr.bf16.mxu0 0
      %2229 = vmatpush1.bf16.msra.mxu0 0
      %2230 = vmatprep.subr.bf16.mxu0 0
      %2231 = vmatpush1.bf16.msra.mxu0 0
      %2232 = vmatprep.subr.bf16.mxu0 0
      %2233 = vmatpush1.bf16.msra.mxu0 0
      %2234 = vmatprep.subr.bf16.mxu0 0
      %2235 = vmatpush1.bf16.msra.mxu0 0
      %2236 = vmatprep.subr.bf16.mxu0 0
      %2237 = vmatpush1.bf16.msra.mxu0 0
      %2238 = vmatprep.subr.bf16.mxu0 0
      %2239 = vmatpush1.bf16.msra.mxu0 0
      %2240 = vmatprep.subr.bf16.mxu0 0
      %2241 = vmatpush1.bf16.msra.mxu0 0
      %2242 = vmatprep.subr.bf16.mxu0 0
      %2243 = vmatpush1.bf16.msra.mxu0 0
      %2244 = vmatprep.mubr.bf16.mxu0 0
      %2245 = vmatmul.mubr.bf16.gmra.mrb[0].mxu0 %v2186
      %v2246 = vpop.f32.mrb[0].mxu0
      %v2247 = vadd.f32 %v2183, %v2246
      %v2248 = vpop.f32.mrb[0].mxu0
      %v2249 = vadd.f32 %v2183, %v2248
      %v2250 = vpop.f32.mrb[0].mxu0
      %v2251 = vpop.f32.mrb[0].mxu0
      %2252 = vdwg.mxu0
      %2253 = vmatprep.subr.bf16.mxu0 %v2142
      %2254 = vmatpush1.bf16.msra.mxu0 %v2141
      %2255 = vmatprep.subr.bf16.mxu0 %v2150
      %2256 = vmatpush1.bf16.msra.mxu0 %v2149
      %2257 = vmatprep.subr.bf16.mxu0 %v2158
      %2258 = vmatpush1.bf16.msra.mxu0 %v2157
      %2259 = vmatprep.subr.bf16.mxu0 %v2166
      %2260 = vmatpush1.bf16.msra.mxu0 %v2165
      %2261 = vmatprep.subr.bf16.mxu0 %v2198
      %2262 = vmatpush1.bf16.msra.mxu0 %v2195
      %2263 = vmatprep.subr.bf16.mxu0 0
      %2264 = vmatpush1.bf16.msra.mxu0 0
      %2265 = vmatprep.subr.bf16.mxu0 0
      %2266 = vmatpush1.bf16.msra.mxu0 0
      %2267 = vmatprep.subr.bf16.mxu0 0
      %2268 = vmatpush1.bf16.msra.mxu0 0
      %2269 = vmatprep.subr.bf16.mxu0 0
      %2270 = vmatpush1.bf16.msra.mxu0 0
      %2271 = vmatprep.subr.bf16.mxu0 0
      %2272 = vmatpush1.bf16.msra.mxu0 0
      %2273 = vmatprep.subr.bf16.mxu0 0
      %2274 = vmatpush1.bf16.msra.mxu0 0
      %2275 = vmatprep.subr.bf16.mxu0 0
      %2276 = vmatpush1.bf16.msra.mxu0 0
      %2277 = vmatprep.subr.bf16.mxu0 0
      %2278 = vmatpush1.bf16.msra.mxu0 0
      %2279 = vmatprep.subr.bf16.mxu0 0
      %2280 = vmatpush1.bf16.msra.mxu0 0
      %2281 = vmatprep.subr.bf16.mxu0 0
      %2282 = vmatpush1.bf16.msra.mxu0 0
      %2283 = vmatprep.subr.bf16.mxu0 0
      %2284 = vmatpush1.bf16.msra.mxu0 0
      %2285 = vmatprep.mubr.bf16.mxu0 0
      %2286 = vmatmul.mubr.bf16.gmra.mrb[0].mxu0 %v2186
      %v2287 = vpop.f32.mrb[0].mxu0
      %v2288 = vadd.f32 %v2183, %v2287
      %v2289 = vpop.f32.mrb[0].mxu0
      %v2290 = vadd.f32 %v2183, %v2289
      %v2291 = vpop.f32.mrb[0].mxu0
      %v2292 = vpop.f32.mrb[0].mxu0
      %2293 = vdwg.mxu0
      %2294 = vmatprep.subr.bf16.mxu0 %v2144
      %2295 = vmatpush1.bf16.msra.mxu0 %v2143
      %2296 = vmatprep.subr.bf16.mxu0 %v2152
      %2297 = vmatpush1.bf16.msra.mxu0 %v2151
      %2298 = vmatprep.subr.bf16.mxu0 %v2160
      %2299 = vmatpush1.bf16.msra.mxu0 %v2159
      %2300 = vmatprep.subr.bf16.mxu0 %v2168
      %2301 = vmatpush1.bf16.msra.mxu0 %v2167
      %2302 = vmatprep.subr.bf16.mxu0 %v2204
      %2303 = vmatpush1.bf16.msra.mxu0 %v2201
      %2304 = vmatprep.subr.bf16.mxu0 0
      %2305 = vmatpush1.bf16.msra.mxu0 0
      %2306 = vmatprep.subr.bf16.mxu0 0
      %2307 = vmatpush1.bf16.msra.mxu0 0
      %2308 = vmatprep.subr.bf16.mxu0 0
      %2309 = vmatpush1.bf16.msra.mxu0 0
      %2310 = vmatprep.subr.bf16.mxu0 0
      %2311 = vmatpush1.bf16.msra.mxu0 0
      %2312 = vmatprep.subr.bf16.mxu0 0
      %2313 = vmatpush1.bf16.msra.mxu0 0
      %2314 = vmatprep.subr.bf16.mxu0 0
      %2315 = vmatpush1.bf16.msra.mxu0 0
      %2316 = vmatprep.subr.bf16.mxu0 0
      %2317 = vmatpush1.bf16.msra.mxu0 0
      %2318 = vmatprep.subr.bf16.mxu0 0
      %2319 = vmatpush1.bf16.msra.mxu0 0
      %2320 = vmatprep.subr.bf16.mxu0 0
      %2321 = vmatpush1.bf16.msra.mxu0 0
      %2322 = vmatprep.subr.bf16.mxu0 0
      %2323 = vmatpush1.bf16.msra.mxu0 0
      %2324 = vmatprep.subr.bf16.mxu0 0
      %2325 = vmatpush1.bf16.msra.mxu0 0
      %2326 = vmatprep.mubr.bf16.mxu0 0
      %2327 = vmatmul.mubr.bf16.gmra.mrb[0].mxu0 %v2186
      %v2328 = vpop.f32.mrb[0].mxu0
      %v2329 = vadd.f32 %v2183, %v2328
      %v2330 = vpop.f32.mrb[0].mxu0
      %v2331 = vadd.f32 %v2183, %v2330
      %v2332 = vpop.f32.mrb[0].mxu0
      %v2333 = vpop.f32.mrb[0].mxu0
      %2334 = vdwg.mxu0
      %2335 = vmatprep.subr.bf16.mxu0 %v2146
      %2336 = vmatpush1.bf16.msra.mxu0 %v2145
      %2337 = vmatprep.subr.bf16.mxu0 %v2154
      %2338 = vmatpush1.bf16.msra.mxu0 %v2153
      %2339 = vmatprep.subr.bf16.mxu0 %v2162
      %2340 = vmatpush1.bf16.msra.mxu0 %v2161
      %2341 = vmatprep.subr.bf16.mxu0 %v2170
      %2342 = vmatpush1.bf16.msra.mxu0 %v2169
      %2343 = vmatprep.subr.bf16.mxu0 %v2210
      %2344 = vmatpush1.bf16.msra.mxu0 %v2207
      %2345 = vmatprep.subr.bf16.mxu0 0
      %2346 = vmatpush1.bf16.msra.mxu0 0
      %2347 = vmatprep.subr.bf16.mxu0 0
      %2348 = vmatpush1.bf16.msra.mxu0 0
      %2349 = vmatprep.subr.bf16.mxu0 0
      %2350 = vmatpush1.bf16.msra.mxu0 0
      %2351 = vmatprep.subr.bf16.mxu0 0
      %2352 = vmatpush1.bf16.msra.mxu0 0
      %2353 = vmatprep.subr.bf16.mxu0 0
      %2354 = vmatpush1.bf16.msra.mxu0 0
      %2355 = vmatprep.subr.bf16.mxu0 0
      %2356 = vmatpush1.bf16.msra.mxu0 0
      %2357 = vmatprep.subr.bf16.mxu0 0
      %2358 = vmatpush1.bf16.msra.mxu0 0
      %2359 = vmatprep.subr.bf16.mxu0 0
      %2360 = vmatpush1.bf16.msra.mxu0 0
      %2361 = vmatprep.subr.bf16.mxu0 0
      %2362 = vmatpush1.bf16.msra.mxu0 0
      %2363 = vmatprep.subr.bf16.mxu0 0
      %2364 = vmatpush1.bf16.msra.mxu0 0
      %2365 = vmatprep.subr.bf16.mxu0 0
      %2366 = vmatpush1.bf16.msra.mxu0 0
      %2367 = vmatprep.mubr.bf16.mxu0 0
      %2368 = vmatmul.mubr.bf16.gmra.mrb[0].mxu0 %v2186
      %v2369 = vpop.f32.mrb[0].mxu0
      %v2370 = vadd.f32 %v2183, %v2369
      %v2371 = vpop.f32.mrb[0].mxu0
      %v2372 = vadd.f32 %v2183, %v2371
      %v2373 = vpop.f32.mrb[0].mxu0
      %v2374 = vpop.f32.mrb[0].mxu0
      %2375 = vdwg.mxu0
      %v2376 = vmax.f32 %v2247, 0.0
      %v2377 = vmax.f32 %v2249, 0.0
      %v2378 = vmax.f32 %v2288, 0.0
      %v2379 = vmax.f32 %v2290, 0.0
      %v2380 = vmax.f32 %v2329, 0.0
      %v2381 = vmax.f32 %v2331, 0.0
      %v2382 = vmax.f32 %v2370, 0.0
      %v2383 = vmax.f32 %v2372, 0.0
      %v2384 = vadd.f32 %v1378, %v2376
      %v2385 = vadd.f32 %v1379, %v2377
      %v2386 = vadd.f32 %v1380, %v2378
      %v2387 = vadd.f32 %v1381, %v2379
      %v2388 = vadd.f32 %v1382, %v2380
      %v2389 = vadd.f32 %v1383, %v2381
      %v2390 = vadd.f32 %v1384, %v2382
      %v2391 = vadd.f32 %v1385, %v2383
      %2392 = vrot.lane.b32.xlu0 %v2384, 17
      %v2393 = vpop.permute.xlu0 %2392
      %2394 = vrot.lane.b32.xlu0 %v2385, 17
      %v2395 = vpop.permute.xlu0 %2394
      %2396 = vrot.lane.b32.xlu0 %v2386, 17
      %v2397 = vpop.permute.xlu0 %2396
      %2398 = vrot.lane.b32.xlu0 %v2387, 17
      %v2399 = vpop.permute.xlu0 %2398
      %2400 = vrot.lane.b32.xlu0 %v2388, 17
      %v2401 = vpop.permute.xlu0 %2400
      %2402 = vrot.lane.b32.xlu0 %v2389, 17
      %v2403 = vpop.permute.xlu0 %2402
      %2404 = vrot.lane.b32.xlu0 %v2390, 17
      %v2405 = vpop.permute.xlu0 %2404
      %2406 = vrot.lane.b32.xlu0 %v2391, 17
      %v2407 = vpop.permute.xlu0 %2406
      %v2408 = vsel %vm387, %v2405, %v2407
      %v2409 = vsel %vm387, %v2403, %v2405
      %v2410 = vsel %vm387, %v2401, %v2403
      %v2411 = vsel %vm387, %v2399, %v2401
      %v2412 = vsel %vm387, %v2397, %v2399
      %v2413 = vsel %vm387, %v2395, %v2397
      %v2414 = vsel %vm387, %v2393, %v2395
      %v2415 = vsel %vm387, %v2407, %v2393
      %v2416 = vld [vmem:[%s1] ss:$8 sm:$0xf]
      %v2417 = vld [vmem:[%s1] ss:$8 sm:$0xf0]
      %v2418 = vor.u32 %v2416, %v2417
      %v2420 = vlaneseq
      %v2421 = vshrl.u32 %v2420, 7
      %v2422 = vsub.s32 0, %v2421
      %v2423 = vrot.slane %v2418, %v2422
      %v2424 = vlaneseq
      %v2425 = vshrl.u32 %v2424, 7
      %v2426 = vsub.s32 1, %v2425
      %v2427 = vrot.slane %v2418, %v2426
      %v2428 = vlaneseq
      %v2429 = vshrl.u32 %v2428, 7
      %v2430 = vsub.s32 2, %v2429
      %v2431 = vrot.slane %v2418, %v2430
      %v2432 = vlaneseq
      %v2433 = vshrl.u32 %v2432, 7
      %v2434 = vsub.s32 3, %v2433
      %v2435 = vrot.slane %v2418, %v2434
      %v2436 = vlaneseq
      %v2437 = vshrl.u32 %v2436, 7
      %v2438 = vsub.s32 4, %v2437
      %v2439 = vrot.slane %v2418, %v2438
      %v2440 = vlaneseq
      %v2441 = vshrl.u32 %v2440, 7
      %v2442 = vsub.s32 5, %v2441
      %v2443 = vrot.slane %v2418, %v2442
      %v2444 = vlaneseq
      %v2445 = vshrl.u32 %v2444, 7
      %v2446 = vsub.s32 6, %v2445
      %v2447 = vrot.slane %v2418, %v2446
      %v2448 = vlaneseq
      %v2449 = vshrl.u32 %v2448, 7
      %v2450 = vsub.s32 7, %v2449
      %v2451 = vrot.slane %v2418, %v2450
      %v2460 = vmul.f32 %v2415, %v2423
      %v2461 = vmul.f32 %v2414, %v2427
      %v2462 = vmul.f32 %v2413, %v2431
      %v2463 = vmul.f32 %v2412, %v2435
      %v2464 = vmul.f32 %v2411, %v2439
      %v2465 = vmul.f32 %v2410, %v2443
      %v2466 = vmul.f32 %v2409, %v2447
      %v2467 = vmul.f32 %v2408, %v2451
      %2468 = vst [vmem:[#allocation2] sm:$0xff] %v2460
      %2469 = vst [vmem:[#allocation2 + $0x8] sm:$0xff] %v2461
      %2470 = vst [vmem:[#allocation2 + $0x10] sm:$0xff] %v2462
      %2471 = vst [vmem:[#allocation2 + $0x18] sm:$0xff] %v2463
      %2472 = vst [vmem:[#allocation2 + $0x20] sm:$0xff] %v2464
      %2473 = vst [vmem:[#allocation2 + $0x28] sm:$0xff] %v2465
      %2474 = vst [vmem:[#allocation2 + $0x30] sm:$0xff] %v2466
      %2475 = vst [vmem:[#allocation2 + $0x38] sm:$0xff] %v2467
      %2476 = vrot.lane.b32.xlu0 %v2384, 16
      %v2477 = vpop.permute.xlu0 %2476
      %2478 = vrot.lane.b32.xlu0 %v2385, 16
      %v2479 = vpop.permute.xlu0 %2478
      %2480 = vrot.lane.b32.xlu0 %v2386, 16
      %v2481 = vpop.permute.xlu0 %2480
      %2482 = vrot.lane.b32.xlu0 %v2387, 16
      %v2483 = vpop.permute.xlu0 %2482
      %2484 = vrot.lane.b32.xlu0 %v2388, 16
      %v2485 = vpop.permute.xlu0 %2484
      %2486 = vrot.lane.b32.xlu0 %v2389, 16
      %v2487 = vpop.permute.xlu0 %2486
      %2488 = vrot.lane.b32.xlu0 %v2390, 16
      %v2489 = vpop.permute.xlu0 %2488
      %2490 = vrot.lane.b32.xlu0 %v2391, 16
      %v2491 = vpop.permute.xlu0 %2490
      %v2492 = vsel %vm472, %v2489, %v2491
      %v2493 = vsel %vm472, %v2487, %v2489
      %v2494 = vsel %vm472, %v2485, %v2487
      %v2495 = vsel %vm472, %v2483, %v2485
      %v2496 = vsel %vm472, %v2481, %v2483
      %v2497 = vsel %vm472, %v2479, %v2481
      %v2498 = vsel %vm472, %v2477, %v2479
      %v2499 = vsel %vm472, %v2491, %v2477
      %v2500 = vld [vmem:[%s481] ss:$8 sm:$0xf]
      %v2501 = vld [vmem:[%s481] ss:$8 sm:$0xf0]
      %v2502 = vor.u32 %v2500, %v2501
      %v2504 = vlaneseq
      %v2505 = vshrl.u32 %v2504, 7
      %v2506 = vsub.s32 0, %v2505
      %v2507 = vrot.slane %v2502, %v2506
      %v2508 = vlaneseq
      %v2509 = vshrl.u32 %v2508, 7
      %v2510 = vsub.s32 1, %v2509
      %v2511 = vrot.slane %v2502, %v2510
      %v2512 = vlaneseq
      %v2513 = vshrl.u32 %v2512, 7
      %v2514 = vsub.s32 2, %v2513
      %v2515 = vrot.slane %v2502, %v2514
      %v2516 = vlaneseq
      %v2517 = vshrl.u32 %v2516, 7
      %v2518 = vsub.s32 3, %v2517
      %v2519 = vrot.slane %v2502, %v2518
      %v2520 = vlaneseq
      %v2521 = vshrl.u32 %v2520, 7
      %v2522 = vsub.s32 4, %v2521
      %v2523 = vrot.slane %v2502, %v2522
      %v2524 = vlaneseq
      %v2525 = vshrl.u32 %v2524, 7
      %v2526 = vsub.s32 5, %v2525
      %v2527 = vrot.slane %v2502, %v2526
      %v2528 = vlaneseq
      %v2529 = vshrl.u32 %v2528, 7
      %v2530 = vsub.s32 6, %v2529
      %v2531 = vrot.slane %v2502, %v2530
      %v2532 = vlaneseq
      %v2533 = vshrl.u32 %v2532, 7
      %v2534 = vsub.s32 7, %v2533
      %v2535 = vrot.slane %v2502, %v2534
      %v2544 = vmul.f32 %v2499, %v2507
      %v2545 = vmul.f32 %v2498, %v2511
      %v2546 = vmul.f32 %v2497, %v2515
      %v2547 = vmul.f32 %v2496, %v2519
      %v2548 = vmul.f32 %v2495, %v2523
      %v2549 = vmul.f32 %v2494, %v2527
      %v2550 = vmul.f32 %v2493, %v2531
      %v2551 = vmul.f32 %v2492, %v2535
      %2552 = vst [vmem:[#allocation2 + $0x40] sm:$0xff] %v2544
      %2553 = vst [vmem:[#allocation2 + $0x48] sm:$0xff] %v2545
      %2554 = vst [vmem:[#allocation2 + $0x50] sm:$0xff] %v2546
      %2555 = vst [vmem:[#allocation2 + $0x58] sm:$0xff] %v2547
      %2556 = vst [vmem:[#allocation2 + $0x60] sm:$0xff] %v2548
      %2557 = vst [vmem:[#allocation2 + $0x68] sm:$0xff] %v2549
      %2558 = vst [vmem:[#allocation2 + $0x70] sm:$0xff] %v2550
      %2559 = vst [vmem:[#allocation2 + $0x78] sm:$0xff] %v2551
      %2560 = vrot.lane.b32.xlu0 %v2384, 15
      %v2561 = vpop.permute.xlu0 %2560
      %2562 = vrot.lane.b32.xlu0 %v2385, 15
      %v2563 = vpop.permute.xlu0 %2562
      %2564 = vrot.lane.b32.xlu0 %v2386, 15
      %v2565 = vpop.permute.xlu0 %2564
      %2566 = vrot.lane.b32.xlu0 %v2387, 15
      %v2567 = vpop.permute.xlu0 %2566
      %2568 = vrot.lane.b32.xlu0 %v2388, 15
      %v2569 = vpop.permute.xlu0 %2568
      %2570 = vrot.lane.b32.xlu0 %v2389, 15
      %v2571 = vpop.permute.xlu0 %2570
      %2572 = vrot.lane.b32.xlu0 %v2390, 15
      %v2573 = vpop.permute.xlu0 %2572
      %2574 = vrot.lane.b32.xlu0 %v2391, 15
      %v2575 = vpop.permute.xlu0 %2574
      %v2576 = vsel %vm558, %v2573, %v2575
      %v2577 = vsel %vm558, %v2571, %v2573
      %v2578 = vsel %vm558, %v2569, %v2571
      %v2579 = vsel %vm558, %v2567, %v2569
      %v2580 = vsel %vm558, %v2565, %v2567
      %v2581 = vsel %vm558, %v2563, %v2565
      %v2582 = vsel %vm558, %v2561, %v2563
      %v2583 = vsel %vm558, %v2575, %v2561
      %v2584 = vld [vmem:[%s567] ss:$8 sm:$0xf]
      %v2585 = vld [vmem:[%s567] ss:$8 sm:$0xf0]
      %v2586 = vor.u32 %v2584, %v2585
      %v2588 = vlaneseq
      %v2589 = vshrl.u32 %v2588, 7
      %v2590 = vsub.s32 0, %v2589
      %v2591 = vrot.slane %v2586, %v2590
      %v2592 = vlaneseq
      %v2593 = vshrl.u32 %v2592, 7
      %v2594 = vsub.s32 1, %v2593
      %v2595 = vrot.slane %v2586, %v2594
      %v2596 = vlaneseq
      %v2597 = vshrl.u32 %v2596, 7
      %v2598 = vsub.s32 2, %v2597
      %v2599 = vrot.slane %v2586, %v2598
      %v2600 = vlaneseq
      %v2601 = vshrl.u32 %v2600, 7
      %v2602 = vsub.s32 3, %v2601
      %v2603 = vrot.slane %v2586, %v2602
      %v2604 = vlaneseq
      %v2605 = vshrl.u32 %v2604, 7
      %v2606 = vsub.s32 4, %v2605
      %v2607 = vrot.slane %v2586, %v2606
      %v2608 = vlaneseq
      %v2609 = vshrl.u32 %v2608, 7
      %v2610 = vsub.s32 5, %v2609
      %v2611 = vrot.slane %v2586, %v2610
      %v2612 = vlaneseq
      %v2613 = vshrl.u32 %v2612, 7
      %v2614 = vsub.s32 6, %v2613
      %v2615 = vrot.slane %v2586, %v2614
      %v2616 = vlaneseq
      %v2617 = vshrl.u32 %v2616, 7
      %v2618 = vsub.s32 7, %v2617
      %v2619 = vrot.slane %v2586, %v2618
      %v2628 = vmul.f32 %v2583, %v2591
      %v2629 = vmul.f32 %v2582, %v2595
      %v2630 = vmul.f32 %v2581, %v2599
      %v2631 = vmul.f32 %v2580, %v2603
      %v2632 = vmul.f32 %v2579, %v2607
      %v2633 = vmul.f32 %v2578, %v2611
      %v2634 = vmul.f32 %v2577, %v2615
      %v2635 = vmul.f32 %v2576, %v2619
      %2636 = vst [vmem:[#allocation2 + $0x80] sm:$0xff] %v2628
      %2637 = vst [vmem:[#allocation2 + $0x88] sm:$0xff] %v2629
      %2638 = vst [vmem:[#allocation2 + $0x90] sm:$0xff] %v2630
      %2639 = vst [vmem:[#allocation2 + $0x98] sm:$0xff] %v2631
      %2640 = vst [vmem:[#allocation2 + $0xa0] sm:$0xff] %v2632
      %2641 = vst [vmem:[#allocation2 + $0xa8] sm:$0xff] %v2633
      %2642 = vst [vmem:[#allocation2 + $0xb0] sm:$0xff] %v2634
      %2643 = vst [vmem:[#allocation2 + $0xb8] sm:$0xff] %v2635
      %2644 = vrot.lane.b32.xlu0 %v2384, 1
      %v2645 = vpop.permute.xlu0 %2644
      %2646 = vrot.lane.b32.xlu0 %v2385, 1
      %v2647 = vpop.permute.xlu0 %2646
      %2648 = vrot.lane.b32.xlu0 %v2386, 1
      %v2649 = vpop.permute.xlu0 %2648
      %2650 = vrot.lane.b32.xlu0 %v2387, 1
      %v2651 = vpop.permute.xlu0 %2650
      %2652 = vrot.lane.b32.xlu0 %v2388, 1
      %v2653 = vpop.permute.xlu0 %2652
      %2654 = vrot.lane.b32.xlu0 %v2389, 1
      %v2655 = vpop.permute.xlu0 %2654
      %2656 = vrot.lane.b32.xlu0 %v2390, 1
      %v2657 = vpop.permute.xlu0 %2656
      %2658 = vrot.lane.b32.xlu0 %v2391, 1
      %v2659 = vpop.permute.xlu0 %2658
      %v2660 = vsel %vm644, %v2657, %v2659
      %v2661 = vsel %vm644, %v2655, %v2657
      %v2662 = vsel %vm644, %v2653, %v2655
      %v2663 = vsel %vm644, %v2651, %v2653
      %v2664 = vsel %vm644, %v2649, %v2651
      %v2665 = vsel %vm644, %v2647, %v2649
      %v2666 = vsel %vm644, %v2645, %v2647
      %v2667 = vsel %vm644, %v2659, %v2645
      %v2668 = vld [vmem:[%s653] ss:$8 sm:$0xf]
      %v2669 = vld [vmem:[%s653] ss:$8 sm:$0xf0]
      %v2670 = vor.u32 %v2668, %v2669
      %v2672 = vlaneseq
      %v2673 = vshrl.u32 %v2672, 7
      %v2674 = vsub.s32 0, %v2673
      %v2675 = vrot.slane %v2670, %v2674
      %v2676 = vlaneseq
      %v2677 = vshrl.u32 %v2676, 7
      %v2678 = vsub.s32 1, %v2677
      %v2679 = vrot.slane %v2670, %v2678
      %v2680 = vlaneseq
      %v2681 = vshrl.u32 %v2680, 7
      %v2682 = vsub.s32 2, %v2681
      %v2683 = vrot.slane %v2670, %v2682
      %v2684 = vlaneseq
      %v2685 = vshrl.u32 %v2684, 7
      %v2686 = vsub.s32 3, %v2685
      %v2687 = vrot.slane %v2670, %v2686
      %v2688 = vlaneseq
      %v2689 = vshrl.u32 %v2688, 7
      %v2690 = vsub.s32 4, %v2689
      %v2691 = vrot.slane %v2670, %v2690
      %v2692 = vlaneseq
      %v2693 = vshrl.u32 %v2692, 7
      %v2694 = vsub.s32 5, %v2693
      %v2695 = vrot.slane %v2670, %v2694
      %v2696 = vlaneseq
      %v2697 = vshrl.u32 %v2696, 7
      %v2698 = vsub.s32 6, %v2697
      %v2699 = vrot.slane %v2670, %v2698
      %v2700 = vlaneseq
      %v2701 = vshrl.u32 %v2700, 7
      %v2702 = vsub.s32 7, %v2701
      %v2703 = vrot.slane %v2670, %v2702
      %v2712 = vmul.f32 %v2667, %v2675
      %v2713 = vmul.f32 %v2666, %v2679
      %v2714 = vmul.f32 %v2665, %v2683
      %v2715 = vmul.f32 %v2664, %v2687
      %v2716 = vmul.f32 %v2663, %v2691
      %v2717 = vmul.f32 %v2662, %v2695
      %v2718 = vmul.f32 %v2661, %v2699
      %v2719 = vmul.f32 %v2660, %v2703
      %2720 = vst [vmem:[#allocation2 + $0xc0] sm:$0xff] %v2712
      %2721 = vst [vmem:[#allocation2 + $0xc8] sm:$0xff] %v2713
      %2722 = vst [vmem:[#allocation2 + $0xd0] sm:$0xff] %v2714
      %2723 = vst [vmem:[#allocation2 + $0xd8] sm:$0xff] %v2715
      %2724 = vst [vmem:[#allocation2 + $0xe0] sm:$0xff] %v2716
      %2725 = vst [vmem:[#allocation2 + $0xe8] sm:$0xff] %v2717
      %2726 = vst [vmem:[#allocation2 + $0xf0] sm:$0xff] %v2718
      %2727 = vst [vmem:[#allocation2 + $0xf8] sm:$0xff] %v2719
      %2728 = vst [vmem:[#allocation2 + $0x100] sm:$0xff] %v2384
      %2729 = vst [vmem:[#allocation2 + $0x108] sm:$0xff] %v2385
      %2730 = vst [vmem:[#allocation2 + $0x110] sm:$0xff] %v2386
      %2731 = vst [vmem:[#allocation2 + $0x118] sm:$0xff] %v2387
      %2732 = vst [vmem:[#allocation2 + $0x120] sm:$0xff] %v2388
      %2733 = vst [vmem:[#allocation2 + $0x128] sm:$0xff] %v2389
      %2734 = vst [vmem:[#allocation2 + $0x130] sm:$0xff] %v2390
      %2735 = vst [vmem:[#allocation2 + $0x138] sm:$0xff] %v2391
      %2736 = vrot.lane.b32.xlu0 %v2384, 127
      %v2737 = vpop.permute.xlu0 %2736
      %2738 = vrot.lane.b32.xlu0 %v2385, 127
      %v2739 = vpop.permute.xlu0 %2738
      %2740 = vrot.lane.b32.xlu0 %v2386, 127
      %v2741 = vpop.permute.xlu0 %2740
      %2742 = vrot.lane.b32.xlu0 %v2387, 127
      %v2743 = vpop.permute.xlu0 %2742
      %2744 = vrot.lane.b32.xlu0 %v2388, 127
      %v2745 = vpop.permute.xlu0 %2744
      %2746 = vrot.lane.b32.xlu0 %v2389, 127
      %v2747 = vpop.permute.xlu0 %2746
      %2748 = vrot.lane.b32.xlu0 %v2390, 127
      %v2749 = vpop.permute.xlu0 %2748
      %2750 = vrot.lane.b32.xlu0 %v2391, 127
      %v2751 = vpop.permute.xlu0 %2750
      %v2752 = vsel %vm738, %v2749, %v2751
      %v2753 = vsel %vm738, %v2747, %v2749
      %v2754 = vsel %vm738, %v2745, %v2747
      %v2755 = vsel %vm738, %v2743, %v2745
      %v2756 = vsel %vm738, %v2741, %v2743
      %v2757 = vsel %vm738, %v2739, %v2741
      %v2758 = vsel %vm738, %v2737, %v2739
      %v2759 = vsel %vm738, %v2751, %v2737
      %v2760 = vld [vmem:[%s747] ss:$8 sm:$0xf]
      %v2761 = vld [vmem:[%s747] ss:$8 sm:$0xf0]
      %v2762 = vor.u32 %v2760, %v2761
      %v2764 = vlaneseq
      %v2765 = vshrl.u32 %v2764, 7
      %v2766 = vsub.s32 0, %v2765
      %v2767 = vrot.slane %v2762, %v2766
      %v2768 = vlaneseq
      %v2769 = vshrl.u32 %v2768, 7
      %v2770 = vsub.s32 1, %v2769
      %v2771 = vrot.slane %v2762, %v2770
      %v2772 = vlaneseq
      %v2773 = vshrl.u32 %v2772, 7
      %v2774 = vsub.s32 2, %v2773
      %v2775 = vrot.slane %v2762, %v2774
      %v2776 = vlaneseq
      %v2777 = vshrl.u32 %v2776, 7
      %v2778 = vsub.s32 3, %v2777
      %v2779 = vrot.slane %v2762, %v2778
      %v2780 = vlaneseq
      %v2781 = vshrl.u32 %v2780, 7
      %v2782 = vsub.s32 4, %v2781
      %v2783 = vrot.slane %v2762, %v2782
      %v2784 = vlaneseq
      %v2785 = vshrl.u32 %v2784, 7
      %v2786 = vsub.s32 5, %v2785
      %v2787 = vrot.slane %v2762, %v2786
      %v2788 = vlaneseq
      %v2789 = vshrl.u32 %v2788, 7
      %v2790 = vsub.s32 6, %v2789
      %v2791 = vrot.slane %v2762, %v2790
      %v2792 = vlaneseq
      %v2793 = vshrl.u32 %v2792, 7
      %v2794 = vsub.s32 7, %v2793
      %v2795 = vrot.slane %v2762, %v2794
      %v2804 = vmul.f32 %v2758, %v2767
      %v2805 = vmul.f32 %v2757, %v2771
      %v2806 = vmul.f32 %v2756, %v2775
      %v2807 = vmul.f32 %v2755, %v2779
      %v2808 = vmul.f32 %v2754, %v2783
      %v2809 = vmul.f32 %v2753, %v2787
      %v2810 = vmul.f32 %v2752, %v2791
      %v2811 = vmul.f32 %v2759, %v2795
      %2812 = vst [vmem:[#allocation2 + $0x140] sm:$0xff] %v2804
      %2813 = vst [vmem:[#allocation2 + $0x148] sm:$0xff] %v2805
      %2814 = vst [vmem:[#allocation2 + $0x150] sm:$0xff] %v2806
      %2815 = vst [vmem:[#allocation2 + $0x158] sm:$0xff] %v2807
      %2816 = vst [vmem:[#allocation2 + $0x160] sm:$0xff] %v2808
      %2817 = vst [vmem:[#allocation2 + $0x168] sm:$0xff] %v2809
      %2818 = vst [vmem:[#allocation2 + $0x170] sm:$0xff] %v2810
      %2819 = vst [vmem:[#allocation2 + $0x178] sm:$0xff] %v2811
      %2820 = vrot.lane.b32.xlu0 %v2384, 113
      %v2821 = vpop.permute.xlu0 %2820
      %2822 = vrot.lane.b32.xlu0 %v2385, 113
      %v2823 = vpop.permute.xlu0 %2822
      %2824 = vrot.lane.b32.xlu0 %v2386, 113
      %v2825 = vpop.permute.xlu0 %2824
      %2826 = vrot.lane.b32.xlu0 %v2387, 113
      %v2827 = vpop.permute.xlu0 %2826
      %2828 = vrot.lane.b32.xlu0 %v2388, 113
      %v2829 = vpop.permute.xlu0 %2828
      %2830 = vrot.lane.b32.xlu0 %v2389, 113
      %v2831 = vpop.permute.xlu0 %2830
      %2832 = vrot.lane.b32.xlu0 %v2390, 113
      %v2833 = vpop.permute.xlu0 %2832
      %2834 = vrot.lane.b32.xlu0 %v2391, 113
      %v2835 = vpop.permute.xlu0 %2834
      %v2836 = vsel %vm824, %v2833, %v2835
      %v2837 = vsel %vm824, %v2831, %v2833
      %v2838 = vsel %vm824, %v2829, %v2831
      %v2839 = vsel %vm824, %v2827, %v2829
      %v2840 = vsel %vm824, %v2825, %v2827
      %v2841 = vsel %vm824, %v2823, %v2825
      %v2842 = vsel %vm824, %v2821, %v2823
      %v2843 = vsel %vm824, %v2835, %v2821
      %v2844 = vld [vmem:[%s833] ss:$8 sm:$0xf]
      %v2845 = vld [vmem:[%s833] ss:$8 sm:$0xf0]
      %v2846 = vor.u32 %v2844, %v2845
      %v2848 = vlaneseq
      %v2849 = vshrl.u32 %v2848, 7
      %v2850 = vsub.s32 0, %v2849
      %v2851 = vrot.slane %v2846, %v2850
      %v2852 = vlaneseq
      %v2853 = vshrl.u32 %v2852, 7
      %v2854 = vsub.s32 1, %v2853
      %v2855 = vrot.slane %v2846, %v2854
      %v2856 = vlaneseq
      %v2857 = vshrl.u32 %v2856, 7
      %v2858 = vsub.s32 2, %v2857
      %v2859 = vrot.slane %v2846, %v2858
      %v2860 = vlaneseq
      %v2861 = vshrl.u32 %v2860, 7
      %v2862 = vsub.s32 3, %v2861
      %v2863 = vrot.slane %v2846, %v2862
      %v2864 = vlaneseq
      %v2865 = vshrl.u32 %v2864, 7
      %v2866 = vsub.s32 4, %v2865
      %v2867 = vrot.slane %v2846, %v2866
      %v2868 = vlaneseq
      %v2869 = vshrl.u32 %v2868, 7
      %v2870 = vsub.s32 5, %v2869
      %v2871 = vrot.slane %v2846, %v2870
      %v2872 = vlaneseq
      %v2873 = vshrl.u32 %v2872, 7
      %v2874 = vsub.s32 6, %v2873
      %v2875 = vrot.slane %v2846, %v2874
      %v2876 = vlaneseq
      %v2877 = vshrl.u32 %v2876, 7
      %v2878 = vsub.s32 7, %v2877
      %v2879 = vrot.slane %v2846, %v2878
      %v2888 = vmul.f32 %v2842, %v2851
      %v2889 = vmul.f32 %v2841, %v2855
      %v2890 = vmul.f32 %v2840, %v2859
      %v2891 = vmul.f32 %v2839, %v2863
      %v2892 = vmul.f32 %v2838, %v2867
      %v2893 = vmul.f32 %v2837, %v2871
      %v2894 = vmul.f32 %v2836, %v2875
      %v2895 = vmul.f32 %v2843, %v2879
      %2896 = vst [vmem:[#allocation2 + $0x180] sm:$0xff] %v2888
      %2897 = vst [vmem:[#allocation2 + $0x188] sm:$0xff] %v2889
      %2898 = vst [vmem:[#allocation2 + $0x190] sm:$0xff] %v2890
      %2899 = vst [vmem:[#allocation2 + $0x198] sm:$0xff] %v2891
      %2900 = vst [vmem:[#allocation2 + $0x1a0] sm:$0xff] %v2892
      %2901 = vst [vmem:[#allocation2 + $0x1a8] sm:$0xff] %v2893
      %2902 = vst [vmem:[#allocation2 + $0x1b0] sm:$0xff] %v2894
      %2903 = vst [vmem:[#allocation2 + $0x1b8] sm:$0xff] %v2895
      %2904 = vrot.lane.b32.xlu0 %v2384, 112
      %v2905 = vpop.permute.xlu0 %2904
      %2906 = vrot.lane.b32.xlu0 %v2385, 112
      %v2907 = vpop.permute.xlu0 %2906
      %2908 = vrot.lane.b32.xlu0 %v2386, 112
      %v2909 = vpop.permute.xlu0 %2908
      %2910 = vrot.lane.b32.xlu0 %v2387, 112
      %v2911 = vpop.permute.xlu0 %2910
      %2912 = vrot.lane.b32.xlu0 %v2388, 112
      %v2913 = vpop.permute.xlu0 %2912
      %2914 = vrot.lane.b32.xlu0 %v2389, 112
      %v2915 = vpop.permute.xlu0 %2914
      %2916 = vrot.lane.b32.xlu0 %v2390, 112
      %v2917 = vpop.permute.xlu0 %2916
      %2918 = vrot.lane.b32.xlu0 %v2391, 112
      %v2919 = vpop.permute.xlu0 %2918
      %v2920 = vsel %vm910, %v2917, %v2919
      %v2921 = vsel %vm910, %v2915, %v2917
      %v2922 = vsel %vm910, %v2913, %v2915
      %v2923 = vsel %vm910, %v2911, %v2913
      %v2924 = vsel %vm910, %v2909, %v2911
      %v2925 = vsel %vm910, %v2907, %v2909
      %v2926 = vsel %vm910, %v2905, %v2907
      %v2927 = vsel %vm910, %v2919, %v2905
      %v2928 = vld [vmem:[%s919] ss:$8 sm:$0xf]
      %v2929 = vld [vmem:[%s919] ss:$8 sm:$0xf0]
      %v2930 = vor.u32 %v2928, %v2929
      %v2932 = vlaneseq
      %v2933 = vshrl.u32 %v2932, 7
      %v2934 = vsub.s32 0, %v2933
      %v2935 = vrot.slane %v2930, %v2934
      %v2936 = vlaneseq
      %v2937 = vshrl.u32 %v2936, 7
      %v2938 = vsub.s32 1, %v2937
      %v2939 = vrot.slane %v2930, %v2938
      %v2940 = vlaneseq
      %v2941 = vshrl.u32 %v2940, 7
      %v2942 = vsub.s32 2, %v2941
      %v2943 = vrot.slane %v2930, %v2942
      %v2944 = vlaneseq
      %v2945 = vshrl.u32 %v2944, 7
      %v2946 = vsub.s32 3, %v2945
      %v2947 = vrot.slane %v2930, %v2946
      %v2948 = vlaneseq
      %v2949 = vshrl.u32 %v2948, 7
      %v2950 = vsub.s32 4, %v2949
      %v2951 = vrot.slane %v2930, %v2950
      %v2952 = vlaneseq
      %v2953 = vshrl.u32 %v2952, 7
      %v2954 = vsub.s32 5, %v2953
      %v2955 = vrot.slane %v2930, %v2954
      %v2956 = vlaneseq
      %v2957 = vshrl.u32 %v2956, 7
      %v2958 = vsub.s32 6, %v2957
      %v2959 = vrot.slane %v2930, %v2958
      %v2960 = vlaneseq
      %v2961 = vshrl.u32 %v2960, 7
      %v2962 = vsub.s32 7, %v2961
      %v2963 = vrot.slane %v2930, %v2962
      %v2972 = vmul.f32 %v2926, %v2935
      %v2973 = vmul.f32 %v2925, %v2939
      %v2974 = vmul.f32 %v2924, %v2943
      %v2975 = vmul.f32 %v2923, %v2947
      %v2976 = vmul.f32 %v2922, %v2951
      %v2977 = vmul.f32 %v2921, %v2955
      %v2978 = vmul.f32 %v2920, %v2959
      %v2979 = vmul.f32 %v2927, %v2963
      %2980 = vst [vmem:[#allocation2 + $0x1c0] sm:$0xff] %v2972
      %2981 = vst [vmem:[#allocation2 + $0x1c8] sm:$0xff] %v2973
      %2982 = vst [vmem:[#allocation2 + $0x1d0] sm:$0xff] %v2974
      %2983 = vst [vmem:[#allocation2 + $0x1d8] sm:$0xff] %v2975
      %2984 = vst [vmem:[#allocation2 + $0x1e0] sm:$0xff] %v2976
      %2985 = vst [vmem:[#allocation2 + $0x1e8] sm:$0xff] %v2977
      %2986 = vst [vmem:[#allocation2 + $0x1f0] sm:$0xff] %v2978
      %2987 = vst [vmem:[#allocation2 + $0x1f8] sm:$0xff] %v2979
      %2988 = vrot.lane.b32.xlu0 %v2384, 111
      %v2989 = vpop.permute.xlu0 %2988
      %2990 = vrot.lane.b32.xlu0 %v2385, 111
      %v2991 = vpop.permute.xlu0 %2990
      %2992 = vrot.lane.b32.xlu0 %v2386, 111
      %v2993 = vpop.permute.xlu0 %2992
      %2994 = vrot.lane.b32.xlu0 %v2387, 111
      %v2995 = vpop.permute.xlu0 %2994
      %2996 = vrot.lane.b32.xlu0 %v2388, 111
      %v2997 = vpop.permute.xlu0 %2996
      %2998 = vrot.lane.b32.xlu0 %v2389, 111
      %v2999 = vpop.permute.xlu0 %2998
      %3000 = vrot.lane.b32.xlu0 %v2390, 111
      %v3001 = vpop.permute.xlu0 %3000
      %3002 = vrot.lane.b32.xlu0 %v2391, 111
      %v3003 = vpop.permute.xlu0 %3002
      %v3004 = vsel %vm996, %v3001, %v3003
      %v3005 = vsel %vm996, %v2999, %v3001
      %v3006 = vsel %vm996, %v2997, %v2999
      %v3007 = vsel %vm996, %v2995, %v2997
      %v3008 = vsel %vm996, %v2993, %v2995
      %v3009 = vsel %vm996, %v2991, %v2993
      %v3010 = vsel %vm996, %v2989, %v2991
      %v3011 = vsel %vm996, %v3003, %v2989
      %v3012 = vld [vmem:[%s1005] ss:$8 sm:$0xf]
      %v3013 = vld [vmem:[%s1005] ss:$8 sm:$0xf0]
      %v3014 = vor.u32 %v3012, %v3013
      %v3016 = vlaneseq
      %v3017 = vshrl.u32 %v3016, 7
      %v3018 = vsub.s32 0, %v3017
      %v3019 = vrot.slane %v3014, %v3018
      %v3020 = vlaneseq
      %v3021 = vshrl.u32 %v3020, 7
      %v3022 = vsub.s32 1, %v3021
      %v3023 = vrot.slane %v3014, %v3022
      %v3024 = vlaneseq
      %v3025 = vshrl.u32 %v3024, 7
      %v3026 = vsub.s32 2, %v3025
      %v3027 = vrot.slane %v3014, %v3026
      %v3028 = vlaneseq
      %v3029 = vshrl.u32 %v3028, 7
      %v3030 = vsub.s32 3, %v3029
      %v3031 = vrot.slane %v3014, %v3030
      %v3032 = vlaneseq
      %v3033 = vshrl.u32 %v3032, 7
      %v3034 = vsub.s32 4, %v3033
      %v3035 = vrot.slane %v3014, %v3034
      %v3036 = vlaneseq
      %v3037 = vshrl.u32 %v3036, 7
      %v3038 = vsub.s32 5, %v3037
      %v3039 = vrot.slane %v3014, %v3038
      %v3040 = vlaneseq
      %v3041 = vshrl.u32 %v3040, 7
      %v3042 = vsub.s32 6, %v3041
      %v3043 = vrot.slane %v3014, %v3042
      %v3044 = vlaneseq
      %v3045 = vshrl.u32 %v3044, 7
      %v3046 = vsub.s32 7, %v3045
      %v3047 = vrot.slane %v3014, %v3046
      %v3056 = vmul.f32 %v3010, %v3019
      %v3057 = vmul.f32 %v3009, %v3023
      %v3058 = vmul.f32 %v3008, %v3027
      %v3059 = vmul.f32 %v3007, %v3031
      %v3060 = vmul.f32 %v3006, %v3035
      %v3061 = vmul.f32 %v3005, %v3039
      %v3062 = vmul.f32 %v3004, %v3043
      %v3063 = vmul.f32 %v3011, %v3047
      %3064 = vst [vmem:[#allocation2 + $0x200] sm:$0xff] %v3056
      %3065 = vst [vmem:[#allocation2 + $0x208] sm:$0xff] %v3057
      %3066 = vst [vmem:[#allocation2 + $0x210] sm:$0xff] %v3058
      %3067 = vst [vmem:[#allocation2 + $0x218] sm:$0xff] %v3059
      %3068 = vst [vmem:[#allocation2 + $0x220] sm:$0xff] %v3060
      %3069 = vst [vmem:[#allocation2 + $0x228] sm:$0xff] %v3061
      %3070 = vst [vmem:[#allocation2 + $0x230] sm:$0xff] %v3062
      %3071 = vst [vmem:[#allocation2 + $0x238] sm:$0xff] %v3063
      %v3072 = vld [vmem:[%s6] sm:$0xf]
      %v3073 = vld [vmem:[#allocation2] sm:$0xff]
      %v3074 = vld [vmem:[#allocation2 + $0x8] sm:$0xff]
      %v3075 = vld [vmem:[#allocation2 + $0x10] sm:$0xff]
      %v3076 = vld [vmem:[#allocation2 + $0x18] sm:$0xff]
      %v3077 = vld [vmem:[#allocation2 + $0x20] sm:$0xff]
      %v3078 = vld [vmem:[#allocation2 + $0x28] sm:$0xff]
      %v3079 = vld [vmem:[#allocation2 + $0x30] sm:$0xff]
      %v3080 = vld [vmem:[#allocation2 + $0x38] sm:$0xff]
      %v3081 = vld [vmem:[#allocation2 + $0x40] sm:$0xff]
      %v3082 = vld [vmem:[#allocation2 + $0x48] sm:$0xff]
      %v3083 = vld [vmem:[#allocation2 + $0x50] sm:$0xff]
      %v3084 = vld [vmem:[#allocation2 + $0x58] sm:$0xff]
      %v3085 = vld [vmem:[#allocation2 + $0x60] sm:$0xff]
      %v3086 = vld [vmem:[#allocation2 + $0x68] sm:$0xff]
      %v3087 = vld [vmem:[#allocation2 + $0x70] sm:$0xff]
      %v3088 = vld [vmem:[#allocation2 + $0x78] sm:$0xff]
      %v3089 = vld [vmem:[#allocation2 + $0x80] sm:$0xff]
      %v3090 = vld [vmem:[#allocation2 + $0x88] sm:$0xff]
      %v3091 = vld [vmem:[#allocation2 + $0x90] sm:$0xff]
      %v3092 = vld [vmem:[#allocation2 + $0x98] sm:$0xff]
      %v3093 = vld [vmem:[#allocation2 + $0xa0] sm:$0xff]
      %v3094 = vld [vmem:[#allocation2 + $0xa8] sm:$0xff]
      %v3095 = vld [vmem:[#allocation2 + $0xb0] sm:$0xff]
      %v3096 = vld [vmem:[#allocation2 + $0xb8] sm:$0xff]
      %v3097 = vld [vmem:[#allocation2 + $0xc0] sm:$0xff]
      %v3098 = vld [vmem:[#allocation2 + $0xc8] sm:$0xff]
      %v3099 = vld [vmem:[#allocation2 + $0xd0] sm:$0xff]
      %v3100 = vld [vmem:[#allocation2 + $0xd8] sm:$0xff]
      %v3101 = vld [vmem:[#allocation2 + $0xe0] sm:$0xff]
      %v3102 = vld [vmem:[#allocation2 + $0xe8] sm:$0xff]
      %v3103 = vld [vmem:[#allocation2 + $0xf0] sm:$0xff]
      %v3104 = vld [vmem:[#allocation2 + $0xf8] sm:$0xff]
      %v3105 = vld [vmem:[#allocation2 + $0x100] sm:$0xff]
      %v3106 = vld [vmem:[#allocation2 + $0x108] sm:$0xff]
      %v3107 = vld [vmem:[#allocation2 + $0x110] sm:$0xff]
      %v3108 = vld [vmem:[#allocation2 + $0x118] sm:$0xff]
      %v3109 = vld [vmem:[#allocation2 + $0x120] sm:$0xff]
      %v3110 = vld [vmem:[#allocation2 + $0x128] sm:$0xff]
      %v3111 = vld [vmem:[#allocation2 + $0x130] sm:$0xff]
      %v3112 = vld [vmem:[#allocation2 + $0x138] sm:$0xff]
      %v3113 = vld [vmem:[#allocation2 + $0x140] sm:$0xff]
      %v3114 = vld [vmem:[#allocation2 + $0x148] sm:$0xff]
      %v3115 = vld [vmem:[#allocation2 + $0x150] sm:$0xff]
      %v3116 = vld [vmem:[#allocation2 + $0x158] sm:$0xff]
      %v3117 = vld [vmem:[#allocation2 + $0x160] sm:$0xff]
      %v3118 = vld [vmem:[#allocation2 + $0x168] sm:$0xff]
      %v3119 = vld [vmem:[#allocation2 + $0x170] sm:$0xff]
      %v3120 = vld [vmem:[#allocation2 + $0x178] sm:$0xff]
      %v3121 = vld [vmem:[#allocation2 + $0x180] sm:$0xff]
      %v3122 = vld [vmem:[#allocation2 + $0x188] sm:$0xff]
      %v3123 = vld [vmem:[#allocation2 + $0x190] sm:$0xff]
      %v3124 = vld [vmem:[#allocation2 + $0x198] sm:$0xff]
      %v3125 = vld [vmem:[#allocation2 + $0x1a0] sm:$0xff]
      %v3126 = vld [vmem:[#allocation2 + $0x1a8] sm:$0xff]
      %v3127 = vld [vmem:[#allocation2 + $0x1b0] sm:$0xff]
      %v3128 = vld [vmem:[#allocation2 + $0x1b8] sm:$0xff]
      %v3129 = vld [vmem:[#allocation2 + $0x1c0] sm:$0xff]
      %v3130 = vld [vmem:[#allocation2 + $0x1c8] sm:$0xff]
      %v3131 = vld [vmem:[#allocation2 + $0x1d0] sm:$0xff]
      %v3132 = vld [vmem:[#allocation2 + $0x1d8] sm:$0xff]
      %v3133 = vld [vmem:[#allocation2 + $0x1e0] sm:$0xff]
      %v3134 = vld [vmem:[#allocation2 + $0x1e8] sm:$0xff]
      %v3135 = vld [vmem:[#allocation2 + $0x1f0] sm:$0xff]
      %v3136 = vld [vmem:[#allocation2 + $0x1f8] sm:$0xff]
      %v3137 = vld [vmem:[#allocation2 + $0x200] sm:$0xff]
      %v3138 = vld [vmem:[#allocation2 + $0x208] sm:$0xff]
      %v3139 = vld [vmem:[#allocation2 + $0x210] sm:$0xff]
      %v3140 = vld [vmem:[#allocation2 + $0x218] sm:$0xff]
      %v3141 = vld [vmem:[#allocation2 + $0x220] sm:$0xff]
      %v3142 = vld [vmem:[#allocation2 + $0x228] sm:$0xff]
      %v3143 = vld [vmem:[#allocation2 + $0x230] sm:$0xff]
      %v3144 = vld [vmem:[#allocation2 + $0x238] sm:$0xff]
      %v3145 = vpack.c.bf16 %v3081, %v3073
      %v3146 = vpack.c.bf16 %v3082, %v3074
      %v3147 = vpack.c.bf16 %v3083, %v3075
      %v3148 = vpack.c.bf16 %v3084, %v3076
      %v3149 = vpack.c.bf16 %v3085, %v3077
      %v3150 = vpack.c.bf16 %v3086, %v3078
      %v3151 = vpack.c.bf16 %v3087, %v3079
      %v3152 = vpack.c.bf16 %v3088, %v3080
      %v3153 = vpack.c.bf16 %v3097, %v3089
      %v3154 = vpack.c.bf16 %v3098, %v3090
      %v3155 = vpack.c.bf16 %v3099, %v3091
      %v3156 = vpack.c.bf16 %v3100, %v3092
      %v3157 = vpack.c.bf16 %v3101, %v3093
      %v3158 = vpack.c.bf16 %v3102, %v3094
      %v3159 = vpack.c.bf16 %v3103, %v3095
      %v3160 = vpack.c.bf16 %v3104, %v3096
      %v3161 = vpack.c.bf16 %v3113, %v3105
      %v3162 = vpack.c.bf16 %v3114, %v3106
      %v3163 = vpack.c.bf16 %v3115, %v3107
      %v3164 = vpack.c.bf16 %v3116, %v3108
      %v3165 = vpack.c.bf16 %v3117, %v3109
      %v3166 = vpack.c.bf16 %v3118, %v3110
      %v3167 = vpack.c.bf16 %v3119, %v3111
      %v3168 = vpack.c.bf16 %v3120, %v3112
      %v3169 = vpack.c.bf16 %v3129, %v3121
      %v3170 = vpack.c.bf16 %v3130, %v3122
      %v3171 = vpack.c.bf16 %v3131, %v3123
      %v3172 = vpack.c.bf16 %v3132, %v3124
      %v3173 = vpack.c.bf16 %v3133, %v3125
      %v3174 = vpack.c.bf16 %v3134, %v3126
      %v3175 = vpack.c.bf16 %v3135, %v3127
      %v3176 = vpack.c.bf16 %v3136, %v3128
      %v3177 = vpack.c.bf16 %v3137, %v3137
      %v3178 = vpack.c.bf16 %v3138, %v3138
      %v3179 = vpack.c.bf16 %v3139, %v3139
      %v3180 = vpack.c.bf16 %v3140, %v3140
      %v3181 = vpack.c.bf16 %v3141, %v3141
      %v3182 = vpack.c.bf16 %v3142, %v3142
      %v3183 = vpack.c.bf16 %v3143, %v3143
      %v3184 = vpack.c.bf16 %v3144, %v3144
      %v3185 = vld [vmem:[%s7] sm:$0xff]
      %3187 = vset.pattern.permute.xlu0 0
      %3188 = vperm.xlu0 %3187, %v3185
      %v3189 = vpop.permute.xlu0 %3188
      %v3192 = vsel %vm1185, %v3072, 0
      %v3195 = vsel %vm1189, %v3177, 0
      %v3198 = vsel %vm1189, %v3178, 0
      %v3201 = vsel %vm1189, %v3179, 0
      %v3204 = vsel %vm1189, %v3180, 0
      %v3207 = vsel %vm1189, %v3181, 0
      %v3210 = vsel %vm1189, %v3182, 0
      %v3213 = vsel %vm1189, %v3183, 0
      %v3216 = vsel %vm1189, %v3184, 0
      %3218 = vmatprep.subr.bf16.mxu0 %v3146
      %3219 = vmatpush1.bf16.msra.mxu0 %v3145
      %3220 = vmatprep.subr.bf16.mxu0 %v3154
      %3221 = vmatpush1.bf16.msra.mxu0 %v3153
      %3222 = vmatprep.subr.bf16.mxu0 %v3162
      %3223 = vmatpush1.bf16.msra.mxu0 %v3161
      %3224 = vmatprep.subr.bf16.mxu0 %v3170
      %3225 = vmatpush1.bf16.msra.mxu0 %v3169
      %3226 = vmatprep.subr.bf16.mxu0 %v3198
      %3227 = vmatpush1.bf16.msra.mxu0 %v3195
      %3228 = vmatprep.subr.bf16.mxu0 0
      %3229 = vmatpush1.bf16.msra.mxu0 0
      %3230 = vmatprep.subr.bf16.mxu0 0
      %3231 = vmatpush1.bf16.msra.mxu0 0
      %3232 = vmatprep.subr.bf16.mxu0 0
      %3233 = vmatpush1.bf16.msra.mxu0 0
      %3234 = vmatprep.subr.bf16.mxu0 0
      %3235 = vmatpush1.bf16.msra.mxu0 0
      %3236 = vmatprep.subr.bf16.mxu0 0
      %3237 = vmatpush1.bf16.msra.mxu0 0
      %3238 = vmatprep.subr.bf16.mxu0 0
      %3239 = vmatpush1.bf16.msra.mxu0 0
      %3240 = vmatprep.subr.bf16.mxu0 0
      %3241 = vmatpush1.bf16.msra.mxu0 0
      %3242 = vmatprep.subr.bf16.mxu0 0
      %3243 = vmatpush1.bf16.msra.mxu0 0
      %3244 = vmatprep.subr.bf16.mxu0 0
      %3245 = vmatpush1.bf16.msra.mxu0 0
      %3246 = vmatprep.subr.bf16.mxu0 0
      %3247 = vmatpush1.bf16.msra.mxu0 0
      %3248 = vmatprep.subr.bf16.mxu0 0
      %3249 = vmatpush1.bf16.msra.mxu0 0
      %3250 = vmatprep.mubr.bf16.mxu0 0
      %3251 = vmatmul.mubr.bf16.gmra.mrb[0].mxu0 %v3192
      %v3252 = vpop.f32.mrb[0].mxu0
      %v3253 = vadd.f32 %v3189, %v3252
      %v3254 = vpop.f32.mrb[0].mxu0
      %v3255 = vadd.f32 %v3189, %v3254
      %v3256 = vpop.f32.mrb[0].mxu0
      %v3257 = vpop.f32.mrb[0].mxu0
      %3258 = vdwg.mxu0
      %3259 = vmatprep.subr.bf16.mxu0 %v3148
      %3260 = vmatpush1.bf16.msra.mxu0 %v3147
      %3261 = vmatprep.subr.bf16.mxu0 %v3156
      %3262 = vmatpush1.bf16.msra.mxu0 %v3155
      %3263 = vmatprep.subr.bf16.mxu0 %v3164
      %3264 = vmatpush1.bf16.msra.mxu0 %v3163
      %3265 = vmatprep.subr.bf16.mxu0 %v3172
      %3266 = vmatpush1.bf16.msra.mxu0 %v3171
      %3267 = vmatprep.subr.bf16.mxu0 %v3204
      %3268 = vmatpush1.bf16.msra.mxu0 %v3201
      %3269 = vmatprep.subr.bf16.mxu0 0
      %3270 = vmatpush1.bf16.msra.mxu0 0
      %3271 = vmatprep.subr.bf16.mxu0 0
      %3272 = vmatpush1.bf16.msra.mxu0 0
      %3273 = vmatprep.subr.bf16.mxu0 0
      %3274 = vmatpush1.bf16.msra.mxu0 0
      %3275 = vmatprep.subr.bf16.mxu0 0
      %3276 = vmatpush1.bf16.msra.mxu0 0
      %3277 = vmatprep.subr.bf16.mxu0 0
      %3278 = vmatpush1.bf16.msra.mxu0 0
      %3279 = vmatprep.subr.bf16.mxu0 0
      %3280 = vmatpush1.bf16.msra.mxu0 0
      %3281 = vmatprep.subr.bf16.mxu0 0
      %3282 = vmatpush1.bf16.msra.mxu0 0
      %3283 = vmatprep.subr.bf16.mxu0 0
      %3284 = vmatpush1.bf16.msra.mxu0 0
      %3285 = vmatprep.subr.bf16.mxu0 0
      %3286 = vmatpush1.bf16.msra.mxu0 0
      %3287 = vmatprep.subr.bf16.mxu0 0
      %3288 = vmatpush1.bf16.msra.mxu0 0
      %3289 = vmatprep.subr.bf16.mxu0 0
      %3290 = vmatpush1.bf16.msra.mxu0 0
      %3291 = vmatprep.mubr.bf16.mxu0 0
      %3292 = vmatmul.mubr.bf16.gmra.mrb[0].mxu0 %v3192
      %v3293 = vpop.f32.mrb[0].mxu0
      %v3294 = vadd.f32 %v3189, %v3293
      %v3295 = vpop.f32.mrb[0].mxu0
      %v3296 = vadd.f32 %v3189, %v3295
      %v3297 = vpop.f32.mrb[0].mxu0
      %v3298 = vpop.f32.mrb[0].mxu0
      %3299 = vdwg.mxu0
      %3300 = vmatprep.subr.bf16.mxu0 %v3150
      %3301 = vmatpush1.bf16.msra.mxu0 %v3149
      %3302 = vmatprep.subr.bf16.mxu0 %v3158
      %3303 = vmatpush1.bf16.msra.mxu0 %v3157
      %3304 = vmatprep.subr.bf16.mxu0 %v3166
      %3305 = vmatpush1.bf16.msra.mxu0 %v3165
      %3306 = vmatprep.subr.bf16.mxu0 %v3174
      %3307 = vmatpush1.bf16.msra.mxu0 %v3173
      %3308 = vmatprep.subr.bf16.mxu0 %v3210
      %3309 = vmatpush1.bf16.msra.mxu0 %v3207
      %3310 = vmatprep.subr.bf16.mxu0 0
      %3311 = vmatpush1.bf16.msra.mxu0 0
      %3312 = vmatprep.subr.bf16.mxu0 0
      %3313 = vmatpush1.bf16.msra.mxu0 0
      %3314 = vmatprep.subr.bf16.mxu0 0
      %3315 = vmatpush1.bf16.msra.mxu0 0
      %3316 = vmatprep.subr.bf16.mxu0 0
      %3317 = vmatpush1.bf16.msra.mxu0 0
      %3318 = vmatprep.subr.bf16.mxu0 0
      %3319 = vmatpush1.bf16.msra.mxu0 0
      %3320 = vmatprep.subr.bf16.mxu0 0
      %3321 = vmatpush1.bf16.msra.mxu0 0
      %3322 = vmatprep.subr.bf16.mxu0 0
      %3323 = vmatpush1.bf16.msra.mxu0 0
      %3324 = vmatprep.subr.bf16.mxu0 0
      %3325 = vmatpush1.bf16.msra.mxu0 0
      %3326 = vmatprep.subr.bf16.mxu0 0
      %3327 = vmatpush1.bf16.msra.mxu0 0
      %3328 = vmatprep.subr.bf16.mxu0 0
      %3329 = vmatpush1.bf16.msra.mxu0 0
      %3330 = vmatprep.subr.bf16.mxu0 0
      %3331 = vmatpush1.bf16.msra.mxu0 0
      %3332 = vmatprep.mubr.bf16.mxu0 0
      %3333 = vmatmul.mubr.bf16.gmra.mrb[0].mxu0 %v3192
      %v3334 = vpop.f32.mrb[0].mxu0
      %v3335 = vadd.f32 %v3189, %v3334
      %v3336 = vpop.f32.mrb[0].mxu0
      %v3337 = vadd.f32 %v3189, %v3336
      %v3338 = vpop.f32.mrb[0].mxu0
      %v3339 = vpop.f32.mrb[0].mxu0
      %3340 = vdwg.mxu0
      %3341 = vmatprep.subr.bf16.mxu0 %v3152
      %3342 = vmatpush1.bf16.msra.mxu0 %v3151
      %3343 = vmatprep.subr.bf16.mxu0 %v3160
      %3344 = vmatpush1.bf16.msra.mxu0 %v3159
      %3345 = vmatprep.subr.bf16.mxu0 %v3168
      %3346 = vmatpush1.bf16.msra.mxu0 %v3167
      %3347 = vmatprep.subr.bf16.mxu0 %v3176
      %3348 = vmatpush1.bf16.msra.mxu0 %v3175
      %3349 = vmatprep.subr.bf16.mxu0 %v3216
      %3350 = vmatpush1.bf16.msra.mxu0 %v3213
      %3351 = vmatprep.subr.bf16.mxu0 0
      %3352 = vmatpush1.bf16.msra.mxu0 0
      %3353 = vmatprep.subr.bf16.mxu0 0
      %3354 = vmatpush1.bf16.msra.mxu0 0
      %3355 = vmatprep.subr.bf16.mxu0 0
      %3356 = vmatpush1.bf16.msra.mxu0 0
      %3357 = vmatprep.subr.bf16.mxu0 0
      %3358 = vmatpush1.bf16.msra.mxu0 0
      %3359 = vmatprep.subr.bf16.mxu0 0
      %3360 = vmatpush1.bf16.msra.mxu0 0
      %3361 = vmatprep.subr.bf16.mxu0 0
      %3362 = vmatpush1.bf16.msra.mxu0 0
      %3363 = vmatprep.subr.bf16.mxu0 0
      %3364 = vmatpush1.bf16.msra.mxu0 0
      %3365 = vmatprep.subr.bf16.mxu0 0
      %3366 = vmatpush1.bf16.msra.mxu0 0
      %3367 = vmatprep.subr.bf16.mxu0 0
      %3368 = vmatpush1.bf16.msra.mxu0 0
      %3369 = vmatprep.subr.bf16.mxu0 0
      %3370 = vmatpush1.bf16.msra.mxu0 0
      %3371 = vmatprep.subr.bf16.mxu0 0
      %3372 = vmatpush1.bf16.msra.mxu0 0
      %3373 = vmatprep.mubr.bf16.mxu0 0
      %3374 = vmatmul.mubr.bf16.gmra.mrb[0].mxu0 %v3192
      %v3375 = vpop.f32.mrb[0].mxu0
      %v3376 = vadd.f32 %v3189, %v3375
      %v3377 = vpop.f32.mrb[0].mxu0
      %v3378 = vadd.f32 %v3189, %v3377
      %v3379 = vpop.f32.mrb[0].mxu0
      %v3380 = vpop.f32.mrb[0].mxu0
      %3381 = vdwg.mxu0
      %v3382 = vmax.f32 %v3253, 0.0
      %v3383 = vmax.f32 %v3255, 0.0
      %v3384 = vmax.f32 %v3294, 0.0
      %v3385 = vmax.f32 %v3296, 0.0
      %v3386 = vmax.f32 %v3335, 0.0
      %v3387 = vmax.f32 %v3337, 0.0
      %v3388 = vmax.f32 %v3376, 0.0
      %v3389 = vmax.f32 %v3378, 0.0
      %v3390 = vadd.f32 %v2384, %v3382
      %v3391 = vadd.f32 %v2385, %v3383
      %v3392 = vadd.f32 %v2386, %v3384
      %v3393 = vadd.f32 %v2387, %v3385
      %v3394 = vadd.f32 %v2388, %v3386
      %v3395 = vadd.f32 %v2389, %v3387
      %v3396 = vadd.f32 %v2390, %v3388
      %v3397 = vadd.f32 %v2391, %v3389
      %v3398 = vadd.f32 %v3390, %v3394
      %v3399 = vadd.f32 %v3391, %v3395
      %v3400 = vadd.f32 %v3392, %v3396
      %v3401 = vadd.f32 %v3393, %v3397
      %v3402 = vld [vmem:[%s8] sm:$0xf]
      %v3403 = vpack.c.bf16 %v3398, %v3398
      %v3404 = vpack.c.bf16 %v3399, %v3399
      %v3405 = vpack.c.bf16 %v3400, %v3400
      %v3406 = vpack.c.bf16 %v3401, %v3401
      %v3407 = vld [vmem:[%s9] sm:$0xff]
      %3409 = vset.pattern.permute.xlu0 0
      %3410 = vperm.xlu0 %3409, %v3407
      %v3411 = vpop.permute.xlu0 %3410
      %vm3413 = vcmask 64512
      %v3415 = vsel %vm3413, %v3402, 0
      %v3418 = vsel %vm1189, %v3403, 0
      %v3421 = vsel %vm1189, %v3404, 0
      %v3424 = vsel %vm1189, %v3405, 0
      %v3427 = vsel %vm1189, %v3406, 0
      %3429 = vmatprep.subr.bf16.mxu0 %v3421
      %3430 = vmatpush1.bf16.msra.mxu0 %v3418
      %3431 = vmatprep.subr.bf16.mxu0 0
      %3432 = vmatpush1.bf16.msra.mxu0 0
      %3433 = vmatprep.subr.bf16.mxu0 0
      %3434 = vmatpush1.bf16.msra.mxu0 0
      %3435 = vmatprep.subr.bf16.mxu0 0
      %3436 = vmatpush1.bf16.msra.mxu0 0
      %3437 = vmatprep.subr.bf16.mxu0 0
      %3438 = vmatpush1.bf16.msra.mxu0 0
      %3439 = vmatprep.subr.bf16.mxu0 0
      %3440 = vmatpush1.bf16.msra.mxu0 0
      %3441 = vmatprep.subr.bf16.mxu0 0
      %3442 = vmatpush1.bf16.msra.mxu0 0
      %3443 = vmatprep.subr.bf16.mxu0 0
      %3444 = vmatpush1.bf16.msra.mxu0 0
      %3445 = vmatprep.subr.bf16.mxu0 0
      %3446 = vmatpush1.bf16.msra.mxu0 0
      %3447 = vmatprep.subr.bf16.mxu0 0
      %3448 = vmatpush1.bf16.msra.mxu0 0
      %3449 = vmatprep.subr.bf16.mxu0 0
      %3450 = vmatpush1.bf16.msra.mxu0 0
      %3451 = vmatprep.subr.bf16.mxu0 0
      %3452 = vmatpush1.bf16.msra.mxu0 0
      %3453 = vmatprep.subr.bf16.mxu0 0
      %3454 = vmatpush1.bf16.msra.mxu0 0
      %3455 = vmatprep.subr.bf16.mxu0 0
      %3456 = vmatpush1.bf16.msra.mxu0 0
      %3457 = vmatprep.subr.bf16.mxu0 0
      %3458 = vmatpush1.bf16.msra.mxu0 0
      %3459 = vmatprep.subr.bf16.mxu0 0
      %3460 = vmatpush1.bf16.msra.mxu0 0
      %3461 = vmatprep.mubr.bf16.mxu0 0
      %3462 = vmatmul.mubr.bf16.gmra.mrb[0].mxu0 %v3415
      %v3463 = vpop.f32.mrb[0].mxu0
      %v3464 = vadd.f32 %v3411, %v3463
      %v3465 = vpop.f32.mrb[0].mxu0
      %v3466 = vadd.f32 %v3411, %v3465
      %v3467 = vpop.f32.mrb[0].mxu0
      %v3468 = vpop.f32.mrb[0].mxu0
      %3469 = vdwg.mxu0
      %3470 = vmatprep.subr.bf16.mxu0 %v3427
      %3471 = vmatpush1.bf16.msra.mxu0 %v3424
      %3472 = vmatprep.subr.bf16.mxu0 0
      %3473 = vmatpush1.bf16.msra.mxu0 0
      %3474 = vmatprep.subr.bf16.mxu0 0
      %3475 = vmatpush1.bf16.msra.mxu0 0
      %3476 = vmatprep.subr.bf16.mxu0 0
      %3477 = vmatpush1.bf16.msra.mxu0 0
      %3478 = vmatprep.subr.bf16.mxu0 0
      %3479 = vmatpush1.bf16.msra.mxu0 0
      %3480 = vmatprep.subr.bf16.mxu0 0
      %3481 = vmatpush1.bf16.msra.mxu0 0
      %3482 = vmatprep.subr.bf16.mxu0 0
      %3483 = vmatpush1.bf16.msra.mxu0 0
      %3484 = vmatprep.subr.bf16.mxu0 0
      %3485 = vmatpush1.bf16.msra.mxu0 0
      %3486 = vmatprep.subr.bf16.mxu0 0
      %3487 = vmatpush1.bf16.msra.mxu0 0
      %3488 = vmatprep.subr.bf16.mxu0 0
      %3489 = vmatpush1.bf16.msra.mxu0 0
      %3490 = vmatprep.subr.bf16.mxu0 0
      %3491 = vmatpush1.bf16.msra.mxu0 0
      %3492 = vmatprep.subr.bf16.mxu0 0
      %3493 = vmatpush1.bf16.msra.mxu0 0
      %3494 = vmatprep.subr.bf16.mxu0 0
      %3495 = vmatpush1.bf16.msra.mxu0 0
      %3496 = vmatprep.subr.bf16.mxu0 0
      %3497 = vmatpush1.bf16.msra.mxu0 0
      %3498 = vmatprep.subr.bf16.mxu0 0
      %3499 = vmatpush1.bf16.msra.mxu0 0
      %3500 = vmatprep.subr.bf16.mxu0 0
      %3501 = vmatpush1.bf16.msra.mxu0 0
      %3502 = vmatprep.mubr.bf16.mxu0 0
      %3503 = vmatmul.mubr.bf16.gmra.mrb[0].mxu0 %v3415
      %v3504 = vpop.f32.mrb[0].mxu0
      %v3505 = vadd.f32 %v3411, %v3504
      %v3506 = vpop.f32.mrb[0].mxu0
      %v3507 = vadd.f32 %v3411, %v3506
      %v3508 = vpop.f32.mrb[0].mxu0
      %v3509 = vpop.f32.mrb[0].mxu0
      %3510 = vdwg.mxu0
      %v3511 = vmax.f32 %v3464, 0.0
      %v3512 = vmax.f32 %v3466, 0.0
      %v3513 = vmax.f32 %v3505, 0.0
      %v3514 = vmax.f32 %v3507, 0.0
      %3515 = vst [vmem:[%s359] sm:$0xff] %v3511
      %3516 = vst [vmem:[%s359 + $0x8] sm:$0xff] %v3512
      %3517 = vst [vmem:[%s359 + $0x10] sm:$0xff] %v3513
      %3518 = vst [vmem:[%s359 + $0x18] sm:$0xff] %v3514
      %p3519 = scmp.lt.s32.totalorder %s21, 1
      %s3520 = scalar_select %p3519, %s21, 1
      %s3521 = smul.addr %s3520, 4
      %s3522 = smul.addr %s3521, 8
      %s3523 = scalar_lea.vmem %s10, %s3522
      // Predicated region
      $region61: #{densecat_cat_add_forward.1} parent=59 // pred_check
        %p3524 = pneg %p254
      $region62: #{densecat_cat_add_forward.1} parent=59 // pred_check_branch
        %3526 = sbr.rel (%p3524) target = $region64
      $region63: #{densecat_cat_add_forward.1} parent=59 // pred_region
        _
      $region64: #{densecat_cat_add_forward.1} parent=59 // pred_fallthru
        _
    $region60: #{densecat_cat_add_forward.1} parent=5 // pred_fallthru
      _
    %p3527 = scmp.le.s32.totalorder 2, %s16
    // Predicated region
    $region65: #{densecat_cat_add_forward.1} parent=5 // pred_check
      %p3528 = pneg %p3527
    $region66: #{densecat_cat_add_forward.1} parent=5 // pred_check_branch
      %3530 = sbr.rel (%p3528) target = $region68
    $region67: #{densecat_cat_add_forward.1} parent=5 // pred_region
      %s3531 = ssub.s32 %s16, 2
      // Predicated region
      $region69: #{densecat_cat_add_forward.1} parent=67 // pred_check
        %p3532 = pneg %p260
      $region70: #{densecat_cat_add_forward.1} parent=67 // pred_check_branch
        %3534 = sbr.rel (%p3532) target = $region72
      $region71: #{densecat_cat_add_forward.1} parent=67 // pred_region
        %p3535 = scmp.lt.s32.totalorder %s22, 1
        %s3536 = scalar_select %p3535, %s22, 1
        %s3537 = smul.addr %s3536, 4
        %s3538 = smul.addr %s3537, 8
        %s3539 = scalar_lea.vmem %s10, %s3538
      $region72: #{densecat_cat_add_forward.1} parent=67 // pred_fallthru
        _
    $region68: #{densecat_cat_add_forward.1} parent=5 // pred_fallthru
      _
  $region6: #{densecat_cat_add_forward.1} parent=0 // loop_footer
    %s20 = sadd.s32 1, %s16
  $region7: #{densecat_cat_add_forward.1} parent=0 // loop_footer_branch
    %15 = sbr.rel target = $region3
  $region8: #{densecat_cat_add_forward.1} parent=0 // loop_exit
    _

</llo_original>
